<compile_context>
chip_gen: v5e
topology: v5e:2x2
jax: 0.10.0
libtpu: 0.0.40
codegen_flags: <defaults>
</compile_context>

<pallas_src>
import jax
import jax.numpy as jnp
from jax import lax
from jax.experimental import pallas as pl
from jax.experimental.pallas import tpu as pltpu


def _round_up(n, m):
    return ((n + m - 1) // m) * m


# PyTorch gate index (i, f, g, o) -> packed 128-aligned slot (i, f, o, g).
_PACKED_SLOT = (0, 1, 3, 2)


# --------------------------- fused LSTM + FC kernel ---------------------------

def _make_fused_kernel(num_layers, T, C, B_pad, H_pad):
    """Builds the fused kernel for fixed layer count / padded dims / chunk size."""
    Hp = H_pad

    # Static chunk schedule over the time axis (remainder chunk allowed).
    chunks = []
    s = 0
    while s < T:
        cs = min(C, T - s)
        chunks.append((s, cs))
        s += cs

    def kernel(*refs):
        # refs layout:
        #   x_ref                                   (T, B_pad, I_pad)    bf16
        #   [wih_t, whh_t, b] * num_layers          (in_pad,4Hp) bf16, (Hp,4Hp) bf16, (1,4Hp) f32
        #   wfc_t, bfc                              (Hp, O_pad) bf16, (1, O_pad) f32
        #   out_ref                                 (B_pad, O_pad)       f32
        #   seq_scr                                 (T, B_pad, Hp)       bf16 VMEM
        #   gx_scr                                  (C, B_pad, 4*Hp)     bf16 VMEM
        x_ref = refs[0]
        layer_refs = refs[1:1 + 3 * num_layers]
        wfc_ref = refs[1 + 3 * num_layers]
        bfc_ref = refs[2 + 3 * num_layers]
        out_ref = refs[3 + 3 * num_layers]
        seq_scr = refs[4 + 3 * num_layers]
        gx_scr = refs[5 + 3 * num_layers]

        h = None
        for layer in range(num_layers):
            wih_ref = layer_refs[3 * layer + 0]
            whh_ref = layer_refs[3 * layer + 1]
            b_ref = layer_refs[3 * layer + 2]
            is_last = layer == num_layers - 1

            # Bias broadcast hoisted out of the recurrence (no per-iter
            # broadcast_in_dim); bias stays f32 and is added on the f32 path.
            bias = jnp.broadcast_to(b_ref[...], (B_pad, 4 * Hp))

            h = jnp.zeros((B_pad, Hp), jnp.float32)
            c = jnp.zeros((B_pad, Hp), jnp.float32)

            for (start, cs) in chunks:
                # ---- chunked hoisted input projection: one bf16 MXU matmul
                #      for cs timesteps, streamed straight into gx_scr.
                if layer == 0:
                    xin = x_ref[start:start + cs]        # (cs, B_pad, I_pad)
                else:
                    xin = seq_scr[start:start + cs]      # (cs, B_pad, Hp)
                in_dim = xin.shape[-1]
                gx = jnp.dot(xin.reshape(cs * B_pad, in_dim), wih_ref[...],
                             preferred_element_type=jnp.float32)
                gx_scr[0:cs] = gx.reshape(cs, B_pad, 4 * Hp).astype(jnp.bfloat16)

                # ---- sequential recurrence over this chunk.  W_hh is read
                #      from its ref inside the dot (not hoisted into a value);
                #      gates use 128-lane-aligned slices of the padded axis.
                def step(t, carry, _start=start, _is_last=is_last,
                         _whh_ref=whh_ref, _bias=bias):
                    h, c = carry
                    gates = (gx_scr[t].astype(jnp.float32)
                             + jnp.dot(h.astype(jnp.bfloat16), _whh_ref[...],
                                       preferred_element_type=jnp.float32)
                             + _bias)                     # (B_pad, 4Hp) f32
                    # packed gate order [i, f, o, g]: one big sigmoid + one tanh
                    sig = jax.nn.sigmoid(gates[:, 0:3 * Hp])
                    g_g = jnp.tanh(gates[:, 3 * Hp:4 * Hp])
                    i_g = sig[:, 0 * Hp:1 * Hp]
                    f_g = sig[:, 1 * Hp:2 * Hp]
                    o_g = sig[:, 2 * Hp:3 * Hp]
                    c_new = f_g * c + i_g * g_g
                    h_new = o_g * jnp.tanh(c_new)
                    if not _is_last:
                        seq_scr[_start + t] = h_new.astype(jnp.bfloat16)
                    return h_new, c_new

                h, c = lax.fori_loop(0, cs, step, (h, c),
                                     unroll=min(8, cs))

        # ---- fused FC on the last timestep of the last layer
        out_ref[...] = (jnp.dot(h.astype(jnp.bfloat16), wfc_ref[...],
                                preferred_element_type=jnp.float32)
                        + bfc_ref[...])

    return kernel


# ------------------------------ weight packing --------------------------------

def _pad_gate_weights(w_ih, w_hh, b_ih, b_hh, in_pad, H_pad):
    """Pack PyTorch-layout LSTM weights into padded, gate-128-aligned matrices.

    w_ih: (4H, in), w_hh: (4H, H), biases (4H,) with PyTorch gate order
    [i, f, g, o].  Gates are re-packed to slots [i, f, o, g] so the kernel can
    run one contiguous sigmoid over the first 3*H_pad columns.  Returns
    wih_t (in_pad, 4*H_pad) bf16, whh_t (H_pad, 4*H_pad) bf16, b (1, 4*H_pad) f32.
    """
    H = w_hh.shape[1]
    in_dim = w_ih.shape[1]
    b = b_ih + b_hh
    wih_t = jnp.zeros((in_pad, 4 * H_pad), jnp.float32)
    whh_t = jnp.zeros((H_pad, 4 * H_pad), jnp.float32)
    bp = jnp.zeros((1, 4 * H_pad), jnp.float32)
    for pg in range(4):                  # PyTorch gate index
        slot = _PACKED_SLOT[pg]          # packed slot
        wih_t = wih_t.at[:in_dim, slot * H_pad:slot * H_pad + H].set(
            w_ih[pg * H:(pg + 1) * H, :].T)
        whh_t = whh_t.at[:H, slot * H_pad:slot * H_pad + H].set(
            w_hh[pg * H:(pg + 1) * H, :].T)
        bp = bp.at[0, slot * H_pad:slot * H_pad + H].set(b[pg * H:(pg + 1) * H])
    return wih_t.astype(jnp.bfloat16), whh_t.astype(jnp.bfloat16), bp


# ------------------------------- forward pass ----------------------------------

def lstm_model_forward(params, x_btI):
    """x_btI: (B, T, input_size) -> (B, output_size).  Matches LSTMModel.forward."""
    B, T, I = x_btI.shape
    num_layers = len(params["lstm"])
    H = params["lstm"][0]["w_hh"].shape[1]
    O = params["fc"]["w"].shape[0]

    B_pad = _round_up(B, 8)
    I_pad = _round_up(I, 128)
    H_pad = _round_up(H, 128)
    O_pad = _round_up(O, 128)

    # Time chunk size for the hoisted input projection: aim for ~256 MXU rows.
    C = max(1, 256 // B_pad)
    C = min(C, T)

    # time-major, zero-padded, bf16 input (padded rows/cols provably stay inert)
    x = jnp.transpose(x_btI, (1, 0, 2)).astype(jnp.float32)     # (T, B, I)
    x = jnp.pad(x, ((0, 0), (0, B_pad - B), (0, I_pad - I)))    # (T, B_pad, I_pad)
    x = x.astype(jnp.bfloat16)

    args = [x]
    operand_bytes = T * B_pad * I_pad * 2
    for layer, lp in enumerate(params["lstm"]):
        in_pad = I_pad if layer == 0 else H_pad
        wih_t, whh_t, b = _pad_gate_weights(
            lp["w_ih"], lp["w_hh"], lp["b_ih"], lp["b_hh"], in_pad, H_pad)
        args += [wih_t, whh_t, b]
        operand_bytes += in_pad * 4 * H_pad * 2 + H_pad * 4 * H_pad * 2 + 4 * H_pad * 4

    wfc_t = (jnp.zeros((H_pad, O_pad), jnp.float32)
             .at[:H, :O].set(params["fc"]["w"].T).astype(jnp.bfloat16))
    bfc = jnp.zeros((1, O_pad), jnp.float32).at[0, :O].set(params["fc"]["b"])
    args += [wfc_t, bfc]
    operand_bytes += H_pad * O_pad * 2 + O_pad * 4 + B_pad * O_pad * 4

    scratch_bytes = T * B_pad * H_pad * 2 + C * B_pad * 4 * H_pad * 2
    # headroom for (possible) double-buffering of operands + compiler scratch
    vmem_needed = 2 * operand_bytes + scratch_bytes + (2 << 20)
    vmem_limit = int(min(max(vmem_needed, 16 << 20), 60 << 20))

    out_pad = pl.pallas_call(
        _make_fused_kernel(num_layers, T, C, B_pad, H_pad),
        out_shape=jax.ShapeDtypeStruct((B_pad, O_pad), jnp.float32),
        scratch_shapes=[
            pltpu.VMEM((T, B_pad, H_pad), jnp.bfloat16),        # inter-layer sequence
            pltpu.VMEM((C, B_pad, 4 * H_pad), jnp.bfloat16),    # chunked gate slab
        ],
        compiler_params=pltpu.CompilerParams(vmem_limit_bytes=vmem_limit),
    )(*args)
    return out_pad[:B, :O]


# --------------------------------- params --------------------------------------

def init_params(key, input_size, hidden_size, num_layers, output_size):
    """Deterministic parameter init (uniform, like PyTorch's default scale)."""
    params = {"lstm": [], "fc": {}}
    k = 1.0 / jnp.sqrt(hidden_size)
    for layer in range(num_layers):
        in_sz = input_size if layer == 0 else hidden_size
        key, k1, k2, k3, k4 = jax.random.split(key, 5)
        w_ih = jax.random.uniform(k1, (4 * hidden_size, in_sz), jnp.float32, -k, k)
        w_hh = jax.random.uniform(k2, (4 * hidden_size, hidden_size), jnp.float32, -k, k)
        b_ih = jax.random.uniform(k3, (4 * hidden_size,), jnp.float32, -k, k)
        b_hh = jax.random.uniform(k4, (4 * hidden_size,), jnp.float32, -k, k)
        params["lstm"].append({"w_ih": w_ih, "w_hh": w_hh,
                               "b_ih": b_ih, "b_hh": b_hh})
    key, k1, k2 = jax.random.split(key, 3)
    kf = 1.0 / jnp.sqrt(hidden_size)
    params["fc"]["w"] = jax.random.uniform(
        k1, (output_size, hidden_size), jnp.float32, -kf, kf)
    params["fc"]["b"] = jax.random.uniform(
        k2, (output_size,), jnp.float32, -kf, kf)
    return params


# ---------------------------- pure-JAX reference -------------------------------

def lstm_model_reference(params, x_btI):
    x = jnp.transpose(x_btI, (1, 0, 2)).astype(jnp.float32)    # (T, B, I)
    B = x.shape[1]
    for lp in params["lstm"]:
        H = lp["w_hh"].shape[1]
        wih_t, whh_t = lp["w_ih"].T, lp["w_hh"].T
        b = lp["b_ih"] + lp["b_hh"]

        def step(carry, x_t):
            h, c = carry
            gates = x_t @ wih_t + h @ whh_t + b
            i = jax.nn.sigmoid(gates[:, 0 * H:1 * H])
            f = jax.nn.sigmoid(gates[:, 1 * H:2 * H])
            g = jnp.tanh(gates[:, 2 * H:3 * H])
            o = jax.nn.sigmoid(gates[:, 3 * H:4 * H])
            c = f * c + i * g
            h = o * jnp.tanh(c)
            return (h, c), h

        init = (jnp.zeros((B, H), jnp.float32), jnp.zeros((B, H), jnp.float32))
        _, hs = lax.scan(step, init, x)
        x = hs
    return x[-1] @ params["fc"]["w"].T + params["fc"]["b"]


# ------------------------------------ main --------------------------------------

if __name__ == "__main__":
    input_size, hidden_size, num_layers, output_size = 16, 32, 2, 4
    B, T = 2, 8

    key = jax.random.PRNGKey(0)
    key, pkey, xkey = jax.random.split(key, 3)
    params = init_params(pkey, input_size, hidden_size, num_layers, output_size)
    x = jax.random.normal(xkey, (B, T, input_size), jnp.float32)

    fwd = jax.jit(lstm_model_forward)
    out = jax.block_until_ready(fwd(params, x))

    ref = jax.block_until_ready(lstm_model_reference(params, x))
    assert out.shape == (B, output_size), out.shape
    # bf16 weights / bf16 MXU path vs. f32 reference -> loosened tolerance.
    max_err = float(jnp.max(jnp.abs(out - ref)))
    assert jnp.allclose(out, ref, atol=3e-2, rtol=3e-2), (
        f"mismatch: max abs err {max_err}")

    print("KERNEL_OK")
</pallas_src>

<mosaic_0001>
module attributes {stable_mosaic.version = 11 : i64} {
  func.func @kernel(%arg0: memref<8x8x128xbf16, #tpu.memory_space<vmem>>, %arg1: memref<128x512xbf16, #tpu.memory_space<vmem>>, %arg2: memref<128x512xbf16, #tpu.memory_space<vmem>>, %arg3: memref<1x512xf32, #tpu.memory_space<vmem>>, %arg4: memref<128x512xbf16, #tpu.memory_space<vmem>>, %arg5: memref<128x512xbf16, #tpu.memory_space<vmem>>, %arg6: memref<1x512xf32, #tpu.memory_space<vmem>>, %arg7: memref<128x128xbf16, #tpu.memory_space<vmem>>, %arg8: memref<1x128xf32, #tpu.memory_space<vmem>>, %arg9: memref<8x128xf32, #tpu.memory_space<vmem>>, %arg10: memref<8x8x128xbf16, #tpu.memory_space<vmem>>, %arg11: memref<8x8x512xbf16, #tpu.memory_space<vmem>>) attributes {dimension_semantics = [], scalar_prefetch = 0 : i64, scratch_operands = 2 : i64, tpu.core_type = #tpu.core_type<tc>} {
    %c0 = arith.constant 0 : index
    %c0_0 = arith.constant 0 : index
    %0 = vector.load %arg3[%c0, %c0_0] : memref<1x512xf32, #tpu.memory_space<vmem>>, vector<1x512xf32>
    %1 = vector.shape_cast %0 : vector<1x512xf32> to vector<1x512xf32>
    %2 = vector.broadcast %1 : vector<1x512xf32> to vector<8x512xf32>
    %cst = arith.constant 0.000000e+00 : f32
    %3 = vector.broadcast %cst : f32 to vector<8x128xf32>
    %cst_1 = arith.constant 0.000000e+00 : f32
    %4 = vector.broadcast %cst_1 : f32 to vector<8x128xf32>
    %c0_2 = arith.constant 0 : index
    %c0_3 = arith.constant 0 : index
    %c0_4 = arith.constant 0 : index
    %5 = vector.load %arg0[%c0_2, %c0_3, %c0_4] : memref<8x8x128xbf16, #tpu.memory_space<vmem>>, vector<8x8x128xbf16>
    %6 = vector.shape_cast %5 : vector<8x8x128xbf16> to vector<64x128xbf16>
    %c0_5 = arith.constant 0 : index
    %c0_6 = arith.constant 0 : index
    %7 = vector.load %arg1[%c0_5, %c0_6] : memref<128x512xbf16, #tpu.memory_space<vmem>>, vector<128x512xbf16>
    %cst_7 = arith.constant dense<0.000000e+00> : vector<64x512xf32>
    %8 = tpu.matmul %6, %7, %cst_7 {dimension_numbers = #tpu.dot_dimension_numbers<[1], [0], [0], [1], [0, 0, 1, 1], [], []>} : vector<64x128xbf16>, vector<128x512xbf16>, vector<64x512xf32> -> vector<64x512xf32>
    %9 = vector.shape_cast %8 : vector<64x512xf32> to vector<8x8x512xf32>
    %10 = arith.truncf %9 : vector<8x8x512xf32> to vector<8x8x512xbf16>
    %c0_8 = arith.constant 0 : index
    %c0_9 = arith.constant 0 : index
    %c0_10 = arith.constant 0 : index
    %11 = vector.load %arg11[%c0_8, %c0_9, %c0_10] : memref<8x8x512xbf16, #tpu.memory_space<vmem>>, vector<8x8x512xbf16>
    tpu.vector_store %arg11[%c0_8, %c0_9, %c0_10], %10 {strides = array<i32>} : memref<8x8x512xbf16, #tpu.memory_space<vmem>>, vector<8x8x512xbf16>,
    %c0_i32 = arith.constant 0 : i32
    %12 = arith.index_cast %c0_i32 : i32 to index
    %c0_11 = arith.constant 0 : index
    %c0_12 = arith.constant 0 : index
    %13 = vector.load %arg11[%12, %c0_11, %c0_12] : memref<8x8x512xbf16, #tpu.memory_space<vmem>>, vector<1x8x512xbf16>
    %14 = vector.shape_cast %13 : vector<1x8x512xbf16> to vector<8x512xbf16>
    %15 = arith.extf %14 : vector<8x512xbf16> to vector<8x512xf32>
    %16 = arith.truncf %3 : vector<8x128xf32> to vector<8x128xbf16>
    %c0_13 = arith.constant 0 : index
    %c0_14 = arith.constant 0 : index
    %17 = vector.load %arg2[%c0_13, %c0_14] : memref<128x512xbf16, #tpu.memory_space<vmem>>, vector<128x512xbf16>
    %cst_15 = arith.constant dense<0.000000e+00> : vector<8x512xf32>
    %18 = tpu.matmul %16, %17, %cst_15 {dimension_numbers = #tpu.dot_dimension_numbers<[1], [0], [0], [1], [0, 0, 1, 1], [], []>} : vector<8x128xbf16>, vector<128x512xbf16>, vector<8x512xf32> -> vector<8x512xf32>
    %19 = arith.addf %15, %18 : vector<8x512xf32>
    %20 = arith.addf %19, %2 : vector<8x512xf32>
    %21 = vector.extract_strided_slice %20 {offsets = [0, 0], sizes = [8, 384], strides = [1, 1]} : vector<8x512xf32> to vector<8x384xf32>
    %22 = arith.negf %21 : vector<8x384xf32>
    %23 = math.exp %22 : vector<8x384xf32>
    %cst_16 = arith.constant 1.000000e+00 : f32
    %24 = vector.broadcast %cst_16 : f32 to vector<8x384xf32>
    %25 = arith.addf %24, %23 : vector<8x384xf32>
    %26 = arith.divf %24, %25 : vector<8x384xf32>
    %27 = vector.extract_strided_slice %20 {offsets = [0, 384], sizes = [8, 128], strides = [1, 1]} : vector<8x512xf32> to vector<8x128xf32>
    %28 = math.tanh %27 : vector<8x128xf32>
    %29 = vector.extract_strided_slice %26 {offsets = [0, 0], sizes = [8, 128], strides = [1, 1]} : vector<8x384xf32> to vector<8x128xf32>
    %30 = vector.extract_strided_slice %26 {offsets = [0, 128], sizes = [8, 128], strides = [1, 1]} : vector<8x384xf32> to vector<8x128xf32>
    %31 = vector.extract_strided_slice %26 {offsets = [0, 256], sizes = [8, 128], strides = [1, 1]} : vector<8x384xf32> to vector<8x128xf32>
    %32 = arith.mulf %30, %4 : vector<8x128xf32>
    %33 = arith.mulf %29, %28 : vector<8x128xf32>
    %34 = arith.addf %32, %33 : vector<8x128xf32>
    %35 = math.tanh %34 : vector<8x128xf32>
    %36 = arith.mulf %31, %35 : vector<8x128xf32>
    %37 = arith.truncf %36 : vector<8x128xf32> to vector<8x128xbf16>
    %c0_i32_17 = arith.constant 0 : i32
    %38 = arith.addi %c0_i32_17, %c0_i32 : i32
    %39 = arith.index_cast %38 : i32 to index
    %c0_18 = arith.constant 0 : index
    %c0_19 = arith.constant 0 : index
    %40 = vector.load %arg10[%39, %c0_18, %c0_19] : memref<8x8x128xbf16, #tpu.memory_space<vmem>>, vector<1x8x128xbf16>
    %41 = vector.shape_cast %40 : vector<1x8x128xbf16> to vector<8x128xbf16>
    %42 = vector.shape_cast %37 : vector<8x128xbf16> to vector<1x8x128xbf16>
    tpu.vector_store %arg10[%39, %c0_18, %c0_19], %42 {strides = array<i32>} : memref<8x8x128xbf16, #tpu.memory_space<vmem>>, vector<1x8x128xbf16>,
    %c1_i32 = arith.constant 1 : i32
    %43 = arith.index_cast %c1_i32 : i32 to index
    %c0_20 = arith.constant 0 : index
    %c0_21 = arith.constant 0 : index
    %44 = vector.load %arg11[%43, %c0_20, %c0_21] : memref<8x8x512xbf16, #tpu.memory_space<vmem>>, vector<1x8x512xbf16>
    %45 = vector.shape_cast %44 : vector<1x8x512xbf16> to vector<8x512xbf16>
    %46 = arith.extf %45 : vector<8x512xbf16> to vector<8x512xf32>
    %47 = arith.truncf %36 : vector<8x128xf32> to vector<8x128xbf16>
    %c0_22 = arith.constant 0 : index
    %c0_23 = arith.constant 0 : index
    %48 = vector.load %arg2[%c0_22, %c0_23] : memref<128x512xbf16, #tpu.memory_space<vmem>>, vector<128x512xbf16>
    %cst_24 = arith.constant dense<0.000000e+00> : vector<8x512xf32>
    %49 = tpu.matmul %47, %48, %cst_24 {dimension_numbers = #tpu.dot_dimension_numbers<[1], [0], [0], [1], [0, 0, 1, 1], [], []>} : vector<8x128xbf16>, vector<128x512xbf16>, vector<8x512xf32> -> vector<8x512xf32>
    %50 = arith.addf %46, %49 : vector<8x512xf32>
    %51 = arith.addf %50, %2 : vector<8x512xf32>
    %52 = vector.extract_strided_slice %51 {offsets = [0, 0], sizes = [8, 384], strides = [1, 1]} : vector<8x512xf32> to vector<8x384xf32>
    %53 = arith.negf %52 : vector<8x384xf32>
    %54 = math.exp %53 : vector<8x384xf32>
    %cst_25 = arith.constant 1.000000e+00 : f32
    %55 = vector.broadcast %cst_25 : f32 to vector<8x384xf32>
    %56 = arith.addf %55, %54 : vector<8x384xf32>
    %57 = arith.divf %55, %56 : vector<8x384xf32>
    %58 = vector.extract_strided_slice %51 {offsets = [0, 384], sizes = [8, 128], strides = [1, 1]} : vector<8x512xf32> to vector<8x128xf32>
    %59 = math.tanh %58 : vector<8x128xf32>
    %60 = vector.extract_strided_slice %57 {offsets = [0, 0], sizes = [8, 128], strides = [1, 1]} : vector<8x384xf32> to vector<8x128xf32>
    %61 = vector.extract_strided_slice %57 {offsets = [0, 128], sizes = [8, 128], strides = [1, 1]} : vector<8x384xf32> to vector<8x128xf32>
    %62 = vector.extract_strided_slice %57 {offsets = [0, 256], sizes = [8, 128], strides = [1, 1]} : vector<8x384xf32> to vector<8x128xf32>
    %63 = arith.mulf %61, %34 : vector<8x128xf32>
    %64 = arith.mulf %60, %59 : vector<8x128xf32>
    %65 = arith.addf %63, %64 : vector<8x128xf32>
    %66 = math.tanh %65 : vector<8x128xf32>
    %67 = arith.mulf %62, %66 : vector<8x128xf32>
    %68 = arith.truncf %67 : vector<8x128xf32> to vector<8x128xbf16>
    %c0_i32_26 = arith.constant 0 : i32
    %69 = arith.addi %c0_i32_26, %c1_i32 : i32
    %70 = arith.index_cast %69 : i32 to index
    %c0_27 = arith.constant 0 : index
    %c0_28 = arith.constant 0 : index
    %71 = vector.load %arg10[%70, %c0_27, %c0_28] : memref<8x8x128xbf16, #tpu.memory_space<vmem>>, vector<1x8x128xbf16>
    %72 = vector.shape_cast %71 : vector<1x8x128xbf16> to vector<8x128xbf16>
    %73 = vector.shape_cast %68 : vector<8x128xbf16> to vector<1x8x128xbf16>
    tpu.vector_store %arg10[%70, %c0_27, %c0_28], %73 {strides = array<i32>} : memref<8x8x128xbf16, #tpu.memory_space<vmem>>, vector<1x8x128xbf16>,
    %c2_i32 = arith.constant 2 : i32
    %74 = arith.index_cast %c2_i32 : i32 to index
    %c0_29 = arith.constant 0 : index
    %c0_30 = arith.constant 0 : index
    %75 = vector.load %arg11[%74, %c0_29, %c0_30] : memref<8x8x512xbf16, #tpu.memory_space<vmem>>, vector<1x8x512xbf16>
    %76 = vector.shape_cast %75 : vector<1x8x512xbf16> to vector<8x512xbf16>
    %77 = arith.extf %76 : vector<8x512xbf16> to vector<8x512xf32>
    %78 = arith.truncf %67 : vector<8x128xf32> to vector<8x128xbf16>
    %c0_31 = arith.constant 0 : index
    %c0_32 = arith.constant 0 : index
    %79 = vector.load %arg2[%c0_31, %c0_32] : memref<128x512xbf16, #tpu.memory_space<vmem>>, vector<128x512xbf16>
    %cst_33 = arith.constant dense<0.000000e+00> : vector<8x512xf32>
    %80 = tpu.matmul %78, %79, %cst_33 {dimension_numbers = #tpu.dot_dimension_numbers<[1], [0], [0], [1], [0, 0, 1, 1], [], []>} : vector<8x128xbf16>, vector<128x512xbf16>, vector<8x512xf32> -> vector<8x512xf32>
    %81 = arith.addf %77, %80 : vector<8x512xf32>
    %82 = arith.addf %81, %2 : vector<8x512xf32>
    %83 = vector.extract_strided_slice %82 {offsets = [0, 0], sizes = [8, 384], strides = [1, 1]} : vector<8x512xf32> to vector<8x384xf32>
    %84 = arith.negf %83 : vector<8x384xf32>
    %85 = math.exp %84 : vector<8x384xf32>
    %cst_34 = arith.constant 1.000000e+00 : f32
    %86 = vector.broadcast %cst_34 : f32 to vector<8x384xf32>
    %87 = arith.addf %86, %85 : vector<8x384xf32>
    %88 = arith.divf %86, %87 : vector<8x384xf32>
    %89 = vector.extract_strided_slice %82 {offsets = [0, 384], sizes = [8, 128], strides = [1, 1]} : vector<8x512xf32> to vector<8x128xf32>
    %90 = math.tanh %89 : vector<8x128xf32>
    %91 = vector.extract_strided_slice %88 {offsets = [0, 0], sizes = [8, 128], strides = [1, 1]} : vector<8x384xf32> to vector<8x128xf32>
    %92 = vector.extract_strided_slice %88 {offsets = [0, 128], sizes = [8, 128], strides = [1, 1]} : vector<8x384xf32> to vector<8x128xf32>
    %93 = vector.extract_strided_slice %88 {offsets = [0, 256], sizes = [8, 128], strides = [1, 1]} : vector<8x384xf32> to vector<8x128xf32>
    %94 = arith.mulf %92, %65 : vector<8x128xf32>
    %95 = arith.mulf %91, %90 : vector<8x128xf32>
    %96 = arith.addf %94, %95 : vector<8x128xf32>
    %97 = math.tanh %96 : vector<8x128xf32>
    %98 = arith.mulf %93, %97 : vector<8x128xf32>
    %99 = arith.truncf %98 : vector<8x128xf32> to vector<8x128xbf16>
    %c0_i32_35 = arith.constant 0 : i32
    %100 = arith.addi %c0_i32_35, %c2_i32 : i32
    %101 = arith.index_cast %100 : i32 to index
    %c0_36 = arith.constant 0 : index
    %c0_37 = arith.constant 0 : index
    %102 = vector.load %arg10[%101, %c0_36, %c0_37] : memref<8x8x128xbf16, #tpu.memory_space<vmem>>, vector<1x8x128xbf16>
    %103 = vector.shape_cast %102 : vector<1x8x128xbf16> to vector<8x128xbf16>
    %104 = vector.shape_cast %99 : vector<8x128xbf16> to vector<1x8x128xbf16>
    tpu.vector_store %arg10[%101, %c0_36, %c0_37], %104 {strides = array<i32>} : memref<8x8x128xbf16, #tpu.memory_space<vmem>>, vector<1x8x128xbf16>,
    %c3_i32 = arith.constant 3 : i32
    %105 = arith.index_cast %c3_i32 : i32 to index
    %c0_38 = arith.constant 0 : index
    %c0_39 = arith.constant 0 : index
    %106 = vector.load %arg11[%105, %c0_38, %c0_39] : memref<8x8x512xbf16, #tpu.memory_space<vmem>>, vector<1x8x512xbf16>
    %107 = vector.shape_cast %106 : vector<1x8x512xbf16> to vector<8x512xbf16>
    %108 = arith.extf %107 : vector<8x512xbf16> to vector<8x512xf32>
    %109 = arith.truncf %98 : vector<8x128xf32> to vector<8x128xbf16>
    %c0_40 = arith.constant 0 : index
    %c0_41 = arith.constant 0 : index
    %110 = vector.load %arg2[%c0_40, %c0_41] : memref<128x512xbf16, #tpu.memory_space<vmem>>, vector<128x512xbf16>
    %cst_42 = arith.constant dense<0.000000e+00> : vector<8x512xf32>
    %111 = tpu.matmul %109, %110, %cst_42 {dimension_numbers = #tpu.dot_dimension_numbers<[1], [0], [0], [1], [0, 0, 1, 1], [], []>} : vector<8x128xbf16>, vector<128x512xbf16>, vector<8x512xf32> -> vector<8x512xf32>
    %112 = arith.addf %108, %111 : vector<8x512xf32>
    %113 = arith.addf %112, %2 : vector<8x512xf32>
    %114 = vector.extract_strided_slice %113 {offsets = [0, 0], sizes = [8, 384], strides = [1, 1]} : vector<8x512xf32> to vector<8x384xf32>
    %115 = arith.negf %114 : vector<8x384xf32>
    %116 = math.exp %115 : vector<8x384xf32>
    %cst_43 = arith.constant 1.000000e+00 : f32
    %117 = vector.broadcast %cst_43 : f32 to vector<8x384xf32>
    %118 = arith.addf %117, %116 : vector<8x384xf32>
    %119 = arith.divf %117, %118 : vector<8x384xf32>
    %120 = vector.extract_strided_slice %113 {offsets = [0, 384], sizes = [8, 128], strides = [1, 1]} : vector<8x512xf32> to vector<8x128xf32>
    %121 = math.tanh %120 : vector<8x128xf32>
    %122 = vector.extract_strided_slice %119 {offsets = [0, 0], sizes = [8, 128], strides = [1, 1]} : vector<8x384xf32> to vector<8x128xf32>
    %123 = vector.extract_strided_slice %119 {offsets = [0, 128], sizes = [8, 128], strides = [1, 1]} : vector<8x384xf32> to vector<8x128xf32>
    %124 = vector.extract_strided_slice %119 {offsets = [0, 256], sizes = [8, 128], strides = [1, 1]} : vector<8x384xf32> to vector<8x128xf32>
    %125 = arith.mulf %123, %96 : vector<8x128xf32>
    %126 = arith.mulf %122, %121 : vector<8x128xf32>
    %127 = arith.addf %125, %126 : vector<8x128xf32>
    %128 = math.tanh %127 : vector<8x128xf32>
    %129 = arith.mulf %124, %128 : vector<8x128xf32>
    %130 = arith.truncf %129 : vector<8x128xf32> to vector<8x128xbf16>
    %c0_i32_44 = arith.constant 0 : i32
    %131 = arith.addi %c0_i32_44, %c3_i32 : i32
    %132 = arith.index_cast %131 : i32 to index
    %c0_45 = arith.constant 0 : index
    %c0_46 = arith.constant 0 : index
    %133 = vector.load %arg10[%132, %c0_45, %c0_46] : memref<8x8x128xbf16, #tpu.memory_space<vmem>>, vector<1x8x128xbf16>
    %134 = vector.shape_cast %133 : vector<1x8x128xbf16> to vector<8x128xbf16>
    %135 = vector.shape_cast %130 : vector<8x128xbf16> to vector<1x8x128xbf16>
    tpu.vector_store %arg10[%132, %c0_45, %c0_46], %135 {strides = array<i32>} : memref<8x8x128xbf16, #tpu.memory_space<vmem>>, vector<1x8x128xbf16>,
    %c4_i32 = arith.constant 4 : i32
    %136 = arith.index_cast %c4_i32 : i32 to index
    %c0_47 = arith.constant 0 : index
    %c0_48 = arith.constant 0 : index
    %137 = vector.load %arg11[%136, %c0_47, %c0_48] : memref<8x8x512xbf16, #tpu.memory_space<vmem>>, vector<1x8x512xbf16>
    %138 = vector.shape_cast %137 : vector<1x8x512xbf16> to vector<8x512xbf16>
    %139 = arith.extf %138 : vector<8x512xbf16> to vector<8x512xf32>
    %140 = arith.truncf %129 : vector<8x128xf32> to vector<8x128xbf16>
    %c0_49 = arith.constant 0 : index
    %c0_50 = arith.constant 0 : index
    %141 = vector.load %arg2[%c0_49, %c0_50] : memref<128x512xbf16, #tpu.memory_space<vmem>>, vector<128x512xbf16>
    %cst_51 = arith.constant dense<0.000000e+00> : vector<8x512xf32>
    %142 = tpu.matmul %140, %141, %cst_51 {dimension_numbers = #tpu.dot_dimension_numbers<[1], [0], [0], [1], [0, 0, 1, 1], [], []>} : vector<8x128xbf16>, vector<128x512xbf16>, vector<8x512xf32> -> vector<8x512xf32>
    %143 = arith.addf %139, %142 : vector<8x512xf32>
    %144 = arith.addf %143, %2 : vector<8x512xf32>
    %145 = vector.extract_strided_slice %144 {offsets = [0, 0], sizes = [8, 384], strides = [1, 1]} : vector<8x512xf32> to vector<8x384xf32>
    %146 = arith.negf %145 : vector<8x384xf32>
    %147 = math.exp %146 : vector<8x384xf32>
    %cst_52 = arith.constant 1.000000e+00 : f32
    %148 = vector.broadcast %cst_52 : f32 to vector<8x384xf32>
    %149 = arith.addf %148, %147 : vector<8x384xf32>
    %150 = arith.divf %148, %149 : vector<8x384xf32>
    %151 = vector.extract_strided_slice %144 {offsets = [0, 384], sizes = [8, 128], strides = [1, 1]} : vector<8x512xf32> to vector<8x128xf32>
    %152 = math.tanh %151 : vector<8x128xf32>
    %153 = vector.extract_strided_slice %150 {offsets = [0, 0], sizes = [8, 128], strides = [1, 1]} : vector<8x384xf32> to vector<8x128xf32>
    %154 = vector.extract_strided_slice %150 {offsets = [0, 128], sizes = [8, 128], strides = [1, 1]} : vector<8x384xf32> to vector<8x128xf32>
    %155 = vector.extract_strided_slice %150 {offsets = [0, 256], sizes = [8, 128], strides = [1, 1]} : vector<8x384xf32> to vector<8x128xf32>
    %156 = arith.mulf %154, %127 : vector<8x128xf32>
    %157 = arith.mulf %153, %152 : vector<8x128xf32>
    %158 = arith.addf %156, %157 : vector<8x128xf32>
    %159 = math.tanh %158 : vector<8x128xf32>
    %160 = arith.mulf %155, %159 : vector<8x128xf32>
    %161 = arith.truncf %160 : vector<8x128xf32> to vector<8x128xbf16>
    %c0_i32_53 = arith.constant 0 : i32
    %162 = arith.addi %c0_i32_53, %c4_i32 : i32
    %163 = arith.index_cast %162 : i32 to index
    %c0_54 = arith.constant 0 : index
    %c0_55 = arith.constant 0 : index
    %164 = vector.load %arg10[%163, %c0_54, %c0_55] : memref<8x8x128xbf16, #tpu.memory_space<vmem>>, vector<1x8x128xbf16>
    %165 = vector.shape_cast %164 : vector<1x8x128xbf16> to vector<8x128xbf16>
    %166 = vector.shape_cast %161 : vector<8x128xbf16> to vector<1x8x128xbf16>
    tpu.vector_store %arg10[%163, %c0_54, %c0_55], %166 {strides = array<i32>} : memref<8x8x128xbf16, #tpu.memory_space<vmem>>, vector<1x8x128xbf16>,
    %c5_i32 = arith.constant 5 : i32
    %167 = arith.index_cast %c5_i32 : i32 to index
    %c0_56 = arith.constant 0 : index
    %c0_57 = arith.constant 0 : index
    %168 = vector.load %arg11[%167, %c0_56, %c0_57] : memref<8x8x512xbf16, #tpu.memory_space<vmem>>, vector<1x8x512xbf16>
    %169 = vector.shape_cast %168 : vector<1x8x512xbf16> to vector<8x512xbf16>
    %170 = arith.extf %169 : vector<8x512xbf16> to vector<8x512xf32>
    %171 = arith.truncf %160 : vector<8x128xf32> to vector<8x128xbf16>
    %c0_58 = arith.constant 0 : index
    %c0_59 = arith.constant 0 : index
    %172 = vector.load %arg2[%c0_58, %c0_59] : memref<128x512xbf16, #tpu.memory_space<vmem>>, vector<128x512xbf16>
    %cst_60 = arith.constant dense<0.000000e+00> : vector<8x512xf32>
    %173 = tpu.matmul %171, %172, %cst_60 {dimension_numbers = #tpu.dot_dimension_numbers<[1], [0], [0], [1], [0, 0, 1, 1], [], []>} : vector<8x128xbf16>, vector<128x512xbf16>, vector<8x512xf32> -> vector<8x512xf32>
    %174 = arith.addf %170, %173 : vector<8x512xf32>
    %175 = arith.addf %174, %2 : vector<8x512xf32>
    %176 = vector.extract_strided_slice %175 {offsets = [0, 0], sizes = [8, 384], strides = [1, 1]} : vector<8x512xf32> to vector<8x384xf32>
    %177 = arith.negf %176 : vector<8x384xf32>
    %178 = math.exp %177 : vector<8x384xf32>
    %cst_61 = arith.constant 1.000000e+00 : f32
    %179 = vector.broadcast %cst_61 : f32 to vector<8x384xf32>
    %180 = arith.addf %179, %178 : vector<8x384xf32>
    %181 = arith.divf %179, %180 : vector<8x384xf32>
    %182 = vector.extract_strided_slice %175 {offsets = [0, 384], sizes = [8, 128], strides = [1, 1]} : vector<8x512xf32> to vector<8x128xf32>
    %183 = math.tanh %182 : vector<8x128xf32>
    %184 = vector.extract_strided_slice %181 {offsets = [0, 0], sizes = [8, 128], strides = [1, 1]} : vector<8x384xf32> to vector<8x128xf32>
    %185 = vector.extract_strided_slice %181 {offsets = [0, 128], sizes = [8, 128], strides = [1, 1]} : vector<8x384xf32> to vector<8x128xf32>
    %186 = vector.extract_strided_slice %181 {offsets = [0, 256], sizes = [8, 128], strides = [1, 1]} : vector<8x384xf32> to vector<8x128xf32>
    %187 = arith.mulf %185, %158 : vector<8x128xf32>
    %188 = arith.mulf %184, %183 : vector<8x128xf32>
    %189 = arith.addf %187, %188 : vector<8x128xf32>
    %190 = math.tanh %189 : vector<8x128xf32>
    %191 = arith.mulf %186, %190 : vector<8x128xf32>
    %192 = arith.truncf %191 : vector<8x128xf32> to vector<8x128xbf16>
    %c0_i32_62 = arith.constant 0 : i32
    %193 = arith.addi %c0_i32_62, %c5_i32 : i32
    %194 = arith.index_cast %193 : i32 to index
    %c0_63 = arith.constant 0 : index
    %c0_64 = arith.constant 0 : index
    %195 = vector.load %arg10[%194, %c0_63, %c0_64] : memref<8x8x128xbf16, #tpu.memory_space<vmem>>, vector<1x8x128xbf16>
    %196 = vector.shape_cast %195 : vector<1x8x128xbf16> to vector<8x128xbf16>
    %197 = vector.shape_cast %192 : vector<8x128xbf16> to vector<1x8x128xbf16>
    tpu.vector_store %arg10[%194, %c0_63, %c0_64], %197 {strides = array<i32>} : memref<8x8x128xbf16, #tpu.memory_space<vmem>>, vector<1x8x128xbf16>,
    %c6_i32 = arith.constant 6 : i32
    %198 = arith.index_cast %c6_i32 : i32 to index
    %c0_65 = arith.constant 0 : index
    %c0_66 = arith.constant 0 : index
    %199 = vector.load %arg11[%198, %c0_65, %c0_66] : memref<8x8x512xbf16, #tpu.memory_space<vmem>>, vector<1x8x512xbf16>
    %200 = vector.shape_cast %199 : vector<1x8x512xbf16> to vector<8x512xbf16>
    %201 = arith.extf %200 : vector<8x512xbf16> to vector<8x512xf32>
    %202 = arith.truncf %191 : vector<8x128xf32> to vector<8x128xbf16>
    %c0_67 = arith.constant 0 : index
    %c0_68 = arith.constant 0 : index
    %203 = vector.load %arg2[%c0_67, %c0_68] : memref<128x512xbf16, #tpu.memory_space<vmem>>, vector<128x512xbf16>
    %cst_69 = arith.constant dense<0.000000e+00> : vector<8x512xf32>
    %204 = tpu.matmul %202, %203, %cst_69 {dimension_numbers = #tpu.dot_dimension_numbers<[1], [0], [0], [1], [0, 0, 1, 1], [], []>} : vector<8x128xbf16>, vector<128x512xbf16>, vector<8x512xf32> -> vector<8x512xf32>
    %205 = arith.addf %201, %204 : vector<8x512xf32>
    %206 = arith.addf %205, %2 : vector<8x512xf32>
    %207 = vector.extract_strided_slice %206 {offsets = [0, 0], sizes = [8, 384], strides = [1, 1]} : vector<8x512xf32> to vector<8x384xf32>
    %208 = arith.negf %207 : vector<8x384xf32>
    %209 = math.exp %208 : vector<8x384xf32>
    %cst_70 = arith.constant 1.000000e+00 : f32
    %210 = vector.broadcast %cst_70 : f32 to vector<8x384xf32>
    %211 = arith.addf %210, %209 : vector<8x384xf32>
    %212 = arith.divf %210, %211 : vector<8x384xf32>
    %213 = vector.extract_strided_slice %206 {offsets = [0, 384], sizes = [8, 128], strides = [1, 1]} : vector<8x512xf32> to vector<8x128xf32>
    %214 = math.tanh %213 : vector<8x128xf32>
    %215 = vector.extract_strided_slice %212 {offsets = [0, 0], sizes = [8, 128], strides = [1, 1]} : vector<8x384xf32> to vector<8x128xf32>
    %216 = vector.extract_strided_slice %212 {offsets = [0, 128], sizes = [8, 128], strides = [1, 1]} : vector<8x384xf32> to vector<8x128xf32>
    %217 = vector.extract_strided_slice %212 {offsets = [0, 256], sizes = [8, 128], strides = [1, 1]} : vector<8x384xf32> to vector<8x128xf32>
    %218 = arith.mulf %216, %189 : vector<8x128xf32>
    %219 = arith.mulf %215, %214 : vector<8x128xf32>
    %220 = arith.addf %218, %219 : vector<8x128xf32>
    %221 = math.tanh %220 : vector<8x128xf32>
    %222 = arith.mulf %217, %221 : vector<8x128xf32>
    %223 = arith.truncf %222 : vector<8x128xf32> to vector<8x128xbf16>
    %c0_i32_71 = arith.constant 0 : i32
    %224 = arith.addi %c0_i32_71, %c6_i32 : i32
    %225 = arith.index_cast %224 : i32 to index
    %c0_72 = arith.constant 0 : index
    %c0_73 = arith.constant 0 : index
    %226 = vector.load %arg10[%225, %c0_72, %c0_73] : memref<8x8x128xbf16, #tpu.memory_space<vmem>>, vector<1x8x128xbf16>
    %227 = vector.shape_cast %226 : vector<1x8x128xbf16> to vector<8x128xbf16>
    %228 = vector.shape_cast %223 : vector<8x128xbf16> to vector<1x8x128xbf16>
    tpu.vector_store %arg10[%225, %c0_72, %c0_73], %228 {strides = array<i32>} : memref<8x8x128xbf16, #tpu.memory_space<vmem>>, vector<1x8x128xbf16>,
    %c7_i32 = arith.constant 7 : i32
    %229 = arith.index_cast %c7_i32 : i32 to index
    %c0_74 = arith.constant 0 : index
    %c0_75 = arith.constant 0 : index
    %230 = vector.load %arg11[%229, %c0_74, %c0_75] : memref<8x8x512xbf16, #tpu.memory_space<vmem>>, vector<1x8x512xbf16>
    %231 = vector.shape_cast %230 : vector<1x8x512xbf16> to vector<8x512xbf16>
    %232 = arith.extf %231 : vector<8x512xbf16> to vector<8x512xf32>
    %233 = arith.truncf %222 : vector<8x128xf32> to vector<8x128xbf16>
    %c0_76 = arith.constant 0 : index
    %c0_77 = arith.constant 0 : index
    %234 = vector.load %arg2[%c0_76, %c0_77] : memref<128x512xbf16, #tpu.memory_space<vmem>>, vector<128x512xbf16>
    %cst_78 = arith.constant dense<0.000000e+00> : vector<8x512xf32>
    %235 = tpu.matmul %233, %234, %cst_78 {dimension_numbers = #tpu.dot_dimension_numbers<[1], [0], [0], [1], [0, 0, 1, 1], [], []>} : vector<8x128xbf16>, vector<128x512xbf16>, vector<8x512xf32> -> vector<8x512xf32>
    %236 = arith.addf %232, %235 : vector<8x512xf32>
    %237 = arith.addf %236, %2 : vector<8x512xf32>
    %238 = vector.extract_strided_slice %237 {offsets = [0, 0], sizes = [8, 384], strides = [1, 1]} : vector<8x512xf32> to vector<8x384xf32>
    %239 = arith.negf %238 : vector<8x384xf32>
    %240 = math.exp %239 : vector<8x384xf32>
    %cst_79 = arith.constant 1.000000e+00 : f32
    %241 = vector.broadcast %cst_79 : f32 to vector<8x384xf32>
    %242 = arith.addf %241, %240 : vector<8x384xf32>
    %243 = arith.divf %241, %242 : vector<8x384xf32>
    %244 = vector.extract_strided_slice %237 {offsets = [0, 384], sizes = [8, 128], strides = [1, 1]} : vector<8x512xf32> to vector<8x128xf32>
    %245 = math.tanh %244 : vector<8x128xf32>
    %246 = vector.extract_strided_slice %243 {offsets = [0, 0], sizes = [8, 128], strides = [1, 1]} : vector<8x384xf32> to vector<8x128xf32>
    %247 = vector.extract_strided_slice %243 {offsets = [0, 128], sizes = [8, 128], strides = [1, 1]} : vector<8x384xf32> to vector<8x128xf32>
    %248 = vector.extract_strided_slice %243 {offsets = [0, 256], sizes = [8, 128], strides = [1, 1]} : vector<8x384xf32> to vector<8x128xf32>
    %249 = arith.mulf %247, %220 : vector<8x128xf32>
    %250 = arith.mulf %246, %245 : vector<8x128xf32>
    %251 = arith.addf %249, %250 : vector<8x128xf32>
    %252 = math.tanh %251 : vector<8x128xf32>
    %253 = arith.mulf %248, %252 : vector<8x128xf32>
    %254 = arith.truncf %253 : vector<8x128xf32> to vector<8x128xbf16>
    %c0_i32_80 = arith.constant 0 : i32
    %255 = arith.addi %c0_i32_80, %c7_i32 : i32
    %256 = arith.index_cast %255 : i32 to index
    %c0_81 = arith.constant 0 : index
    %c0_82 = arith.constant 0 : index
    %257 = vector.load %arg10[%256, %c0_81, %c0_82] : memref<8x8x128xbf16, #tpu.memory_space<vmem>>, vector<1x8x128xbf16>
    %258 = vector.shape_cast %257 : vector<1x8x128xbf16> to vector<8x128xbf16>
    %259 = vector.shape_cast %254 : vector<8x128xbf16> to vector<1x8x128xbf16>
    tpu.vector_store %arg10[%256, %c0_81, %c0_82], %259 {strides = array<i32>} : memref<8x8x128xbf16, #tpu.memory_space<vmem>>, vector<1x8x128xbf16>,
    %c8_i32 = arith.constant 8 : i32
    %c0_83 = arith.constant 0 : index
    %c0_84 = arith.constant 0 : index
    %260 = vector.load %arg6[%c0_83, %c0_84] : memref<1x512xf32, #tpu.memory_space<vmem>>, vector<1x512xf32>
    %261 = vector.shape_cast %260 : vector<1x512xf32> to vector<1x512xf32>
    %262 = vector.broadcast %261 : vector<1x512xf32> to vector<8x512xf32>
    %cst_85 = arith.constant 0.000000e+00 : f32
    %263 = vector.broadcast %cst_85 : f32 to vector<8x128xf32>
    %cst_86 = arith.constant 0.000000e+00 : f32
    %264 = vector.broadcast %cst_86 : f32 to vector<8x128xf32>
    %c0_87 = arith.constant 0 : index
    %c0_88 = arith.constant 0 : index
    %c0_89 = arith.constant 0 : index
    %265 = vector.load %arg10[%c0_87, %c0_88, %c0_89] : memref<8x8x128xbf16, #tpu.memory_space<vmem>>, vector<8x8x128xbf16>
    %266 = vector.shape_cast %265 : vector<8x8x128xbf16> to vector<64x128xbf16>
    %c0_90 = arith.constant 0 : index
    %c0_91 = arith.constant 0 : index
    %267 = vector.load %arg4[%c0_90, %c0_91] : memref<128x512xbf16, #tpu.memory_space<vmem>>, vector<128x512xbf16>
    %cst_92 = arith.constant dense<0.000000e+00> : vector<64x512xf32>
    %268 = tpu.matmul %266, %267, %cst_92 {dimension_numbers = #tpu.dot_dimension_numbers<[1], [0], [0], [1], [0, 0, 1, 1], [], []>} : vector<64x128xbf16>, vector<128x512xbf16>, vector<64x512xf32> -> vector<64x512xf32>
    %269 = vector.shape_cast %268 : vector<64x512xf32> to vector<8x8x512xf32>
    %270 = arith.truncf %269 : vector<8x8x512xf32> to vector<8x8x512xbf16>
    %c0_93 = arith.constant 0 : index
    %c0_94 = arith.constant 0 : index
    %c0_95 = arith.constant 0 : index
    %271 = vector.load %arg11[%c0_93, %c0_94, %c0_95] : memref<8x8x512xbf16, #tpu.memory_space<vmem>>, vector<8x8x512xbf16>
    tpu.vector_store %arg11[%c0_93, %c0_94, %c0_95], %270 {strides = array<i32>} : memref<8x8x512xbf16, #tpu.memory_space<vmem>>, vector<8x8x512xbf16>,
    %c0_i32_96 = arith.constant 0 : i32
    %272 = arith.index_cast %c0_i32_96 : i32 to index
    %c0_97 = arith.constant 0 : index
    %c0_98 = arith.constant 0 : index
    %273 = vector.load %arg11[%272, %c0_97, %c0_98] : memref<8x8x512xbf16, #tpu.memory_space<vmem>>, vector<1x8x512xbf16>
    %274 = vector.shape_cast %273 : vector<1x8x512xbf16> to vector<8x512xbf16>
    %275 = arith.extf %274 : vector<8x512xbf16> to vector<8x512xf32>
    %276 = arith.truncf %263 : vector<8x128xf32> to vector<8x128xbf16>
    %c0_99 = arith.constant 0 : index
    %c0_100 = arith.constant 0 : index
    %277 = vector.load %arg5[%c0_99, %c0_100] : memref<128x512xbf16, #tpu.memory_space<vmem>>, vector<128x512xbf16>
    %cst_101 = arith.constant dense<0.000000e+00> : vector<8x512xf32>
    %278 = tpu.matmul %276, %277, %cst_101 {dimension_numbers = #tpu.dot_dimension_numbers<[1], [0], [0], [1], [0, 0, 1, 1], [], []>} : vector<8x128xbf16>, vector<128x512xbf16>, vector<8x512xf32> -> vector<8x512xf32>
    %279 = arith.addf %275, %278 : vector<8x512xf32>
    %280 = arith.addf %279, %262 : vector<8x512xf32>
    %281 = vector.extract_strided_slice %280 {offsets = [0, 0], sizes = [8, 384], strides = [1, 1]} : vector<8x512xf32> to vector<8x384xf32>
    %282 = arith.negf %281 : vector<8x384xf32>
    %283 = math.exp %282 : vector<8x384xf32>
    %cst_102 = arith.constant 1.000000e+00 : f32
    %284 = vector.broadcast %cst_102 : f32 to vector<8x384xf32>
    %285 = arith.addf %284, %283 : vector<8x384xf32>
    %286 = arith.divf %284, %285 : vector<8x384xf32>
    %287 = vector.extract_strided_slice %280 {offsets = [0, 384], sizes = [8, 128], strides = [1, 1]} : vector<8x512xf32> to vector<8x128xf32>
    %288 = math.tanh %287 : vector<8x128xf32>
    %289 = vector.extract_strided_slice %286 {offsets = [0, 0], sizes = [8, 128], strides = [1, 1]} : vector<8x384xf32> to vector<8x128xf32>
    %290 = vector.extract_strided_slice %286 {offsets = [0, 128], sizes = [8, 128], strides = [1, 1]} : vector<8x384xf32> to vector<8x128xf32>
    %291 = vector.extract_strided_slice %286 {offsets = [0, 256], sizes = [8, 128], strides = [1, 1]} : vector<8x384xf32> to vector<8x128xf32>
    %292 = arith.mulf %290, %264 : vector<8x128xf32>
    %293 = arith.mulf %289, %288 : vector<8x128xf32>
    %294 = arith.addf %292, %293 : vector<8x128xf32>
    %295 = math.tanh %294 : vector<8x128xf32>
    %296 = arith.mulf %291, %295 : vector<8x128xf32>
    %c1_i32_103 = arith.constant 1 : i32
    %297 = arith.index_cast %c1_i32_103 : i32 to index
    %c0_104 = arith.constant 0 : index
    %c0_105 = arith.constant 0 : index
    %298 = vector.load %arg11[%297, %c0_104, %c0_105] : memref<8x8x512xbf16, #tpu.memory_space<vmem>>, vector<1x8x512xbf16>
    %299 = vector.shape_cast %298 : vector<1x8x512xbf16> to vector<8x512xbf16>
    %300 = arith.extf %299 : vector<8x512xbf16> to vector<8x512xf32>
    %301 = arith.truncf %296 : vector<8x128xf32> to vector<8x128xbf16>
    %c0_106 = arith.constant 0 : index
    %c0_107 = arith.constant 0 : index
    %302 = vector.load %arg5[%c0_106, %c0_107] : memref<128x512xbf16, #tpu.memory_space<vmem>>, vector<128x512xbf16>
    %cst_108 = arith.constant dense<0.000000e+00> : vector<8x512xf32>
    %303 = tpu.matmul %301, %302, %cst_108 {dimension_numbers = #tpu.dot_dimension_numbers<[1], [0], [0], [1], [0, 0, 1, 1], [], []>} : vector<8x128xbf16>, vector<128x512xbf16>, vector<8x512xf32> -> vector<8x512xf32>
    %304 = arith.addf %300, %303 : vector<8x512xf32>
    %305 = arith.addf %304, %262 : vector<8x512xf32>
    %306 = vector.extract_strided_slice %305 {offsets = [0, 0], sizes = [8, 384], strides = [1, 1]} : vector<8x512xf32> to vector<8x384xf32>
    %307 = arith.negf %306 : vector<8x384xf32>
    %308 = math.exp %307 : vector<8x384xf32>
    %cst_109 = arith.constant 1.000000e+00 : f32
    %309 = vector.broadcast %cst_109 : f32 to vector<8x384xf32>
    %310 = arith.addf %309, %308 : vector<8x384xf32>
    %311 = arith.divf %309, %310 : vector<8x384xf32>
    %312 = vector.extract_strided_slice %305 {offsets = [0, 384], sizes = [8, 128], strides = [1, 1]} : vector<8x512xf32> to vector<8x128xf32>
    %313 = math.tanh %312 : vector<8x128xf32>
    %314 = vector.extract_strided_slice %311 {offsets = [0, 0], sizes = [8, 128], strides = [1, 1]} : vector<8x384xf32> to vector<8x128xf32>
    %315 = vector.extract_strided_slice %311 {offsets = [0, 128], sizes = [8, 128], strides = [1, 1]} : vector<8x384xf32> to vector<8x128xf32>
    %316 = vector.extract_strided_slice %311 {offsets = [0, 256], sizes = [8, 128], strides = [1, 1]} : vector<8x384xf32> to vector<8x128xf32>
    %317 = arith.mulf %315, %294 : vector<8x128xf32>
    %318 = arith.mulf %314, %313 : vector<8x128xf32>
    %319 = arith.addf %317, %318 : vector<8x128xf32>
    %320 = math.tanh %319 : vector<8x128xf32>
    %321 = arith.mulf %316, %320 : vector<8x128xf32>
    %c2_i32_110 = arith.constant 2 : i32
    %322 = arith.index_cast %c2_i32_110 : i32 to index
    %c0_111 = arith.constant 0 : index
    %c0_112 = arith.constant 0 : index
    %323 = vector.load %arg11[%322, %c0_111, %c0_112] : memref<8x8x512xbf16, #tpu.memory_space<vmem>>, vector<1x8x512xbf16>
    %324 = vector.shape_cast %323 : vector<1x8x512xbf16> to vector<8x512xbf16>
    %325 = arith.extf %324 : vector<8x512xbf16> to vector<8x512xf32>
    %326 = arith.truncf %321 : vector<8x128xf32> to vector<8x128xbf16>
    %c0_113 = arith.constant 0 : index
    %c0_114 = arith.constant 0 : index
    %327 = vector.load %arg5[%c0_113, %c0_114] : memref<128x512xbf16, #tpu.memory_space<vmem>>, vector<128x512xbf16>
    %cst_115 = arith.constant dense<0.000000e+00> : vector<8x512xf32>
    %328 = tpu.matmul %326, %327, %cst_115 {dimension_numbers = #tpu.dot_dimension_numbers<[1], [0], [0], [1], [0, 0, 1, 1], [], []>} : vector<8x128xbf16>, vector<128x512xbf16>, vector<8x512xf32> -> vector<8x512xf32>
    %329 = arith.addf %325, %328 : vector<8x512xf32>
    %330 = arith.addf %329, %262 : vector<8x512xf32>
    %331 = vector.extract_strided_slice %330 {offsets = [0, 0], sizes = [8, 384], strides = [1, 1]} : vector<8x512xf32> to vector<8x384xf32>
    %332 = arith.negf %331 : vector<8x384xf32>
    %333 = math.exp %332 : vector<8x384xf32>
    %cst_116 = arith.constant 1.000000e+00 : f32
    %334 = vector.broadcast %cst_116 : f32 to vector<8x384xf32>
    %335 = arith.addf %334, %333 : vector<8x384xf32>
    %336 = arith.divf %334, %335 : vector<8x384xf32>
    %337 = vector.extract_strided_slice %330 {offsets = [0, 384], sizes = [8, 128], strides = [1, 1]} : vector<8x512xf32> to vector<8x128xf32>
    %338 = math.tanh %337 : vector<8x128xf32>
    %339 = vector.extract_strided_slice %336 {offsets = [0, 0], sizes = [8, 128], strides = [1, 1]} : vector<8x384xf32> to vector<8x128xf32>
    %340 = vector.extract_strided_slice %336 {offsets = [0, 128], sizes = [8, 128], strides = [1, 1]} : vector<8x384xf32> to vector<8x128xf32>
    %341 = vector.extract_strided_slice %336 {offsets = [0, 256], sizes = [8, 128], strides = [1, 1]} : vector<8x384xf32> to vector<8x128xf32>
    %342 = arith.mulf %340, %319 : vector<8x128xf32>
    %343 = arith.mulf %339, %338 : vector<8x128xf32>
    %344 = arith.addf %342, %343 : vector<8x128xf32>
    %345 = math.tanh %344 : vector<8x128xf32>
    %346 = arith.mulf %341, %345 : vector<8x128xf32>
    %c3_i32_117 = arith.constant 3 : i32
    %347 = arith.index_cast %c3_i32_117 : i32 to index
    %c0_118 = arith.constant 0 : index
    %c0_119 = arith.constant 0 : index
    %348 = vector.load %arg11[%347, %c0_118, %c0_119] : memref<8x8x512xbf16, #tpu.memory_space<vmem>>, vector<1x8x512xbf16>
    %349 = vector.shape_cast %348 : vector<1x8x512xbf16> to vector<8x512xbf16>
    %350 = arith.extf %349 : vector<8x512xbf16> to vector<8x512xf32>
    %351 = arith.truncf %346 : vector<8x128xf32> to vector<8x128xbf16>
    %c0_120 = arith.constant 0 : index
    %c0_121 = arith.constant 0 : index
    %352 = vector.load %arg5[%c0_120, %c0_121] : memref<128x512xbf16, #tpu.memory_space<vmem>>, vector<128x512xbf16>
    %cst_122 = arith.constant dense<0.000000e+00> : vector<8x512xf32>
    %353 = tpu.matmul %351, %352, %cst_122 {dimension_numbers = #tpu.dot_dimension_numbers<[1], [0], [0], [1], [0, 0, 1, 1], [], []>} : vector<8x128xbf16>, vector<128x512xbf16>, vector<8x512xf32> -> vector<8x512xf32>
    %354 = arith.addf %350, %353 : vector<8x512xf32>
    %355 = arith.addf %354, %262 : vector<8x512xf32>
    %356 = vector.extract_strided_slice %355 {offsets = [0, 0], sizes = [8, 384], strides = [1, 1]} : vector<8x512xf32> to vector<8x384xf32>
    %357 = arith.negf %356 : vector<8x384xf32>
    %358 = math.exp %357 : vector<8x384xf32>
    %cst_123 = arith.constant 1.000000e+00 : f32
    %359 = vector.broadcast %cst_123 : f32 to vector<8x384xf32>
    %360 = arith.addf %359, %358 : vector<8x384xf32>
    %361 = arith.divf %359, %360 : vector<8x384xf32>
    %362 = vector.extract_strided_slice %355 {offsets = [0, 384], sizes = [8, 128], strides = [1, 1]} : vector<8x512xf32> to vector<8x128xf32>
    %363 = math.tanh %362 : vector<8x128xf32>
    %364 = vector.extract_strided_slice %361 {offsets = [0, 0], sizes = [8, 128], strides = [1, 1]} : vector<8x384xf32> to vector<8x128xf32>
    %365 = vector.extract_strided_slice %361 {offsets = [0, 128], sizes = [8, 128], strides = [1, 1]} : vector<8x384xf32> to vector<8x128xf32>
    %366 = vector.extract_strided_slice %361 {offsets = [0, 256], sizes = [8, 128], strides = [1, 1]} : vector<8x384xf32> to vector<8x128xf32>
    %367 = arith.mulf %365, %344 : vector<8x128xf32>
    %368 = arith.mulf %364, %363 : vector<8x128xf32>
    %369 = arith.addf %367, %368 : vector<8x128xf32>
    %370 = math.tanh %369 : vector<8x128xf32>
    %371 = arith.mulf %366, %370 : vector<8x128xf32>
    %c4_i32_124 = arith.constant 4 : i32
    %372 = arith.index_cast %c4_i32_124 : i32 to index
    %c0_125 = arith.constant 0 : index
    %c0_126 = arith.constant 0 : index
    %373 = vector.load %arg11[%372, %c0_125, %c0_126] : memref<8x8x512xbf16, #tpu.memory_space<vmem>>, vector<1x8x512xbf16>
    %374 = vector.shape_cast %373 : vector<1x8x512xbf16> to vector<8x512xbf16>
    %375 = arith.extf %374 : vector<8x512xbf16> to vector<8x512xf32>
    %376 = arith.truncf %371 : vector<8x128xf32> to vector<8x128xbf16>
    %c0_127 = arith.constant 0 : index
    %c0_128 = arith.constant 0 : index
    %377 = vector.load %arg5[%c0_127, %c0_128] : memref<128x512xbf16, #tpu.memory_space<vmem>>, vector<128x512xbf16>
    %cst_129 = arith.constant dense<0.000000e+00> : vector<8x512xf32>
    %378 = tpu.matmul %376, %377, %cst_129 {dimension_numbers = #tpu.dot_dimension_numbers<[1], [0], [0], [1], [0, 0, 1, 1], [], []>} : vector<8x128xbf16>, vector<128x512xbf16>, vector<8x512xf32> -> vector<8x512xf32>
    %379 = arith.addf %375, %378 : vector<8x512xf32>
    %380 = arith.addf %379, %262 : vector<8x512xf32>
    %381 = vector.extract_strided_slice %380 {offsets = [0, 0], sizes = [8, 384], strides = [1, 1]} : vector<8x512xf32> to vector<8x384xf32>
    %382 = arith.negf %381 : vector<8x384xf32>
    %383 = math.exp %382 : vector<8x384xf32>
    %cst_130 = arith.constant 1.000000e+00 : f32
    %384 = vector.broadcast %cst_130 : f32 to vector<8x384xf32>
    %385 = arith.addf %384, %383 : vector<8x384xf32>
    %386 = arith.divf %384, %385 : vector<8x384xf32>
    %387 = vector.extract_strided_slice %380 {offsets = [0, 384], sizes = [8, 128], strides = [1, 1]} : vector<8x512xf32> to vector<8x128xf32>
    %388 = math.tanh %387 : vector<8x128xf32>
    %389 = vector.extract_strided_slice %386 {offsets = [0, 0], sizes = [8, 128], strides = [1, 1]} : vector<8x384xf32> to vector<8x128xf32>
    %390 = vector.extract_strided_slice %386 {offsets = [0, 128], sizes = [8, 128], strides = [1, 1]} : vector<8x384xf32> to vector<8x128xf32>
    %391 = vector.extract_strided_slice %386 {offsets = [0, 256], sizes = [8, 128], strides = [1, 1]} : vector<8x384xf32> to vector<8x128xf32>
    %392 = arith.mulf %390, %369 : vector<8x128xf32>
    %393 = arith.mulf %389, %388 : vector<8x128xf32>
    %394 = arith.addf %392, %393 : vector<8x128xf32>
    %395 = math.tanh %394 : vector<8x128xf32>
    %396 = arith.mulf %391, %395 : vector<8x128xf32>
    %c5_i32_131 = arith.constant 5 : i32
    %397 = arith.index_cast %c5_i32_131 : i32 to index
    %c0_132 = arith.constant 0 : index
    %c0_133 = arith.constant 0 : index
    %398 = vector.load %arg11[%397, %c0_132, %c0_133] : memref<8x8x512xbf16, #tpu.memory_space<vmem>>, vector<1x8x512xbf16>
    %399 = vector.shape_cast %398 : vector<1x8x512xbf16> to vector<8x512xbf16>
    %400 = arith.extf %399 : vector<8x512xbf16> to vector<8x512xf32>
    %401 = arith.truncf %396 : vector<8x128xf32> to vector<8x128xbf16>
    %c0_134 = arith.constant 0 : index
    %c0_135 = arith.constant 0 : index
    %402 = vector.load %arg5[%c0_134, %c0_135] : memref<128x512xbf16, #tpu.memory_space<vmem>>, vector<128x512xbf16>
    %cst_136 = arith.constant dense<0.000000e+00> : vector<8x512xf32>
    %403 = tpu.matmul %401, %402, %cst_136 {dimension_numbers = #tpu.dot_dimension_numbers<[1], [0], [0], [1], [0, 0, 1, 1], [], []>} : vector<8x128xbf16>, vector<128x512xbf16>, vector<8x512xf32> -> vector<8x512xf32>
    %404 = arith.addf %400, %403 : vector<8x512xf32>
    %405 = arith.addf %404, %262 : vector<8x512xf32>
    %406 = vector.extract_strided_slice %405 {offsets = [0, 0], sizes = [8, 384], strides = [1, 1]} : vector<8x512xf32> to vector<8x384xf32>
    %407 = arith.negf %406 : vector<8x384xf32>
    %408 = math.exp %407 : vector<8x384xf32>
    %cst_137 = arith.constant 1.000000e+00 : f32
    %409 = vector.broadcast %cst_137 : f32 to vector<8x384xf32>
    %410 = arith.addf %409, %408 : vector<8x384xf32>
    %411 = arith.divf %409, %410 : vector<8x384xf32>
    %412 = vector.extract_strided_slice %405 {offsets = [0, 384], sizes = [8, 128], strides = [1, 1]} : vector<8x512xf32> to vector<8x128xf32>
    %413 = math.tanh %412 : vector<8x128xf32>
    %414 = vector.extract_strided_slice %411 {offsets = [0, 0], sizes = [8, 128], strides = [1, 1]} : vector<8x384xf32> to vector<8x128xf32>
    %415 = vector.extract_strided_slice %411 {offsets = [0, 128], sizes = [8, 128], strides = [1, 1]} : vector<8x384xf32> to vector<8x128xf32>
    %416 = vector.extract_strided_slice %411 {offsets = [0, 256], sizes = [8, 128], strides = [1, 1]} : vector<8x384xf32> to vector<8x128xf32>
    %417 = arith.mulf %415, %394 : vector<8x128xf32>
    %418 = arith.mulf %414, %413 : vector<8x128xf32>
    %419 = arith.addf %417, %418 : vector<8x128xf32>
    %420 = math.tanh %419 : vector<8x128xf32>
    %421 = arith.mulf %416, %420 : vector<8x128xf32>
    %c6_i32_138 = arith.constant 6 : i32
    %422 = arith.index_cast %c6_i32_138 : i32 to index
    %c0_139 = arith.constant 0 : index
    %c0_140 = arith.constant 0 : index
    %423 = vector.load %arg11[%422, %c0_139, %c0_140] : memref<8x8x512xbf16, #tpu.memory_space<vmem>>, vector<1x8x512xbf16>
    %424 = vector.shape_cast %423 : vector<1x8x512xbf16> to vector<8x512xbf16>
    %425 = arith.extf %424 : vector<8x512xbf16> to vector<8x512xf32>
    %426 = arith.truncf %421 : vector<8x128xf32> to vector<8x128xbf16>
    %c0_141 = arith.constant 0 : index
    %c0_142 = arith.constant 0 : index
    %427 = vector.load %arg5[%c0_141, %c0_142] : memref<128x512xbf16, #tpu.memory_space<vmem>>, vector<128x512xbf16>
    %cst_143 = arith.constant dense<0.000000e+00> : vector<8x512xf32>
    %428 = tpu.matmul %426, %427, %cst_143 {dimension_numbers = #tpu.dot_dimension_numbers<[1], [0], [0], [1], [0, 0, 1, 1], [], []>} : vector<8x128xbf16>, vector<128x512xbf16>, vector<8x512xf32> -> vector<8x512xf32>
    %429 = arith.addf %425, %428 : vector<8x512xf32>
    %430 = arith.addf %429, %262 : vector<8x512xf32>
    %431 = vector.extract_strided_slice %430 {offsets = [0, 0], sizes = [8, 384], strides = [1, 1]} : vector<8x512xf32> to vector<8x384xf32>
    %432 = arith.negf %431 : vector<8x384xf32>
    %433 = math.exp %432 : vector<8x384xf32>
    %cst_144 = arith.constant 1.000000e+00 : f32
    %434 = vector.broadcast %cst_144 : f32 to vector<8x384xf32>
    %435 = arith.addf %434, %433 : vector<8x384xf32>
    %436 = arith.divf %434, %435 : vector<8x384xf32>
    %437 = vector.extract_strided_slice %430 {offsets = [0, 384], sizes = [8, 128], strides = [1, 1]} : vector<8x512xf32> to vector<8x128xf32>
    %438 = math.tanh %437 : vector<8x128xf32>
    %439 = vector.extract_strided_slice %436 {offsets = [0, 0], sizes = [8, 128], strides = [1, 1]} : vector<8x384xf32> to vector<8x128xf32>
    %440 = vector.extract_strided_slice %436 {offsets = [0, 128], sizes = [8, 128], strides = [1, 1]} : vector<8x384xf32> to vector<8x128xf32>
    %441 = vector.extract_strided_slice %436 {offsets = [0, 256], sizes = [8, 128], strides = [1, 1]} : vector<8x384xf32> to vector<8x128xf32>
    %442 = arith.mulf %440, %419 : vector<8x128xf32>
    %443 = arith.mulf %439, %438 : vector<8x128xf32>
    %444 = arith.addf %442, %443 : vector<8x128xf32>
    %445 = math.tanh %444 : vector<8x128xf32>
    %446 = arith.mulf %441, %445 : vector<8x128xf32>
    %c7_i32_145 = arith.constant 7 : i32
    %447 = arith.index_cast %c7_i32_145 : i32 to index
    %c0_146 = arith.constant 0 : index
    %c0_147 = arith.constant 0 : index
    %448 = vector.load %arg11[%447, %c0_146, %c0_147] : memref<8x8x512xbf16, #tpu.memory_space<vmem>>, vector<1x8x512xbf16>
    %449 = vector.shape_cast %448 : vector<1x8x512xbf16> to vector<8x512xbf16>
    %450 = arith.extf %449 : vector<8x512xbf16> to vector<8x512xf32>
    %451 = arith.truncf %446 : vector<8x128xf32> to vector<8x128xbf16>
    %c0_148 = arith.constant 0 : index
    %c0_149 = arith.constant 0 : index
    %452 = vector.load %arg5[%c0_148, %c0_149] : memref<128x512xbf16, #tpu.memory_space<vmem>>, vector<128x512xbf16>
    %cst_150 = arith.constant dense<0.000000e+00> : vector<8x512xf32>
    %453 = tpu.matmul %451, %452, %cst_150 {dimension_numbers = #tpu.dot_dimension_numbers<[1], [0], [0], [1], [0, 0, 1, 1], [], []>} : vector<8x128xbf16>, vector<128x512xbf16>, vector<8x512xf32> -> vector<8x512xf32>
    %454 = arith.addf %450, %453 : vector<8x512xf32>
    %455 = arith.addf %454, %262 : vector<8x512xf32>
    %456 = vector.extract_strided_slice %455 {offsets = [0, 0], sizes = [8, 384], strides = [1, 1]} : vector<8x512xf32> to vector<8x384xf32>
    %457 = arith.negf %456 : vector<8x384xf32>
    %458 = math.exp %457 : vector<8x384xf32>
    %cst_151 = arith.constant 1.000000e+00 : f32
    %459 = vector.broadcast %cst_151 : f32 to vector<8x384xf32>
    %460 = arith.addf %459, %458 : vector<8x384xf32>
    %461 = arith.divf %459, %460 : vector<8x384xf32>
    %462 = vector.extract_strided_slice %455 {offsets = [0, 384], sizes = [8, 128], strides = [1, 1]} : vector<8x512xf32> to vector<8x128xf32>
    %463 = math.tanh %462 : vector<8x128xf32>
    %464 = vector.extract_strided_slice %461 {offsets = [0, 0], sizes = [8, 128], strides = [1, 1]} : vector<8x384xf32> to vector<8x128xf32>
    %465 = vector.extract_strided_slice %461 {offsets = [0, 128], sizes = [8, 128], strides = [1, 1]} : vector<8x384xf32> to vector<8x128xf32>
    %466 = vector.extract_strided_slice %461 {offsets = [0, 256], sizes = [8, 128], strides = [1, 1]} : vector<8x384xf32> to vector<8x128xf32>
    %467 = arith.mulf %465, %444 : vector<8x128xf32>
    %468 = arith.mulf %464, %463 : vector<8x128xf32>
    %469 = arith.addf %467, %468 : vector<8x128xf32>
    %470 = math.tanh %469 : vector<8x128xf32>
    %471 = arith.mulf %466, %470 : vector<8x128xf32>
    %c8_i32_152 = arith.constant 8 : i32
    %472 = arith.truncf %471 : vector<8x128xf32> to vector<8x128xbf16>
    %c0_153 = arith.constant 0 : index
    %c0_154 = arith.constant 0 : index
    %473 = vector.load %arg7[%c0_153, %c0_154] : memref<128x128xbf16, #tpu.memory_space<vmem>>, vector<128x128xbf16>
    %cst_155 = arith.constant dense<0.000000e+00> : vector<8x128xf32>
    %474 = tpu.matmul %472, %473, %cst_155 {dimension_numbers = #tpu.dot_dimension_numbers<[1], [0], [0], [1], [0, 0, 1, 1], [], []>} : vector<8x128xbf16>, vector<128x128xbf16>, vector<8x128xf32> -> vector<8x128xf32>
    %c0_156 = arith.constant 0 : index
    %c0_157 = arith.constant 0 : index
    %475 = vector.load %arg8[%c0_156, %c0_157] : memref<1x128xf32, #tpu.memory_space<vmem>>, vector<1x128xf32>
    %476 = vector.broadcast %475 : vector<1x128xf32> to vector<8x128xf32>
    %477 = arith.addf %474, %476 : vector<8x128xf32>
    %c0_158 = arith.constant 0 : index
    %c0_159 = arith.constant 0 : index
    %478 = vector.load %arg9[%c0_158, %c0_159] : memref<8x128xf32, #tpu.memory_space<vmem>>, vector<8x128xf32>
    tpu.vector_store %arg9[%c0_158, %c0_159], %477 {strides = array<i32>} : memref<8x128xf32, #tpu.memory_space<vmem>>, vector<8x128xf32>,
    return
  }
}

</mosaic_0001>

<llo_original>
// kernel: lstm_model_forward.1
$region0: #{lstm_model_forward.1}
  #allocation0 [shape = 'u32[]', space=smem, size = 0x4, offset = 0x4, fixed_abs, tag = 'smem constant byte address 0x4 - core index']
  #allocation1 [shape = 'u32[72,128]{1,0:T(1,128)}', space=vmem, size = 0x9000, scoped, tag = 'internal scratch']
  #allocation2 [shape = 'bf16[8,8,128]{2,1,0:T(8,128)(2,1)}', space=vmem, size = 0x4000, scoped, tag = 'scratch operand']
  #allocation3 [shape = 'bf16[8,8,512]{2,1,0:T(8,128)(2,1)}', space=vmem, size = 0x10000, scoped, tag = 'scratch operand']
  %s0 = inlined_call_operand.vmem [shape: bf16[8,8,128], index: 0, kind: input, shape index: {}]
  %s1 = inlined_call_operand.vmem [shape: bf16[128,512], index: 1, kind: input, shape index: {}]
  %s2 = inlined_call_operand.vmem [shape: bf16[128,512], index: 2, kind: input, shape index: {}]
  %s3 = inlined_call_operand.vmem [shape: f32[1,512], index: 3, kind: input, shape index: {}]
  %s4 = inlined_call_operand.vmem [shape: bf16[128,512], index: 4, kind: input, shape index: {}]
  %s5 = inlined_call_operand.vmem [shape: bf16[128,512], index: 5, kind: input, shape index: {}]
  %s6 = inlined_call_operand.vmem [shape: f32[1,512], index: 6, kind: input, shape index: {}]
  %s7 = inlined_call_operand.vmem [shape: bf16[128,128], index: 7, kind: input, shape index: {}]
  %s8 = inlined_call_operand.vmem [shape: f32[1,128], index: 8, kind: input, shape index: {}]
  %s9 = inlined_call_operand.vmem [shape: f32[8,128], index: 9, kind: output, shape index: {}]
  %s10 = sld [smem:[#allocation0]]
  $region46: #{lstm_model_forward.1} parent=0
    _
  %s12 = ssub.s32 1, %s10
  %s13 = scalar_select 0, %s12, %s10
  // Predicated region
  $region2: #{lstm_model_forward.1} parent=0 // pred_check
    _
  $region3: #{lstm_model_forward.1} parent=0 // pred_check_branch
    %15 = sbr.rel (0) target = $region5
  $region4: #{lstm_model_forward.1} parent=0 // pred_region
    _
  $region5: #{lstm_model_forward.1} parent=0 // pred_fallthru
    _
  // Predicated region
  $region6: #{lstm_model_forward.1} parent=0 // pred_check
    _
  $region7: #{lstm_model_forward.1} parent=0 // pred_check_branch
    %17 = sbr.rel (0) target = $region9
  $region8: #{lstm_model_forward.1} parent=0 // pred_region
    _
  $region9: #{lstm_model_forward.1} parent=0 // pred_fallthru
    _
  // Predicated region
  $region10: #{lstm_model_forward.1} parent=0 // pred_check
    _
  $region11: #{lstm_model_forward.1} parent=0 // pred_check_branch
    %19 = sbr.rel (0) target = $region13
  $region12: #{lstm_model_forward.1} parent=0 // pred_region
    _
  $region13: #{lstm_model_forward.1} parent=0 // pred_fallthru
    _
  // Predicated region
  $region14: #{lstm_model_forward.1} parent=0 // pred_check
    _
  $region15: #{lstm_model_forward.1} parent=0 // pred_check_branch
    %21 = sbr.rel (0) target = $region17
  $region16: #{lstm_model_forward.1} parent=0 // pred_region
    _
  $region17: #{lstm_model_forward.1} parent=0 // pred_fallthru
    _
  // Predicated region
  $region18: #{lstm_model_forward.1} parent=0 // pred_check
    _
  $region19: #{lstm_model_forward.1} parent=0 // pred_check_branch
    %23 = sbr.rel (0) target = $region21
  $region20: #{lstm_model_forward.1} parent=0 // pred_region
    _
  $region21: #{lstm_model_forward.1} parent=0 // pred_fallthru
    _
  // Predicated region
  $region22: #{lstm_model_forward.1} parent=0 // pred_check
    _
  $region23: #{lstm_model_forward.1} parent=0 // pred_check_branch
    %25 = sbr.rel (0) target = $region25
  $region24: #{lstm_model_forward.1} parent=0 // pred_region
    _
  $region25: #{lstm_model_forward.1} parent=0 // pred_fallthru
    _
  // Predicated region
  $region26: #{lstm_model_forward.1} parent=0 // pred_check
    _
  $region27: #{lstm_model_forward.1} parent=0 // pred_check_branch
    %27 = sbr.rel (0) target = $region29
  $region28: #{lstm_model_forward.1} parent=0 // pred_region
    _
  $region29: #{lstm_model_forward.1} parent=0 // pred_fallthru
    _
  // Predicated region
  $region30: #{lstm_model_forward.1} parent=0 // pred_check
    _
  $region31: #{lstm_model_forward.1} parent=0 // pred_check_branch
    %29 = sbr.rel (0) target = $region33
  $region32: #{lstm_model_forward.1} parent=0 // pred_region
    _
  $region33: #{lstm_model_forward.1} parent=0 // pred_fallthru
    _
  // Predicated region
  $region34: #{lstm_model_forward.1} parent=0 // pred_check
    _
  $region35: #{lstm_model_forward.1} parent=0 // pred_check_branch
    %31 = sbr.rel (0) target = $region37
  $region36: #{lstm_model_forward.1} parent=0 // pred_region
    _
  $region37: #{lstm_model_forward.1} parent=0 // pred_fallthru
    _
  %v33 = vld [vmem:[%s3] sm:$0xf]
  %v35 = vperm.slane %v33, 0
  %v36 = vperm.slane %v33, 1
  %v37 = vperm.slane %v33, 2
  %v38 = vperm.slane %v33, 3
  %v43 = vld [vmem:[%s0] sm:$0xf]
  %v44 = vld [vmem:[%s0 + $0x4] sm:$0xf]
  %v45 = vld [vmem:[%s0 + $0x8] sm:$0xf]
  %v46 = vld [vmem:[%s0 + $0xc] sm:$0xf]
  %v47 = vld [vmem:[%s0 + $0x10] sm:$0xf]
  %v48 = vld [vmem:[%s0 + $0x14] sm:$0xf]
  %v49 = vld [vmem:[%s0 + $0x18] sm:$0xf]
  %v50 = vld [vmem:[%s0 + $0x1c] sm:$0xf]
  %v51 = vld [vmem:[%s1] sm:$0xff]
  %v52 = vld [vmem:[%s1 + $0x8] sm:$0xff]
  %v53 = vld [vmem:[%s1 + $0x10] sm:$0xff]
  %v54 = vld [vmem:[%s1 + $0x18] sm:$0xff]
  %v55 = vld [vmem:[%s1 + $0x20] sm:$0xff]
  %v56 = vld [vmem:[%s1 + $0x28] sm:$0xff]
  %v57 = vld [vmem:[%s1 + $0x30] sm:$0xff]
  %v58 = vld [vmem:[%s1 + $0x38] sm:$0xff]
  %v59 = vld [vmem:[%s1 + $0x40] sm:$0xff]
  %v60 = vld [vmem:[%s1 + $0x48] sm:$0xff]
  %v61 = vld [vmem:[%s1 + $0x50] sm:$0xff]
  %v62 = vld [vmem:[%s1 + $0x58] sm:$0xff]
  %v63 = vld [vmem:[%s1 + $0x60] sm:$0xff]
  %v64 = vld [vmem:[%s1 + $0x68] sm:$0xff]
  %v65 = vld [vmem:[%s1 + $0x70] sm:$0xff]
  %v66 = vld [vmem:[%s1 + $0x78] sm:$0xff]
  %v67 = vld [vmem:[%s1 + $0x80] sm:$0xff]
  %v68 = vld [vmem:[%s1 + $0x88] sm:$0xff]
  %v69 = vld [vmem:[%s1 + $0x90] sm:$0xff]
  %v70 = vld [vmem:[%s1 + $0x98] sm:$0xff]
  %v71 = vld [vmem:[%s1 + $0xa0] sm:$0xff]
  %v72 = vld [vmem:[%s1 + $0xa8] sm:$0xff]
  %v73 = vld [vmem:[%s1 + $0xb0] sm:$0xff]
  %v74 = vld [vmem:[%s1 + $0xb8] sm:$0xff]
  %v75 = vld [vmem:[%s1 + $0xc0] sm:$0xff]
  %v76 = vld [vmem:[%s1 + $0xc8] sm:$0xff]
  %v77 = vld [vmem:[%s1 + $0xd0] sm:$0xff]
  %v78 = vld [vmem:[%s1 + $0xd8] sm:$0xff]
  %v79 = vld [vmem:[%s1 + $0xe0] sm:$0xff]
  %v80 = vld [vmem:[%s1 + $0xe8] sm:$0xff]
  %v81 = vld [vmem:[%s1 + $0xf0] sm:$0xff]
  %v82 = vld [vmem:[%s1 + $0xf8] sm:$0xff]
  %v91 = vunpack.c.l.b16 %v43
  %v92 = vunpack.c.l.b16 %v44
  %v93 = vunpack.c.l.b16 %v45
  %v94 = vunpack.c.l.b16 %v46
  %v95 = vunpack.c.l.b16 %v47
  %v96 = vunpack.c.l.b16 %v48
  %v97 = vunpack.c.l.b16 %v49
  %v98 = vunpack.c.l.b16 %v50
  %v99 = vpack.c.b16 %v92, %v91
  %v100 = vpack.c.b16 %v94, %v93
  %v101 = vpack.c.b16 %v96, %v95
  %v102 = vpack.c.b16 %v98, %v97
  %v139 = vunpack.c.l.b16 %v51
  %v140 = vunpack.c.h.b16 %v51
  %v141 = vunpack.c.l.b16 %v52
  %v142 = vunpack.c.h.b16 %v52
  %v143 = vunpack.c.l.b16 %v53
  %v144 = vunpack.c.h.b16 %v53
  %v145 = vunpack.c.l.b16 %v54
  %v146 = vunpack.c.h.b16 %v54
  %v147 = vunpack.c.l.b16 %v55
  %v148 = vunpack.c.h.b16 %v55
  %v149 = vunpack.c.l.b16 %v56
  %v150 = vunpack.c.h.b16 %v56
  %v151 = vunpack.c.l.b16 %v57
  %v152 = vunpack.c.h.b16 %v57
  %v153 = vunpack.c.l.b16 %v58
  %v154 = vunpack.c.h.b16 %v58
  %v155 = vunpack.c.l.b16 %v59
  %v156 = vunpack.c.h.b16 %v59
  %v157 = vunpack.c.l.b16 %v60
  %v158 = vunpack.c.h.b16 %v60
  %v159 = vunpack.c.l.b16 %v61
  %v160 = vunpack.c.h.b16 %v61
  %v161 = vunpack.c.l.b16 %v62
  %v162 = vunpack.c.h.b16 %v62
  %v163 = vunpack.c.l.b16 %v63
  %v164 = vunpack.c.h.b16 %v63
  %v165 = vunpack.c.l.b16 %v64
  %v166 = vunpack.c.h.b16 %v64
  %v167 = vunpack.c.l.b16 %v65
  %v168 = vunpack.c.h.b16 %v65
  %v169 = vunpack.c.l.b16 %v66
  %v170 = vunpack.c.h.b16 %v66
  %v171 = vunpack.c.l.b16 %v67
  %v172 = vunpack.c.h.b16 %v67
  %v173 = vunpack.c.l.b16 %v68
  %v174 = vunpack.c.h.b16 %v68
  %v175 = vunpack.c.l.b16 %v69
  %v176 = vunpack.c.h.b16 %v69
  %v177 = vunpack.c.l.b16 %v70
  %v178 = vunpack.c.h.b16 %v70
  %v179 = vunpack.c.l.b16 %v71
  %v180 = vunpack.c.h.b16 %v71
  %v181 = vunpack.c.l.b16 %v72
  %v182 = vunpack.c.h.b16 %v72
  %v183 = vunpack.c.l.b16 %v73
  %v184 = vunpack.c.h.b16 %v73
  %v185 = vunpack.c.l.b16 %v74
  %v186 = vunpack.c.h.b16 %v74
  %v187 = vunpack.c.l.b16 %v75
  %v188 = vunpack.c.h.b16 %v75
  %v189 = vunpack.c.l.b16 %v76
  %v190 = vunpack.c.h.b16 %v76
  %v191 = vunpack.c.l.b16 %v77
  %v192 = vunpack.c.h.b16 %v77
  %v193 = vunpack.c.l.b16 %v78
  %v194 = vunpack.c.h.b16 %v78
  %v195 = vunpack.c.l.b16 %v79
  %v196 = vunpack.c.h.b16 %v79
  %v197 = vunpack.c.l.b16 %v80
  %v198 = vunpack.c.h.b16 %v80
  %v199 = vunpack.c.l.b16 %v81
  %v200 = vunpack.c.h.b16 %v81
  %v201 = vunpack.c.l.b16 %v82
  %v202 = vunpack.c.h.b16 %v82
  %v203 = vpack.c.b16 %v143, %v139
  %v204 = vpack.c.b16 %v144, %v140
  %v205 = vpack.c.b16 %v145, %v141
  %v206 = vpack.c.b16 %v146, %v142
  %v207 = vpack.c.b16 %v151, %v147
  %v208 = vpack.c.b16 %v152, %v148
  %v209 = vpack.c.b16 %v153, %v149
  %v210 = vpack.c.b16 %v154, %v150
  %v211 = vpack.c.b16 %v159, %v155
  %v212 = vpack.c.b16 %v160, %v156
  %v213 = vpack.c.b16 %v161, %v157
  %v214 = vpack.c.b16 %v162, %v158
  %v215 = vpack.c.b16 %v167, %v163
  %v216 = vpack.c.b16 %v168, %v164
  %v217 = vpack.c.b16 %v169, %v165
  %v218 = vpack.c.b16 %v170, %v166
  %v219 = vpack.c.b16 %v175, %v171
  %v220 = vpack.c.b16 %v176, %v172
  %v221 = vpack.c.b16 %v177, %v173
  %v222 = vpack.c.b16 %v178, %v174
  %v223 = vpack.c.b16 %v183, %v179
  %v224 = vpack.c.b16 %v184, %v180
  %v225 = vpack.c.b16 %v185, %v181
  %v226 = vpack.c.b16 %v186, %v182
  %v227 = vpack.c.b16 %v191, %v187
  %v228 = vpack.c.b16 %v192, %v188
  %v229 = vpack.c.b16 %v193, %v189
  %v230 = vpack.c.b16 %v194, %v190
  %v231 = vpack.c.b16 %v199, %v195
  %v232 = vpack.c.b16 %v200, %v196
  %v233 = vpack.c.b16 %v201, %v197
  %v234 = vpack.c.b16 %v202, %v198
  %267 = vmatpush.bf16.msra.mxu0 %v231
  %268 = vmatpush.bf16.msra.mxu0 %v227
  %269 = vmatpush.bf16.msra.mxu0 %v223
  %270 = vmatpush.bf16.msra.mxu0 %v219
  %271 = vmatpush.bf16.msra.mxu0 %v215
  %272 = vmatpush.bf16.msra.mxu0 %v211
  %273 = vmatpush.bf16.msra.mxu0 %v207
  %274 = vmatpush.bf16.msra.mxu0 %v203
  %275 = vmatmul.bf16.gmra.mxu0 %v99
  %v276 = vpop.f32.mrf.mxu0
  %v277 = vadd.f32 0.0, %v276
  %v278 = vpop.f32.mrf.mxu0
  %v279 = vadd.f32 0.0, %v278
  %280 = vmatmul.bf16.gmra.mxu0 %v100
  %v281 = vpop.f32.mrf.mxu0
  %v282 = vadd.f32 0.0, %v281
  %v283 = vpop.f32.mrf.mxu0
  %v284 = vadd.f32 0.0, %v283
  %285 = vmatmul.bf16.gmra.mxu0 %v101
  %v286 = vpop.f32.mrf.mxu0
  %v287 = vadd.f32 0.0, %v286
  %v288 = vpop.f32.mrf.mxu0
  %v289 = vadd.f32 0.0, %v288
  %290 = vmatmul.bf16.gmra.mxu0 %v102
  %v291 = vpop.f32.mrf.mxu0
  %v292 = vadd.f32 0.0, %v291
  %v293 = vpop.f32.mrf.mxu0
  %v294 = vadd.f32 0.0, %v293
  %295 = vdwg.mxu0
  %296 = vmatpush.bf16.msra.mxu0 %v232
  %297 = vmatpush.bf16.msra.mxu0 %v228
  %298 = vmatpush.bf16.msra.mxu0 %v224
  %299 = vmatpush.bf16.msra.mxu0 %v220
  %300 = vmatpush.bf16.msra.mxu0 %v216
  %301 = vmatpush.bf16.msra.mxu0 %v212
  %302 = vmatpush.bf16.msra.mxu0 %v208
  %303 = vmatpush.bf16.msra.mxu0 %v204
  %304 = vmatmul.bf16.gmra.mxu0 %v99
  %v305 = vpop.f32.mrf.mxu0
  %v306 = vadd.f32 0.0, %v305
  %v307 = vpop.f32.mrf.mxu0
  %v308 = vadd.f32 0.0, %v307
  %309 = vmatmul.bf16.gmra.mxu0 %v100
  %v310 = vpop.f32.mrf.mxu0
  %v311 = vadd.f32 0.0, %v310
  %v312 = vpop.f32.mrf.mxu0
  %v313 = vadd.f32 0.0, %v312
  %314 = vmatmul.bf16.gmra.mxu0 %v101
  %v315 = vpop.f32.mrf.mxu0
  %v316 = vadd.f32 0.0, %v315
  %v317 = vpop.f32.mrf.mxu0
  %v318 = vadd.f32 0.0, %v317
  %319 = vmatmul.bf16.gmra.mxu0 %v102
  %v320 = vpop.f32.mrf.mxu0
  %v321 = vadd.f32 0.0, %v320
  %v322 = vpop.f32.mrf.mxu0
  %v323 = vadd.f32 0.0, %v322
  %324 = vdwg.mxu0
  %325 = vmatpush.bf16.msra.mxu0 %v233
  %326 = vmatpush.bf16.msra.mxu0 %v229
  %327 = vmatpush.bf16.msra.mxu0 %v225
  %328 = vmatpush.bf16.msra.mxu0 %v221
  %329 = vmatpush.bf16.msra.mxu0 %v217
  %330 = vmatpush.bf16.msra.mxu0 %v213
  %331 = vmatpush.bf16.msra.mxu0 %v209
  %332 = vmatpush.bf16.msra.mxu0 %v205
  %333 = vmatmul.bf16.gmra.mxu0 %v99
  %v334 = vpop.f32.mrf.mxu0
  %v335 = vadd.f32 0.0, %v334
  %v336 = vpop.f32.mrf.mxu0
  %v337 = vadd.f32 0.0, %v336
  %338 = vmatmul.bf16.gmra.mxu0 %v100
  %v339 = vpop.f32.mrf.mxu0
  %v340 = vadd.f32 0.0, %v339
  %v341 = vpop.f32.mrf.mxu0
  %v342 = vadd.f32 0.0, %v341
  %343 = vmatmul.bf16.gmra.mxu0 %v101
  %v344 = vpop.f32.mrf.mxu0
  %v345 = vadd.f32 0.0, %v344
  %v346 = vpop.f32.mrf.mxu0
  %v347 = vadd.f32 0.0, %v346
  %348 = vmatmul.bf16.gmra.mxu0 %v102
  %v349 = vpop.f32.mrf.mxu0
  %v350 = vadd.f32 0.0, %v349
  %v351 = vpop.f32.mrf.mxu0
  %v352 = vadd.f32 0.0, %v351
  %353 = vdwg.mxu0
  %354 = vmatpush.bf16.msra.mxu0 %v234
  %355 = vmatpush.bf16.msra.mxu0 %v230
  %356 = vmatpush.bf16.msra.mxu0 %v226
  %357 = vmatpush.bf16.msra.mxu0 %v222
  %358 = vmatpush.bf16.msra.mxu0 %v218
  %359 = vmatpush.bf16.msra.mxu0 %v214
  %360 = vmatpush.bf16.msra.mxu0 %v210
  %361 = vmatpush.bf16.msra.mxu0 %v206
  %362 = vmatmul.bf16.gmra.mxu0 %v99
  %v363 = vpop.f32.mrf.mxu0
  %v364 = vadd.f32 0.0, %v363
  %v365 = vpop.f32.mrf.mxu0
  %v366 = vadd.f32 0.0, %v365
  %367 = vmatmul.bf16.gmra.mxu0 %v100
  %v368 = vpop.f32.mrf.mxu0
  %v369 = vadd.f32 0.0, %v368
  %v370 = vpop.f32.mrf.mxu0
  %v371 = vadd.f32 0.0, %v370
  %372 = vmatmul.bf16.gmra.mxu0 %v101
  %v373 = vpop.f32.mrf.mxu0
  %v374 = vadd.f32 0.0, %v373
  %v375 = vpop.f32.mrf.mxu0
  %v376 = vadd.f32 0.0, %v375
  %377 = vmatmul.bf16.gmra.mxu0 %v102
  %v378 = vpop.f32.mrf.mxu0
  %v379 = vadd.f32 0.0, %v378
  %v380 = vpop.f32.mrf.mxu0
  %v381 = vadd.f32 0.0, %v380
  %382 = vdwg.mxu0
  %v383 = vpack.c.bf16 %v306, %v277
  %v384 = vpack.c.bf16 %v364, %v335
  %v385 = vpack.c.bf16 %v308, %v279
  %v386 = vpack.c.bf16 %v366, %v337
  %v387 = vpack.c.bf16 %v311, %v282
  %v388 = vpack.c.bf16 %v369, %v340
  %v389 = vpack.c.bf16 %v313, %v284
  %v390 = vpack.c.bf16 %v371, %v342
  %v391 = vpack.c.bf16 %v316, %v287
  %v392 = vpack.c.bf16 %v374, %v345
  %v393 = vpack.c.bf16 %v318, %v289
  %v394 = vpack.c.bf16 %v376, %v347
  %v395 = vpack.c.bf16 %v321, %v292
  %v396 = vpack.c.bf16 %v379, %v350
  %v397 = vpack.c.bf16 %v323, %v294
  %v398 = vpack.c.bf16 %v381, %v352
  %399 = vst [vmem:[#allocation3] sm:$0xff] %v383
  %400 = vst [vmem:[#allocation3 + $0x8] sm:$0xff] %v384
  %401 = vst [vmem:[#allocation3 + $0x10] sm:$0xff] %v385
  %402 = vst [vmem:[#allocation3 + $0x18] sm:$0xff] %v386
  %403 = vst [vmem:[#allocation3 + $0x20] sm:$0xff] %v387
  %404 = vst [vmem:[#allocation3 + $0x28] sm:$0xff] %v388
  %405 = vst [vmem:[#allocation3 + $0x30] sm:$0xff] %v389
  %406 = vst [vmem:[#allocation3 + $0x38] sm:$0xff] %v390
  %407 = vst [vmem:[#allocation3 + $0x40] sm:$0xff] %v391
  %408 = vst [vmem:[#allocation3 + $0x48] sm:$0xff] %v392
  %409 = vst [vmem:[#allocation3 + $0x50] sm:$0xff] %v393
  %410 = vst [vmem:[#allocation3 + $0x58] sm:$0xff] %v394
  %411 = vst [vmem:[#allocation3 + $0x60] sm:$0xff] %v395
  %412 = vst [vmem:[#allocation3 + $0x68] sm:$0xff] %v396
  %413 = vst [vmem:[#allocation3 + $0x70] sm:$0xff] %v397
  %414 = vst [vmem:[#allocation3 + $0x78] sm:$0xff] %v398
  %v415 = vld [vmem:[#allocation3] sm:$0xff]
  %v416 = vld [vmem:[#allocation3 + $0x8] sm:$0xff]
  %v417 = vunpack.c.l.bf16 %v415
  %v418 = vunpack.c.h.bf16 %v415
  %v419 = vunpack.c.l.bf16 %v416
  %v420 = vunpack.c.h.bf16 %v416
  %v421 = vld [vmem:[%s2] sm:$0xff]
  %v422 = vld [vmem:[%s2 + $0x8] sm:$0xff]
  %v423 = vld [vmem:[%s2 + $0x10] sm:$0xff]
  %v424 = vld [vmem:[%s2 + $0x18] sm:$0xff]
  %v425 = vld [vmem:[%s2 + $0x20] sm:$0xff]
  %v426 = vld [vmem:[%s2 + $0x28] sm:$0xff]
  %v427 = vld [vmem:[%s2 + $0x30] sm:$0xff]
  %v428 = vld [vmem:[%s2 + $0x38] sm:$0xff]
  %v429 = vld [vmem:[%s2 + $0x40] sm:$0xff]
  %v430 = vld [vmem:[%s2 + $0x48] sm:$0xff]
  %v431 = vld [vmem:[%s2 + $0x50] sm:$0xff]
  %v432 = vld [vmem:[%s2 + $0x58] sm:$0xff]
  %v433 = vld [vmem:[%s2 + $0x60] sm:$0xff]
  %v434 = vld [vmem:[%s2 + $0x68] sm:$0xff]
  %v435 = vld [vmem:[%s2 + $0x70] sm:$0xff]
  %v436 = vld [vmem:[%s2 + $0x78] sm:$0xff]
  %v437 = vld [vmem:[%s2 + $0x80] sm:$0xff]
  %v438 = vld [vmem:[%s2 + $0x88] sm:$0xff]
  %v439 = vld [vmem:[%s2 + $0x90] sm:$0xff]
  %v440 = vld [vmem:[%s2 + $0x98] sm:$0xff]
  %v441 = vld [vmem:[%s2 + $0xa0] sm:$0xff]
  %v442 = vld [vmem:[%s2 + $0xa8] sm:$0xff]
  %v443 = vld [vmem:[%s2 + $0xb0] sm:$0xff]
  %v444 = vld [vmem:[%s2 + $0xb8] sm:$0xff]
  %v445 = vld [vmem:[%s2 + $0xc0] sm:$0xff]
  %v446 = vld [vmem:[%s2 + $0xc8] sm:$0xff]
  %v447 = vld [vmem:[%s2 + $0xd0] sm:$0xff]
  %v448 = vld [vmem:[%s2 + $0xd8] sm:$0xff]
  %v449 = vld [vmem:[%s2 + $0xe0] sm:$0xff]
  %v450 = vld [vmem:[%s2 + $0xe8] sm:$0xff]
  %v451 = vld [vmem:[%s2 + $0xf0] sm:$0xff]
  %v452 = vld [vmem:[%s2 + $0xf8] sm:$0xff]
  %v485 = vunpack.c.l.b16 %v421
  %v486 = vunpack.c.h.b16 %v421
  %v487 = vunpack.c.l.b16 %v422
  %v488 = vunpack.c.h.b16 %v422
  %v489 = vunpack.c.l.b16 %v423
  %v490 = vunpack.c.h.b16 %v423
  %v491 = vunpack.c.l.b16 %v424
  %v492 = vunpack.c.h.b16 %v424
  %v493 = vunpack.c.l.b16 %v425
  %v494 = vunpack.c.h.b16 %v425
  %v495 = vunpack.c.l.b16 %v426
  %v496 = vunpack.c.h.b16 %v426
  %v497 = vunpack.c.l.b16 %v427
  %v498 = vunpack.c.h.b16 %v427
  %v499 = vunpack.c.l.b16 %v428
  %v500 = vunpack.c.h.b16 %v428
  %v501 = vunpack.c.l.b16 %v429
  %v502 = vunpack.c.h.b16 %v429
  %v503 = vunpack.c.l.b16 %v430
  %v504 = vunpack.c.h.b16 %v430
  %v505 = vunpack.c.l.b16 %v431
  %v506 = vunpack.c.h.b16 %v431
  %v507 = vunpack.c.l.b16 %v432
  %v508 = vunpack.c.h.b16 %v432
  %v509 = vunpack.c.l.b16 %v433
  %v510 = vunpack.c.h.b16 %v433
  %v511 = vunpack.c.l.b16 %v434
  %v512 = vunpack.c.h.b16 %v434
  %v513 = vunpack.c.l.b16 %v435
  %v514 = vunpack.c.h.b16 %v435
  %v515 = vunpack.c.l.b16 %v436
  %v516 = vunpack.c.h.b16 %v436
  %v517 = vunpack.c.l.b16 %v437
  %v518 = vunpack.c.h.b16 %v437
  %v519 = vunpack.c.l.b16 %v438
  %v520 = vunpack.c.h.b16 %v438
  %v521 = vunpack.c.l.b16 %v439
  %v522 = vunpack.c.h.b16 %v439
  %v523 = vunpack.c.l.b16 %v440
  %v524 = vunpack.c.h.b16 %v440
  %v525 = vunpack.c.l.b16 %v441
  %v526 = vunpack.c.h.b16 %v441
  %v527 = vunpack.c.l.b16 %v442
  %v528 = vunpack.c.h.b16 %v442
  %v529 = vunpack.c.l.b16 %v443
  %v530 = vunpack.c.h.b16 %v443
  %v531 = vunpack.c.l.b16 %v444
  %v532 = vunpack.c.h.b16 %v444
  %v533 = vunpack.c.l.b16 %v445
  %v534 = vunpack.c.h.b16 %v445
  %v535 = vunpack.c.l.b16 %v446
  %v536 = vunpack.c.h.b16 %v446
  %v537 = vunpack.c.l.b16 %v447
  %v538 = vunpack.c.h.b16 %v447
  %v539 = vunpack.c.l.b16 %v448
  %v540 = vunpack.c.h.b16 %v448
  %v541 = vunpack.c.l.b16 %v449
  %v542 = vunpack.c.h.b16 %v449
  %v543 = vunpack.c.l.b16 %v450
  %v544 = vunpack.c.h.b16 %v450
  %v545 = vunpack.c.l.b16 %v451
  %v546 = vunpack.c.h.b16 %v451
  %v547 = vunpack.c.l.b16 %v452
  %v548 = vunpack.c.h.b16 %v452
  %v549 = vpack.c.b16 %v489, %v485
  %v550 = vpack.c.b16 %v490, %v486
  %v551 = vpack.c.b16 %v491, %v487
  %v552 = vpack.c.b16 %v492, %v488
  %v553 = vpack.c.b16 %v497, %v493
  %v554 = vpack.c.b16 %v498, %v494
  %v555 = vpack.c.b16 %v499, %v495
  %v556 = vpack.c.b16 %v500, %v496
  %v557 = vpack.c.b16 %v505, %v501
  %v558 = vpack.c.b16 %v506, %v502
  %v559 = vpack.c.b16 %v507, %v503
  %v560 = vpack.c.b16 %v508, %v504
  %v561 = vpack.c.b16 %v513, %v509
  %v562 = vpack.c.b16 %v514, %v510
  %v563 = vpack.c.b16 %v515, %v511
  %v564 = vpack.c.b16 %v516, %v512
  %v565 = vpack.c.b16 %v521, %v517
  %v566 = vpack.c.b16 %v522, %v518
  %v567 = vpack.c.b16 %v523, %v519
  %v568 = vpack.c.b16 %v524, %v520
  %v569 = vpack.c.b16 %v529, %v525
  %v570 = vpack.c.b16 %v530, %v526
  %v571 = vpack.c.b16 %v531, %v527
  %v572 = vpack.c.b16 %v532, %v528
  %v573 = vpack.c.b16 %v537, %v533
  %v574 = vpack.c.b16 %v538, %v534
  %v575 = vpack.c.b16 %v539, %v535
  %v576 = vpack.c.b16 %v540, %v536
  %v577 = vpack.c.b16 %v545, %v541
  %v578 = vpack.c.b16 %v546, %v542
  %v579 = vpack.c.b16 %v547, %v543
  %v580 = vpack.c.b16 %v548, %v544
  %613 = vmatpush.bf16.msra.mxu0 %v577
  %614 = vmatpush.bf16.msra.mxu0 %v573
  %615 = vmatpush.bf16.msra.mxu0 %v569
  %616 = vmatpush.bf16.msra.mxu0 %v565
  %617 = vmatpush.bf16.msra.mxu0 %v561
  %618 = vmatpush.bf16.msra.mxu0 %v557
  %619 = vmatpush.bf16.msra.mxu0 %v553
  %620 = vmatpush.bf16.msra.mxu0 %v549
  %621 = vmatmul.bf16.gmra.mxu0 0
  %v622 = vpop.f32.mrf.mxu0
  %v623 = vadd.f32 0.0, %v622
  %v624 = vpop.f32.mrf.mxu0
  %625 = vdwg.mxu0
  %626 = vmatpush.bf16.msra.mxu0 %v578
  %627 = vmatpush.bf16.msra.mxu0 %v574
  %628 = vmatpush.bf16.msra.mxu0 %v570
  %629 = vmatpush.bf16.msra.mxu0 %v566
  %630 = vmatpush.bf16.msra.mxu0 %v562
  %631 = vmatpush.bf16.msra.mxu0 %v558
  %632 = vmatpush.bf16.msra.mxu0 %v554
  %633 = vmatpush.bf16.msra.mxu0 %v550
  %634 = vmatmul.bf16.gmra.mxu0 0
  %v635 = vpop.f32.mrf.mxu0
  %v636 = vadd.f32 0.0, %v635
  %v637 = vpop.f32.mrf.mxu0
  %638 = vdwg.mxu0
  %639 = vmatpush.bf16.msra.mxu0 %v579
  %640 = vmatpush.bf16.msra.mxu0 %v575
  %641 = vmatpush.bf16.msra.mxu0 %v571
  %642 = vmatpush.bf16.msra.mxu0 %v567
  %643 = vmatpush.bf16.msra.mxu0 %v563
  %644 = vmatpush.bf16.msra.mxu0 %v559
  %645 = vmatpush.bf16.msra.mxu0 %v555
  %646 = vmatpush.bf16.msra.mxu0 %v551
  %647 = vmatmul.bf16.gmra.mxu0 0
  %v648 = vpop.f32.mrf.mxu0
  %v649 = vadd.f32 0.0, %v648
  %v650 = vpop.f32.mrf.mxu0
  %651 = vdwg.mxu0
  %652 = vmatpush.bf16.msra.mxu0 %v580
  %653 = vmatpush.bf16.msra.mxu0 %v576
  %654 = vmatpush.bf16.msra.mxu0 %v572
  %655 = vmatpush.bf16.msra.mxu0 %v568
  %656 = vmatpush.bf16.msra.mxu0 %v564
  %657 = vmatpush.bf16.msra.mxu0 %v560
  %658 = vmatpush.bf16.msra.mxu0 %v556
  %659 = vmatpush.bf16.msra.mxu0 %v552
  %660 = vmatmul.bf16.gmra.mxu0 0
  %v661 = vpop.f32.mrf.mxu0
  %v662 = vadd.f32 0.0, %v661
  %v663 = vpop.f32.mrf.mxu0
  %664 = vdwg.mxu0
  %v665 = vadd.f32 %v417, %v623
  %v666 = vadd.f32 %v418, %v636
  %v667 = vadd.f32 %v419, %v649
  %v668 = vadd.f32 %v420, %v662
  %v669 = vadd.f32 %v665, %v35
  %v670 = vadd.f32 %v666, %v36
  %v671 = vadd.f32 %v667, %v37
  %v672 = vadd.f32 %v668, %v38
  %v673 = vxor.u32 %v669, 2147483648
  %v674 = vxor.u32 %v670, 2147483648
  %v675 = vxor.u32 %v671, 2147483648
  %v676 = vmul.f32 %v673, 1.442695
  %v677 = vpow.pop %v676
  %v678 = vmul.f32 %v674, 1.442695
  %v679 = vpow.pop %v678
  %v680 = vmul.f32 %v675, 1.442695
  %v681 = vpow.pop %v680
  %v682 = vadd.f32 %v677, 1.0
  %v683 = vadd.f32 %v679, 1.0
  %v684 = vadd.f32 %v681, 1.0
  %v685 = vrcp.pop %v682
  %v686 = vmul.f32 %v682, %v685
  %v687 = vsub.f32 1.0, %v686
  %v688 = vmul.f32 %v685, %v687
  %v689 = vadd.f32 %v685, %v688
  %vm690 = vweird.f32 %v682
  %vm691 = vweird.f32 %v685
  %vm692 = vmor %vm690, %vm691
  %v693 = vsel %vm692, %v685, %v689
  %v694 = vand.u32 2147483647, %v682
  %vm695 = vcmp.eq.f32.partialorder %v694, 8.507059e+37
  %v696 = vand.u32 %v682, 2147483648
  %v697 = vor.u32 1.1754944e-38, %v696
  %v698 = vsel %vm695, %v697, %v693
  %v699 = vmul.f32 1.0, %v698
  %v700 = vrcp.pop %v683
  %v701 = vmul.f32 %v683, %v700
  %v702 = vsub.f32 1.0, %v701
  %v703 = vmul.f32 %v700, %v702
  %v704 = vadd.f32 %v700, %v703
  %vm705 = vweird.f32 %v683
  %vm706 = vweird.f32 %v700
  %vm707 = vmor %vm705, %vm706
  %v708 = vsel %vm707, %v700, %v704
  %v709 = vand.u32 2147483647, %v683
  %vm710 = vcmp.eq.f32.partialorder %v709, 8.507059e+37
  %v711 = vand.u32 %v683, 2147483648
  %v712 = vor.u32 1.1754944e-38, %v711
  %v713 = vsel %vm710, %v712, %v708
  %v714 = vmul.f32 1.0, %v713
  %v715 = vrcp.pop %v684
  %v716 = vmul.f32 %v684, %v715
  %v717 = vsub.f32 1.0, %v716
  %v718 = vmul.f32 %v715, %v717
  %v719 = vadd.f32 %v715, %v718
  %vm720 = vweird.f32 %v684
  %vm721 = vweird.f32 %v715
  %vm722 = vmor %vm720, %vm721
  %v723 = vsel %vm722, %v715, %v719
  %v724 = vand.u32 2147483647, %v684
  %vm725 = vcmp.eq.f32.partialorder %v724, 8.507059e+37
  %v726 = vand.u32 %v684, 2147483648
  %v727 = vor.u32 1.1754944e-38, %v726
  %v728 = vsel %vm725, %v727, %v723
  %v729 = vmul.f32 1.0, %v728
  %v730 = vtanh.pop %v672
  %v731 = vmul.f32 %v714, 0.0
  %v732 = vmul.f32 %v699, %v730
  %v733 = vadd.f32 %v731, %v732
  %v734 = vtanh.pop %v733
  %v735 = vmul.f32 %v729, %v734
  %v736 = vpack.c.bf16 %v735, %v735
  %737 = vst [vmem:[#allocation2] sm:$0xf] %v736
  %s738 = scalar_lea.vmem [#allocation3], 16
  %v739 = vld [vmem:[%s738] sm:$0xff]
  %v740 = vld [vmem:[%s738 + $0x8] sm:$0xff]
  %v741 = vunpack.c.l.bf16 %v739
  %v742 = vunpack.c.h.bf16 %v739
  %v743 = vunpack.c.l.bf16 %v740
  %v744 = vunpack.c.h.bf16 %v740
  %v745 = vld [vmem:[%s2] sm:$0xff]
  %v746 = vld [vmem:[%s2 + $0x8] sm:$0xff]
  %v747 = vld [vmem:[%s2 + $0x10] sm:$0xff]
  %v748 = vld [vmem:[%s2 + $0x18] sm:$0xff]
  %v749 = vld [vmem:[%s2 + $0x20] sm:$0xff]
  %v750 = vld [vmem:[%s2 + $0x28] sm:$0xff]
  %v751 = vld [vmem:[%s2 + $0x30] sm:$0xff]
  %v752 = vld [vmem:[%s2 + $0x38] sm:$0xff]
  %v753 = vld [vmem:[%s2 + $0x40] sm:$0xff]
  %v754 = vld [vmem:[%s2 + $0x48] sm:$0xff]
  %v755 = vld [vmem:[%s2 + $0x50] sm:$0xff]
  %v756 = vld [vmem:[%s2 + $0x58] sm:$0xff]
  %v757 = vld [vmem:[%s2 + $0x60] sm:$0xff]
  %v758 = vld [vmem:[%s2 + $0x68] sm:$0xff]
  %v759 = vld [vmem:[%s2 + $0x70] sm:$0xff]
  %v760 = vld [vmem:[%s2 + $0x78] sm:$0xff]
  %v761 = vld [vmem:[%s2 + $0x80] sm:$0xff]
  %v762 = vld [vmem:[%s2 + $0x88] sm:$0xff]
  %v763 = vld [vmem:[%s2 + $0x90] sm:$0xff]
  %v764 = vld [vmem:[%s2 + $0x98] sm:$0xff]
  %v765 = vld [vmem:[%s2 + $0xa0] sm:$0xff]
  %v766 = vld [vmem:[%s2 + $0xa8] sm:$0xff]
  %v767 = vld [vmem:[%s2 + $0xb0] sm:$0xff]
  %v768 = vld [vmem:[%s2 + $0xb8] sm:$0xff]
  %v769 = vld [vmem:[%s2 + $0xc0] sm:$0xff]
  %v770 = vld [vmem:[%s2 + $0xc8] sm:$0xff]
  %v771 = vld [vmem:[%s2 + $0xd0] sm:$0xff]
  %v772 = vld [vmem:[%s2 + $0xd8] sm:$0xff]
  %v773 = vld [vmem:[%s2 + $0xe0] sm:$0xff]
  %v774 = vld [vmem:[%s2 + $0xe8] sm:$0xff]
  %v775 = vld [vmem:[%s2 + $0xf0] sm:$0xff]
  %v776 = vld [vmem:[%s2 + $0xf8] sm:$0xff]
  %v809 = vunpack.c.l.b16 %v745
  %v810 = vunpack.c.h.b16 %v745
  %v811 = vunpack.c.l.b16 %v746
  %v812 = vunpack.c.h.b16 %v746
  %v813 = vunpack.c.l.b16 %v747
  %v814 = vunpack.c.h.b16 %v747
  %v815 = vunpack.c.l.b16 %v748
  %v816 = vunpack.c.h.b16 %v748
  %v817 = vunpack.c.l.b16 %v749
  %v818 = vunpack.c.h.b16 %v749
  %v819 = vunpack.c.l.b16 %v750
  %v820 = vunpack.c.h.b16 %v750
  %v821 = vunpack.c.l.b16 %v751
  %v822 = vunpack.c.h.b16 %v751
  %v823 = vunpack.c.l.b16 %v752
  %v824 = vunpack.c.h.b16 %v752
  %v825 = vunpack.c.l.b16 %v753
  %v826 = vunpack.c.h.b16 %v753
  %v827 = vunpack.c.l.b16 %v754
  %v828 = vunpack.c.h.b16 %v754
  %v829 = vunpack.c.l.b16 %v755
  %v830 = vunpack.c.h.b16 %v755
  %v831 = vunpack.c.l.b16 %v756
  %v832 = vunpack.c.h.b16 %v756
  %v833 = vunpack.c.l.b16 %v757
  %v834 = vunpack.c.h.b16 %v757
  %v835 = vunpack.c.l.b16 %v758
  %v836 = vunpack.c.h.b16 %v758
  %v837 = vunpack.c.l.b16 %v759
  %v838 = vunpack.c.h.b16 %v759
  %v839 = vunpack.c.l.b16 %v760
  %v840 = vunpack.c.h.b16 %v760
  %v841 = vunpack.c.l.b16 %v761
  %v842 = vunpack.c.h.b16 %v761
  %v843 = vunpack.c.l.b16 %v762
  %v844 = vunpack.c.h.b16 %v762
  %v845 = vunpack.c.l.b16 %v763
  %v846 = vunpack.c.h.b16 %v763
  %v847 = vunpack.c.l.b16 %v764
  %v848 = vunpack.c.h.b16 %v764
  %v849 = vunpack.c.l.b16 %v765
  %v850 = vunpack.c.h.b16 %v765
  %v851 = vunpack.c.l.b16 %v766
  %v852 = vunpack.c.h.b16 %v766
  %v853 = vunpack.c.l.b16 %v767
  %v854 = vunpack.c.h.b16 %v767
  %v855 = vunpack.c.l.b16 %v768
  %v856 = vunpack.c.h.b16 %v768
  %v857 = vunpack.c.l.b16 %v769
  %v858 = vunpack.c.h.b16 %v769
  %v859 = vunpack.c.l.b16 %v770
  %v860 = vunpack.c.h.b16 %v770
  %v861 = vunpack.c.l.b16 %v771
  %v862 = vunpack.c.h.b16 %v771
  %v863 = vunpack.c.l.b16 %v772
  %v864 = vunpack.c.h.b16 %v772
  %v865 = vunpack.c.l.b16 %v773
  %v866 = vunpack.c.h.b16 %v773
  %v867 = vunpack.c.l.b16 %v774
  %v868 = vunpack.c.h.b16 %v774
  %v869 = vunpack.c.l.b16 %v775
  %v870 = vunpack.c.h.b16 %v775
  %v871 = vunpack.c.l.b16 %v776
  %v872 = vunpack.c.h.b16 %v776
  %v873 = vpack.c.b16 %v813, %v809
  %v874 = vpack.c.b16 %v814, %v810
  %v875 = vpack.c.b16 %v815, %v811
  %v876 = vpack.c.b16 %v816, %v812
  %v877 = vpack.c.b16 %v821, %v817
  %v878 = vpack.c.b16 %v822, %v818
  %v879 = vpack.c.b16 %v823, %v819
  %v880 = vpack.c.b16 %v824, %v820
  %v881 = vpack.c.b16 %v829, %v825
  %v882 = vpack.c.b16 %v830, %v826
  %v883 = vpack.c.b16 %v831, %v827
  %v884 = vpack.c.b16 %v832, %v828
  %v885 = vpack.c.b16 %v837, %v833
  %v886 = vpack.c.b16 %v838, %v834
  %v887 = vpack.c.b16 %v839, %v835
  %v888 = vpack.c.b16 %v840, %v836
  %v889 = vpack.c.b16 %v845, %v841
  %v890 = vpack.c.b16 %v846, %v842
  %v891 = vpack.c.b16 %v847, %v843
  %v892 = vpack.c.b16 %v848, %v844
  %v893 = vpack.c.b16 %v853, %v849
  %v894 = vpack.c.b16 %v854, %v850
  %v895 = vpack.c.b16 %v855, %v851
  %v896 = vpack.c.b16 %v856, %v852
  %v897 = vpack.c.b16 %v861, %v857
  %v898 = vpack.c.b16 %v862, %v858
  %v899 = vpack.c.b16 %v863, %v859
  %v900 = vpack.c.b16 %v864, %v860
  %v901 = vpack.c.b16 %v869, %v865
  %v902 = vpack.c.b16 %v870, %v866
  %v903 = vpack.c.b16 %v871, %v867
  %v904 = vpack.c.b16 %v872, %v868
  %937 = vmatpush.bf16.msra.mxu0 %v901
  %938 = vmatpush.bf16.msra.mxu0 %v897
  %939 = vmatpush.bf16.msra.mxu0 %v893
  %940 = vmatpush.bf16.msra.mxu0 %v889
  %941 = vmatpush.bf16.msra.mxu0 %v885
  %942 = vmatpush.bf16.msra.mxu0 %v881
  %943 = vmatpush.bf16.msra.mxu0 %v877
  %944 = vmatpush.bf16.msra.mxu0 %v873
  %945 = vmatmul.bf16.gmra.mxu0 %v736
  %v946 = vpop.f32.mrf.mxu0
  %v947 = vadd.f32 0.0, %v946
  %v948 = vpop.f32.mrf.mxu0
  %949 = vdwg.mxu0
  %950 = vmatpush.bf16.msra.mxu0 %v902
  %951 = vmatpush.bf16.msra.mxu0 %v898
  %952 = vmatpush.bf16.msra.mxu0 %v894
  %953 = vmatpush.bf16.msra.mxu0 %v890
  %954 = vmatpush.bf16.msra.mxu0 %v886
  %955 = vmatpush.bf16.msra.mxu0 %v882
  %956 = vmatpush.bf16.msra.mxu0 %v878
  %957 = vmatpush.bf16.msra.mxu0 %v874
  %958 = vmatmul.bf16.gmra.mxu0 %v736
  %v959 = vpop.f32.mrf.mxu0
  %v960 = vadd.f32 0.0, %v959
  %v961 = vpop.f32.mrf.mxu0
  %962 = vdwg.mxu0
  %963 = vmatpush.bf16.msra.mxu0 %v903
  %964 = vmatpush.bf16.msra.mxu0 %v899
  %965 = vmatpush.bf16.msra.mxu0 %v895
  %966 = vmatpush.bf16.msra.mxu0 %v891
  %967 = vmatpush.bf16.msra.mxu0 %v887
  %968 = vmatpush.bf16.msra.mxu0 %v883
  %969 = vmatpush.bf16.msra.mxu0 %v879
  %970 = vmatpush.bf16.msra.mxu0 %v875
  %971 = vmatmul.bf16.gmra.mxu0 %v736
  %v972 = vpop.f32.mrf.mxu0
  %v973 = vadd.f32 0.0, %v972
  %v974 = vpop.f32.mrf.mxu0
  %975 = vdwg.mxu0
  %976 = vmatpush.bf16.msra.mxu0 %v904
  %977 = vmatpush.bf16.msra.mxu0 %v900
  %978 = vmatpush.bf16.msra.mxu0 %v896
  %979 = vmatpush.bf16.msra.mxu0 %v892
  %980 = vmatpush.bf16.msra.mxu0 %v888
  %981 = vmatpush.bf16.msra.mxu0 %v884
  %982 = vmatpush.bf16.msra.mxu0 %v880
  %983 = vmatpush.bf16.msra.mxu0 %v876
  %984 = vmatmul.bf16.gmra.mxu0 %v736
  %v985 = vpop.f32.mrf.mxu0
  %v986 = vadd.f32 0.0, %v985
  %v987 = vpop.f32.mrf.mxu0
  %988 = vdwg.mxu0
  %v989 = vadd.f32 %v741, %v947
  %v990 = vadd.f32 %v742, %v960
  %v991 = vadd.f32 %v743, %v973
  %v992 = vadd.f32 %v744, %v986
  %v993 = vadd.f32 %v989, %v35
  %v994 = vadd.f32 %v990, %v36
  %v995 = vadd.f32 %v991, %v37
  %v996 = vadd.f32 %v992, %v38
  %v997 = vxor.u32 %v993, 2147483648
  %v998 = vxor.u32 %v994, 2147483648
  %v999 = vxor.u32 %v995, 2147483648
  %v1000 = vmul.f32 %v997, 1.442695
  %v1001 = vpow.pop %v1000
  %v1002 = vmul.f32 %v998, 1.442695
  %v1003 = vpow.pop %v1002
  %v1004 = vmul.f32 %v999, 1.442695
  %v1005 = vpow.pop %v1004
  %v1006 = vadd.f32 %v1001, 1.0
  %v1007 = vadd.f32 %v1003, 1.0
  %v1008 = vadd.f32 %v1005, 1.0
  %v1009 = vrcp.pop %v1006
  %v1010 = vmul.f32 %v1006, %v1009
  %v1011 = vsub.f32 1.0, %v1010
  %v1012 = vmul.f32 %v1009, %v1011
  %v1013 = vadd.f32 %v1009, %v1012
  %vm1014 = vweird.f32 %v1006
  %vm1015 = vweird.f32 %v1009
  %vm1016 = vmor %vm1014, %vm1015
  %v1017 = vsel %vm1016, %v1009, %v1013
  %v1018 = vand.u32 2147483647, %v1006
  %vm1019 = vcmp.eq.f32.partialorder %v1018, 8.507059e+37
  %v1020 = vand.u32 %v1006, 2147483648
  %v1021 = vor.u32 1.1754944e-38, %v1020
  %v1022 = vsel %vm1019, %v1021, %v1017
  %v1023 = vmul.f32 1.0, %v1022
  %v1024 = vrcp.pop %v1007
  %v1025 = vmul.f32 %v1007, %v1024
  %v1026 = vsub.f32 1.0, %v1025
  %v1027 = vmul.f32 %v1024, %v1026
  %v1028 = vadd.f32 %v1024, %v1027
  %vm1029 = vweird.f32 %v1007
  %vm1030 = vweird.f32 %v1024
  %vm1031 = vmor %vm1029, %vm1030
  %v1032 = vsel %vm1031, %v1024, %v1028
  %v1033 = vand.u32 2147483647, %v1007
  %vm1034 = vcmp.eq.f32.partialorder %v1033, 8.507059e+37
  %v1035 = vand.u32 %v1007, 2147483648
  %v1036 = vor.u32 1.1754944e-38, %v1035
  %v1037 = vsel %vm1034, %v1036, %v1032
  %v1038 = vmul.f32 1.0, %v1037
  %v1039 = vrcp.pop %v1008
  %v1040 = vmul.f32 %v1008, %v1039
  %v1041 = vsub.f32 1.0, %v1040
  %v1042 = vmul.f32 %v1039, %v1041
  %v1043 = vadd.f32 %v1039, %v1042
  %vm1044 = vweird.f32 %v1008
  %vm1045 = vweird.f32 %v1039
  %vm1046 = vmor %vm1044, %vm1045
  %v1047 = vsel %vm1046, %v1039, %v1043
  %v1048 = vand.u32 2147483647, %v1008
  %vm1049 = vcmp.eq.f32.partialorder %v1048, 8.507059e+37
  %v1050 = vand.u32 %v1008, 2147483648
  %v1051 = vor.u32 1.1754944e-38, %v1050
  %v1052 = vsel %vm1049, %v1051, %v1047
  %v1053 = vmul.f32 1.0, %v1052
  %v1054 = vtanh.pop %v996
  %v1055 = vmul.f32 %v1038, %v733
  %v1056 = vmul.f32 %v1023, %v1054
  %v1057 = vadd.f32 %v1055, %v1056
  %v1058 = vtanh.pop %v1057
  %v1059 = vmul.f32 %v1053, %v1058
  %v1060 = vpack.c.bf16 %v1059, %v1059
  %s1061 = scalar_lea.vmem [#allocation2], 4
  %1062 = vst [vmem:[%s1061] sm:$0xf] %v1060
  %s1063 = scalar_lea.vmem [#allocation3], 32
  %v1064 = vld [vmem:[%s1063] sm:$0xff]
  %v1065 = vld [vmem:[%s1063 + $0x8] sm:$0xff]
  %v1066 = vunpack.c.l.bf16 %v1064
  %v1067 = vunpack.c.h.bf16 %v1064
  %v1068 = vunpack.c.l.bf16 %v1065
  %v1069 = vunpack.c.h.bf16 %v1065
  %v1070 = vld [vmem:[%s2] sm:$0xff]
  %v1071 = vld [vmem:[%s2 + $0x8] sm:$0xff]
  %v1072 = vld [vmem:[%s2 + $0x10] sm:$0xff]
  %v1073 = vld [vmem:[%s2 + $0x18] sm:$0xff]
  %v1074 = vld [vmem:[%s2 + $0x20] sm:$0xff]
  %v1075 = vld [vmem:[%s2 + $0x28] sm:$0xff]
  %v1076 = vld [vmem:[%s2 + $0x30] sm:$0xff]
  %v1077 = vld [vmem:[%s2 + $0x38] sm:$0xff]
  %v1078 = vld [vmem:[%s2 + $0x40] sm:$0xff]
  %v1079 = vld [vmem:[%s2 + $0x48] sm:$0xff]
  %v1080 = vld [vmem:[%s2 + $0x50] sm:$0xff]
  %v1081 = vld [vmem:[%s2 + $0x58] sm:$0xff]
  %v1082 = vld [vmem:[%s2 + $0x60] sm:$0xff]
  %v1083 = vld [vmem:[%s2 + $0x68] sm:$0xff]
  %v1084 = vld [vmem:[%s2 + $0x70] sm:$0xff]
  %v1085 = vld [vmem:[%s2 + $0x78] sm:$0xff]
  %v1086 = vld [vmem:[%s2 + $0x80] sm:$0xff]
  %v1087 = vld [vmem:[%s2 + $0x88] sm:$0xff]
  %v1088 = vld [vmem:[%s2 + $0x90] sm:$0xff]
  %v1089 = vld [vmem:[%s2 + $0x98] sm:$0xff]
  %v1090 = vld [vmem:[%s2 + $0xa0] sm:$0xff]
  %v1091 = vld [vmem:[%s2 + $0xa8] sm:$0xff]
  %v1092 = vld [vmem:[%s2 + $0xb0] sm:$0xff]
  %v1093 = vld [vmem:[%s2 + $0xb8] sm:$0xff]
  %v1094 = vld [vmem:[%s2 + $0xc0] sm:$0xff]
  %v1095 = vld [vmem:[%s2 + $0xc8] sm:$0xff]
  %v1096 = vld [vmem:[%s2 + $0xd0] sm:$0xff]
  %v1097 = vld [vmem:[%s2 + $0xd8] sm:$0xff]
  %v1098 = vld [vmem:[%s2 + $0xe0] sm:$0xff]
  %v1099 = vld [vmem:[%s2 + $0xe8] sm:$0xff]
  %v1100 = vld [vmem:[%s2 + $0xf0] sm:$0xff]
  %v1101 = vld [vmem:[%s2 + $0xf8] sm:$0xff]
  %v1134 = vunpack.c.l.b16 %v1070
  %v1135 = vunpack.c.h.b16 %v1070
  %v1136 = vunpack.c.l.b16 %v1071
  %v1137 = vunpack.c.h.b16 %v1071
  %v1138 = vunpack.c.l.b16 %v1072
  %v1139 = vunpack.c.h.b16 %v1072
  %v1140 = vunpack.c.l.b16 %v1073
  %v1141 = vunpack.c.h.b16 %v1073
  %v1142 = vunpack.c.l.b16 %v1074
  %v1143 = vunpack.c.h.b16 %v1074
  %v1144 = vunpack.c.l.b16 %v1075
  %v1145 = vunpack.c.h.b16 %v1075
  %v1146 = vunpack.c.l.b16 %v1076
  %v1147 = vunpack.c.h.b16 %v1076
  %v1148 = vunpack.c.l.b16 %v1077
  %v1149 = vunpack.c.h.b16 %v1077
  %v1150 = vunpack.c.l.b16 %v1078
  %v1151 = vunpack.c.h.b16 %v1078
  %v1152 = vunpack.c.l.b16 %v1079
  %v1153 = vunpack.c.h.b16 %v1079
  %v1154 = vunpack.c.l.b16 %v1080
  %v1155 = vunpack.c.h.b16 %v1080
  %v1156 = vunpack.c.l.b16 %v1081
  %v1157 = vunpack.c.h.b16 %v1081
  %v1158 = vunpack.c.l.b16 %v1082
  %v1159 = vunpack.c.h.b16 %v1082
  %v1160 = vunpack.c.l.b16 %v1083
  %v1161 = vunpack.c.h.b16 %v1083
  %v1162 = vunpack.c.l.b16 %v1084
  %v1163 = vunpack.c.h.b16 %v1084
  %v1164 = vunpack.c.l.b16 %v1085
  %v1165 = vunpack.c.h.b16 %v1085
  %v1166 = vunpack.c.l.b16 %v1086
  %v1167 = vunpack.c.h.b16 %v1086
  %v1168 = vunpack.c.l.b16 %v1087
  %v1169 = vunpack.c.h.b16 %v1087
  %v1170 = vunpack.c.l.b16 %v1088
  %v1171 = vunpack.c.h.b16 %v1088
  %v1172 = vunpack.c.l.b16 %v1089
  %v1173 = vunpack.c.h.b16 %v1089
  %v1174 = vunpack.c.l.b16 %v1090
  %v1175 = vunpack.c.h.b16 %v1090
  %v1176 = vunpack.c.l.b16 %v1091
  %v1177 = vunpack.c.h.b16 %v1091
  %v1178 = vunpack.c.l.b16 %v1092
  %v1179 = vunpack.c.h.b16 %v1092
  %v1180 = vunpack.c.l.b16 %v1093
  %v1181 = vunpack.c.h.b16 %v1093
  %v1182 = vunpack.c.l.b16 %v1094
  %v1183 = vunpack.c.h.b16 %v1094
  %v1184 = vunpack.c.l.b16 %v1095
  %v1185 = vunpack.c.h.b16 %v1095
  %v1186 = vunpack.c.l.b16 %v1096
  %v1187 = vunpack.c.h.b16 %v1096
  %v1188 = vunpack.c.l.b16 %v1097
  %v1189 = vunpack.c.h.b16 %v1097
  %v1190 = vunpack.c.l.b16 %v1098
  %v1191 = vunpack.c.h.b16 %v1098
  %v1192 = vunpack.c.l.b16 %v1099
  %v1193 = vunpack.c.h.b16 %v1099
  %v1194 = vunpack.c.l.b16 %v1100
  %v1195 = vunpack.c.h.b16 %v1100
  %v1196 = vunpack.c.l.b16 %v1101
  %v1197 = vunpack.c.h.b16 %v1101
  %v1198 = vpack.c.b16 %v1138, %v1134
  %v1199 = vpack.c.b16 %v1139, %v1135
  %v1200 = vpack.c.b16 %v1140, %v1136
  %v1201 = vpack.c.b16 %v1141, %v1137
  %v1202 = vpack.c.b16 %v1146, %v1142
  %v1203 = vpack.c.b16 %v1147, %v1143
  %v1204 = vpack.c.b16 %v1148, %v1144
  %v1205 = vpack.c.b16 %v1149, %v1145
  %v1206 = vpack.c.b16 %v1154, %v1150
  %v1207 = vpack.c.b16 %v1155, %v1151
  %v1208 = vpack.c.b16 %v1156, %v1152
  %v1209 = vpack.c.b16 %v1157, %v1153
  %v1210 = vpack.c.b16 %v1162, %v1158
  %v1211 = vpack.c.b16 %v1163, %v1159
  %v1212 = vpack.c.b16 %v1164, %v1160
  %v1213 = vpack.c.b16 %v1165, %v1161
  %v1214 = vpack.c.b16 %v1170, %v1166
  %v1215 = vpack.c.b16 %v1171, %v1167
  %v1216 = vpack.c.b16 %v1172, %v1168
  %v1217 = vpack.c.b16 %v1173, %v1169
  %v1218 = vpack.c.b16 %v1178, %v1174
  %v1219 = vpack.c.b16 %v1179, %v1175
  %v1220 = vpack.c.b16 %v1180, %v1176
  %v1221 = vpack.c.b16 %v1181, %v1177
  %v1222 = vpack.c.b16 %v1186, %v1182
  %v1223 = vpack.c.b16 %v1187, %v1183
  %v1224 = vpack.c.b16 %v1188, %v1184
  %v1225 = vpack.c.b16 %v1189, %v1185
  %v1226 = vpack.c.b16 %v1194, %v1190
  %v1227 = vpack.c.b16 %v1195, %v1191
  %v1228 = vpack.c.b16 %v1196, %v1192
  %v1229 = vpack.c.b16 %v1197, %v1193
  %1262 = vmatpush.bf16.msra.mxu0 %v1226
  %1263 = vmatpush.bf16.msra.mxu0 %v1222
  %1264 = vmatpush.bf16.msra.mxu0 %v1218
  %1265 = vmatpush.bf16.msra.mxu0 %v1214
  %1266 = vmatpush.bf16.msra.mxu0 %v1210
  %1267 = vmatpush.bf16.msra.mxu0 %v1206
  %1268 = vmatpush.bf16.msra.mxu0 %v1202
  %1269 = vmatpush.bf16.msra.mxu0 %v1198
  %1270 = vmatmul.bf16.gmra.mxu0 %v1060
  %v1271 = vpop.f32.mrf.mxu0
  %v1272 = vadd.f32 0.0, %v1271
  %v1273 = vpop.f32.mrf.mxu0
  %1274 = vdwg.mxu0
  %1275 = vmatpush.bf16.msra.mxu0 %v1227
  %1276 = vmatpush.bf16.msra.mxu0 %v1223
  %1277 = vmatpush.bf16.msra.mxu0 %v1219
  %1278 = vmatpush.bf16.msra.mxu0 %v1215
  %1279 = vmatpush.bf16.msra.mxu0 %v1211
  %1280 = vmatpush.bf16.msra.mxu0 %v1207
  %1281 = vmatpush.bf16.msra.mxu0 %v1203
  %1282 = vmatpush.bf16.msra.mxu0 %v1199
  %1283 = vmatmul.bf16.gmra.mxu0 %v1060
  %v1284 = vpop.f32.mrf.mxu0
  %v1285 = vadd.f32 0.0, %v1284
  %v1286 = vpop.f32.mrf.mxu0
  %1287 = vdwg.mxu0
  %1288 = vmatpush.bf16.msra.mxu0 %v1228
  %1289 = vmatpush.bf16.msra.mxu0 %v1224
  %1290 = vmatpush.bf16.msra.mxu0 %v1220
  %1291 = vmatpush.bf16.msra.mxu0 %v1216
  %1292 = vmatpush.bf16.msra.mxu0 %v1212
  %1293 = vmatpush.bf16.msra.mxu0 %v1208
  %1294 = vmatpush.bf16.msra.mxu0 %v1204
  %1295 = vmatpush.bf16.msra.mxu0 %v1200
  %1296 = vmatmul.bf16.gmra.mxu0 %v1060
  %v1297 = vpop.f32.mrf.mxu0
  %v1298 = vadd.f32 0.0, %v1297
  %v1299 = vpop.f32.mrf.mxu0
  %1300 = vdwg.mxu0
  %1301 = vmatpush.bf16.msra.mxu0 %v1229
  %1302 = vmatpush.bf16.msra.mxu0 %v1225
  %1303 = vmatpush.bf16.msra.mxu0 %v1221
  %1304 = vmatpush.bf16.msra.mxu0 %v1217
  %1305 = vmatpush.bf16.msra.mxu0 %v1213
  %1306 = vmatpush.bf16.msra.mxu0 %v1209
  %1307 = vmatpush.bf16.msra.mxu0 %v1205
  %1308 = vmatpush.bf16.msra.mxu0 %v1201
  %1309 = vmatmul.bf16.gmra.mxu0 %v1060
  %v1310 = vpop.f32.mrf.mxu0
  %v1311 = vadd.f32 0.0, %v1310
  %v1312 = vpop.f32.mrf.mxu0
  %1313 = vdwg.mxu0
  %v1314 = vadd.f32 %v1066, %v1272
  %v1315 = vadd.f32 %v1067, %v1285
  %v1316 = vadd.f32 %v1068, %v1298
  %v1317 = vadd.f32 %v1069, %v1311
  %v1318 = vadd.f32 %v1314, %v35
  %v1319 = vadd.f32 %v1315, %v36
  %v1320 = vadd.f32 %v1316, %v37
  %v1321 = vadd.f32 %v1317, %v38
  %v1322 = vxor.u32 %v1318, 2147483648
  %v1323 = vxor.u32 %v1319, 2147483648
  %v1324 = vxor.u32 %v1320, 2147483648
  %v1325 = vmul.f32 %v1322, 1.442695
  %v1326 = vpow.pop %v1325
  %v1327 = vmul.f32 %v1323, 1.442695
  %v1328 = vpow.pop %v1327
  %v1329 = vmul.f32 %v1324, 1.442695
  %v1330 = vpow.pop %v1329
  %v1331 = vadd.f32 %v1326, 1.0
  %v1332 = vadd.f32 %v1328, 1.0
  %v1333 = vadd.f32 %v1330, 1.0
  %v1334 = vrcp.pop %v1331
  %v1335 = vmul.f32 %v1331, %v1334
  %v1336 = vsub.f32 1.0, %v1335
  %v1337 = vmul.f32 %v1334, %v1336
  %v1338 = vadd.f32 %v1334, %v1337
  %vm1339 = vweird.f32 %v1331
  %vm1340 = vweird.f32 %v1334
  %vm1341 = vmor %vm1339, %vm1340
  %v1342 = vsel %vm1341, %v1334, %v1338
  %v1343 = vand.u32 2147483647, %v1331
  %vm1344 = vcmp.eq.f32.partialorder %v1343, 8.507059e+37
  %v1345 = vand.u32 %v1331, 2147483648
  %v1346 = vor.u32 1.1754944e-38, %v1345
  %v1347 = vsel %vm1344, %v1346, %v1342
  %v1348 = vmul.f32 1.0, %v1347
  %v1349 = vrcp.pop %v1332
  %v1350 = vmul.f32 %v1332, %v1349
  %v1351 = vsub.f32 1.0, %v1350
  %v1352 = vmul.f32 %v1349, %v1351
  %v1353 = vadd.f32 %v1349, %v1352
  %vm1354 = vweird.f32 %v1332
  %vm1355 = vweird.f32 %v1349
  %vm1356 = vmor %vm1354, %vm1355
  %v1357 = vsel %vm1356, %v1349, %v1353
  %v1358 = vand.u32 2147483647, %v1332
  %vm1359 = vcmp.eq.f32.partialorder %v1358, 8.507059e+37
  %v1360 = vand.u32 %v1332, 2147483648
  %v1361 = vor.u32 1.1754944e-38, %v1360
  %v1362 = vsel %vm1359, %v1361, %v1357
  %v1363 = vmul.f32 1.0, %v1362
  %v1364 = vrcp.pop %v1333
  %v1365 = vmul.f32 %v1333, %v1364
  %v1366 = vsub.f32 1.0, %v1365
  %v1367 = vmul.f32 %v1364, %v1366
  %v1368 = vadd.f32 %v1364, %v1367
  %vm1369 = vweird.f32 %v1333
  %vm1370 = vweird.f32 %v1364
  %vm1371 = vmor %vm1369, %vm1370
  %v1372 = vsel %vm1371, %v1364, %v1368
  %v1373 = vand.u32 2147483647, %v1333
  %vm1374 = vcmp.eq.f32.partialorder %v1373, 8.507059e+37
  %v1375 = vand.u32 %v1333, 2147483648
  %v1376 = vor.u32 1.1754944e-38, %v1375
  %v1377 = vsel %vm1374, %v1376, %v1372
  %v1378 = vmul.f32 1.0, %v1377
  %v1379 = vtanh.pop %v1321
  %v1380 = vmul.f32 %v1363, %v1057
  %v1381 = vmul.f32 %v1348, %v1379
  %v1382 = vadd.f32 %v1380, %v1381
  %v1383 = vtanh.pop %v1382
  %v1384 = vmul.f32 %v1378, %v1383
  %v1385 = vpack.c.bf16 %v1384, %v1384
  %s1386 = scalar_lea.vmem [#allocation2], 8
  %1387 = vst [vmem:[%s1386] sm:$0xf] %v1385
  %s1388 = scalar_lea.vmem [#allocation3], 48
  %v1389 = vld [vmem:[%s1388] sm:$0xff]
  %v1390 = vld [vmem:[%s1388 + $0x8] sm:$0xff]
  %v1391 = vunpack.c.l.bf16 %v1389
  %v1392 = vunpack.c.h.bf16 %v1389
  %v1393 = vunpack.c.l.bf16 %v1390
  %v1394 = vunpack.c.h.bf16 %v1390
  %v1395 = vld [vmem:[%s2] sm:$0xff]
  %v1396 = vld [vmem:[%s2 + $0x8] sm:$0xff]
  %v1397 = vld [vmem:[%s2 + $0x10] sm:$0xff]
  %v1398 = vld [vmem:[%s2 + $0x18] sm:$0xff]
  %v1399 = vld [vmem:[%s2 + $0x20] sm:$0xff]
  %v1400 = vld [vmem:[%s2 + $0x28] sm:$0xff]
  %v1401 = vld [vmem:[%s2 + $0x30] sm:$0xff]
  %v1402 = vld [vmem:[%s2 + $0x38] sm:$0xff]
  %v1403 = vld [vmem:[%s2 + $0x40] sm:$0xff]
  %v1404 = vld [vmem:[%s2 + $0x48] sm:$0xff]
  %v1405 = vld [vmem:[%s2 + $0x50] sm:$0xff]
  %v1406 = vld [vmem:[%s2 + $0x58] sm:$0xff]
  %v1407 = vld [vmem:[%s2 + $0x60] sm:$0xff]
  %v1408 = vld [vmem:[%s2 + $0x68] sm:$0xff]
  %v1409 = vld [vmem:[%s2 + $0x70] sm:$0xff]
  %v1410 = vld [vmem:[%s2 + $0x78] sm:$0xff]
  %v1411 = vld [vmem:[%s2 + $0x80] sm:$0xff]
  %v1412 = vld [vmem:[%s2 + $0x88] sm:$0xff]
  %v1413 = vld [vmem:[%s2 + $0x90] sm:$0xff]
  %v1414 = vld [vmem:[%s2 + $0x98] sm:$0xff]
  %v1415 = vld [vmem:[%s2 + $0xa0] sm:$0xff]
  %v1416 = vld [vmem:[%s2 + $0xa8] sm:$0xff]
  %v1417 = vld [vmem:[%s2 + $0xb0] sm:$0xff]
  %v1418 = vld [vmem:[%s2 + $0xb8] sm:$0xff]
  %v1419 = vld [vmem:[%s2 + $0xc0] sm:$0xff]
  %v1420 = vld [vmem:[%s2 + $0xc8] sm:$0xff]
  %v1421 = vld [vmem:[%s2 + $0xd0] sm:$0xff]
  %v1422 = vld [vmem:[%s2 + $0xd8] sm:$0xff]
  %v1423 = vld [vmem:[%s2 + $0xe0] sm:$0xff]
  %v1424 = vld [vmem:[%s2 + $0xe8] sm:$0xff]
  %v1425 = vld [vmem:[%s2 + $0xf0] sm:$0xff]
  %v1426 = vld [vmem:[%s2 + $0xf8] sm:$0xff]
  %v1459 = vunpack.c.l.b16 %v1395
  %v1460 = vunpack.c.h.b16 %v1395
  %v1461 = vunpack.c.l.b16 %v1396
  %v1462 = vunpack.c.h.b16 %v1396
  %v1463 = vunpack.c.l.b16 %v1397
  %v1464 = vunpack.c.h.b16 %v1397
  %v1465 = vunpack.c.l.b16 %v1398
  %v1466 = vunpack.c.h.b16 %v1398
  %v1467 = vunpack.c.l.b16 %v1399
  %v1468 = vunpack.c.h.b16 %v1399
  %v1469 = vunpack.c.l.b16 %v1400
  %v1470 = vunpack.c.h.b16 %v1400
  %v1471 = vunpack.c.l.b16 %v1401
  %v1472 = vunpack.c.h.b16 %v1401
  %v1473 = vunpack.c.l.b16 %v1402
  %v1474 = vunpack.c.h.b16 %v1402
  %v1475 = vunpack.c.l.b16 %v1403
  %v1476 = vunpack.c.h.b16 %v1403
  %v1477 = vunpack.c.l.b16 %v1404
  %v1478 = vunpack.c.h.b16 %v1404
  %v1479 = vunpack.c.l.b16 %v1405
  %v1480 = vunpack.c.h.b16 %v1405
  %v1481 = vunpack.c.l.b16 %v1406
  %v1482 = vunpack.c.h.b16 %v1406
  %v1483 = vunpack.c.l.b16 %v1407
  %v1484 = vunpack.c.h.b16 %v1407
  %v1485 = vunpack.c.l.b16 %v1408
  %v1486 = vunpack.c.h.b16 %v1408
  %v1487 = vunpack.c.l.b16 %v1409
  %v1488 = vunpack.c.h.b16 %v1409
  %v1489 = vunpack.c.l.b16 %v1410
  %v1490 = vunpack.c.h.b16 %v1410
  %v1491 = vunpack.c.l.b16 %v1411
  %v1492 = vunpack.c.h.b16 %v1411
  %v1493 = vunpack.c.l.b16 %v1412
  %v1494 = vunpack.c.h.b16 %v1412
  %v1495 = vunpack.c.l.b16 %v1413
  %v1496 = vunpack.c.h.b16 %v1413
  %v1497 = vunpack.c.l.b16 %v1414
  %v1498 = vunpack.c.h.b16 %v1414
  %v1499 = vunpack.c.l.b16 %v1415
  %v1500 = vunpack.c.h.b16 %v1415
  %v1501 = vunpack.c.l.b16 %v1416
  %v1502 = vunpack.c.h.b16 %v1416
  %v1503 = vunpack.c.l.b16 %v1417
  %v1504 = vunpack.c.h.b16 %v1417
  %v1505 = vunpack.c.l.b16 %v1418
  %v1506 = vunpack.c.h.b16 %v1418
  %v1507 = vunpack.c.l.b16 %v1419
  %v1508 = vunpack.c.h.b16 %v1419
  %v1509 = vunpack.c.l.b16 %v1420
  %v1510 = vunpack.c.h.b16 %v1420
  %v1511 = vunpack.c.l.b16 %v1421
  %v1512 = vunpack.c.h.b16 %v1421
  %v1513 = vunpack.c.l.b16 %v1422
  %v1514 = vunpack.c.h.b16 %v1422
  %v1515 = vunpack.c.l.b16 %v1423
  %v1516 = vunpack.c.h.b16 %v1423
  %v1517 = vunpack.c.l.b16 %v1424
  %v1518 = vunpack.c.h.b16 %v1424
  %v1519 = vunpack.c.l.b16 %v1425
  %v1520 = vunpack.c.h.b16 %v1425
  %v1521 = vunpack.c.l.b16 %v1426
  %v1522 = vunpack.c.h.b16 %v1426
  %v1523 = vpack.c.b16 %v1463, %v1459
  %v1524 = vpack.c.b16 %v1464, %v1460
  %v1525 = vpack.c.b16 %v1465, %v1461
  %v1526 = vpack.c.b16 %v1466, %v1462
  %v1527 = vpack.c.b16 %v1471, %v1467
  %v1528 = vpack.c.b16 %v1472, %v1468
  %v1529 = vpack.c.b16 %v1473, %v1469
  %v1530 = vpack.c.b16 %v1474, %v1470
  %v1531 = vpack.c.b16 %v1479, %v1475
  %v1532 = vpack.c.b16 %v1480, %v1476
  %v1533 = vpack.c.b16 %v1481, %v1477
  %v1534 = vpack.c.b16 %v1482, %v1478
  %v1535 = vpack.c.b16 %v1487, %v1483
  %v1536 = vpack.c.b16 %v1488, %v1484
  %v1537 = vpack.c.b16 %v1489, %v1485
  %v1538 = vpack.c.b16 %v1490, %v1486
  %v1539 = vpack.c.b16 %v1495, %v1491
  %v1540 = vpack.c.b16 %v1496, %v1492
  %v1541 = vpack.c.b16 %v1497, %v1493
  %v1542 = vpack.c.b16 %v1498, %v1494
  %v1543 = vpack.c.b16 %v1503, %v1499
  %v1544 = vpack.c.b16 %v1504, %v1500
  %v1545 = vpack.c.b16 %v1505, %v1501
  %v1546 = vpack.c.b16 %v1506, %v1502
  %v1547 = vpack.c.b16 %v1511, %v1507
  %v1548 = vpack.c.b16 %v1512, %v1508
  %v1549 = vpack.c.b16 %v1513, %v1509
  %v1550 = vpack.c.b16 %v1514, %v1510
  %v1551 = vpack.c.b16 %v1519, %v1515
  %v1552 = vpack.c.b16 %v1520, %v1516
  %v1553 = vpack.c.b16 %v1521, %v1517
  %v1554 = vpack.c.b16 %v1522, %v1518
  %1587 = vmatpush.bf16.msra.mxu0 %v1551
  %1588 = vmatpush.bf16.msra.mxu0 %v1547
  %1589 = vmatpush.bf16.msra.mxu0 %v1543
  %1590 = vmatpush.bf16.msra.mxu0 %v1539
  %1591 = vmatpush.bf16.msra.mxu0 %v1535
  %1592 = vmatpush.bf16.msra.mxu0 %v1531
  %1593 = vmatpush.bf16.msra.mxu0 %v1527
  %1594 = vmatpush.bf16.msra.mxu0 %v1523
  %1595 = vmatmul.bf16.gmra.mxu0 %v1385
  %v1596 = vpop.f32.mrf.mxu0
  %v1597 = vadd.f32 0.0, %v1596
  %v1598 = vpop.f32.mrf.mxu0
  %1599 = vdwg.mxu0
  %1600 = vmatpush.bf16.msra.mxu0 %v1552
  %1601 = vmatpush.bf16.msra.mxu0 %v1548
  %1602 = vmatpush.bf16.msra.mxu0 %v1544
  %1603 = vmatpush.bf16.msra.mxu0 %v1540
  %1604 = vmatpush.bf16.msra.mxu0 %v1536
  %1605 = vmatpush.bf16.msra.mxu0 %v1532
  %1606 = vmatpush.bf16.msra.mxu0 %v1528
  %1607 = vmatpush.bf16.msra.mxu0 %v1524
  %1608 = vmatmul.bf16.gmra.mxu0 %v1385
  %v1609 = vpop.f32.mrf.mxu0
  %v1610 = vadd.f32 0.0, %v1609
  %v1611 = vpop.f32.mrf.mxu0
  %1612 = vdwg.mxu0
  %1613 = vmatpush.bf16.msra.mxu0 %v1553
  %1614 = vmatpush.bf16.msra.mxu0 %v1549
  %1615 = vmatpush.bf16.msra.mxu0 %v1545
  %1616 = vmatpush.bf16.msra.mxu0 %v1541
  %1617 = vmatpush.bf16.msra.mxu0 %v1537
  %1618 = vmatpush.bf16.msra.mxu0 %v1533
  %1619 = vmatpush.bf16.msra.mxu0 %v1529
  %1620 = vmatpush.bf16.msra.mxu0 %v1525
  %1621 = vmatmul.bf16.gmra.mxu0 %v1385
  %v1622 = vpop.f32.mrf.mxu0
  %v1623 = vadd.f32 0.0, %v1622
  %v1624 = vpop.f32.mrf.mxu0
  %1625 = vdwg.mxu0
  %1626 = vmatpush.bf16.msra.mxu0 %v1554
  %1627 = vmatpush.bf16.msra.mxu0 %v1550
  %1628 = vmatpush.bf16.msra.mxu0 %v1546
  %1629 = vmatpush.bf16.msra.mxu0 %v1542
  %1630 = vmatpush.bf16.msra.mxu0 %v1538
  %1631 = vmatpush.bf16.msra.mxu0 %v1534
  %1632 = vmatpush.bf16.msra.mxu0 %v1530
  %1633 = vmatpush.bf16.msra.mxu0 %v1526
  %1634 = vmatmul.bf16.gmra.mxu0 %v1385
  %v1635 = vpop.f32.mrf.mxu0
  %v1636 = vadd.f32 0.0, %v1635
  %v1637 = vpop.f32.mrf.mxu0
  %1638 = vdwg.mxu0
  %v1639 = vadd.f32 %v1391, %v1597
  %v1640 = vadd.f32 %v1392, %v1610
  %v1641 = vadd.f32 %v1393, %v1623
  %v1642 = vadd.f32 %v1394, %v1636
  %v1643 = vadd.f32 %v1639, %v35
  %v1644 = vadd.f32 %v1640, %v36
  %v1645 = vadd.f32 %v1641, %v37
  %v1646 = vadd.f32 %v1642, %v38
  %v1647 = vxor.u32 %v1643, 2147483648
  %v1648 = vxor.u32 %v1644, 2147483648
  %v1649 = vxor.u32 %v1645, 2147483648
  %v1650 = vmul.f32 %v1647, 1.442695
  %v1651 = vpow.pop %v1650
  %v1652 = vmul.f32 %v1648, 1.442695
  %v1653 = vpow.pop %v1652
  %v1654 = vmul.f32 %v1649, 1.442695
  %v1655 = vpow.pop %v1654
  %v1656 = vadd.f32 %v1651, 1.0
  %v1657 = vadd.f32 %v1653, 1.0
  %v1658 = vadd.f32 %v1655, 1.0
  %v1659 = vrcp.pop %v1656
  %v1660 = vmul.f32 %v1656, %v1659
  %v1661 = vsub.f32 1.0, %v1660
  %v1662 = vmul.f32 %v1659, %v1661
  %v1663 = vadd.f32 %v1659, %v1662
  %vm1664 = vweird.f32 %v1656
  %vm1665 = vweird.f32 %v1659
  %vm1666 = vmor %vm1664, %vm1665
  %v1667 = vsel %vm1666, %v1659, %v1663
  %v1668 = vand.u32 2147483647, %v1656
  %vm1669 = vcmp.eq.f32.partialorder %v1668, 8.507059e+37
  %v1670 = vand.u32 %v1656, 2147483648
  %v1671 = vor.u32 1.1754944e-38, %v1670
  %v1672 = vsel %vm1669, %v1671, %v1667
  %v1673 = vmul.f32 1.0, %v1672
  %v1674 = vrcp.pop %v1657
  %v1675 = vmul.f32 %v1657, %v1674
  %v1676 = vsub.f32 1.0, %v1675
  %v1677 = vmul.f32 %v1674, %v1676
  %v1678 = vadd.f32 %v1674, %v1677
  %vm1679 = vweird.f32 %v1657
  %vm1680 = vweird.f32 %v1674
  %vm1681 = vmor %vm1679, %vm1680
  %v1682 = vsel %vm1681, %v1674, %v1678
  %v1683 = vand.u32 2147483647, %v1657
  %vm1684 = vcmp.eq.f32.partialorder %v1683, 8.507059e+37
  %v1685 = vand.u32 %v1657, 2147483648
  %v1686 = vor.u32 1.1754944e-38, %v1685
  %v1687 = vsel %vm1684, %v1686, %v1682
  %v1688 = vmul.f32 1.0, %v1687
  %v1689 = vrcp.pop %v1658
  %v1690 = vmul.f32 %v1658, %v1689
  %v1691 = vsub.f32 1.0, %v1690
  %v1692 = vmul.f32 %v1689, %v1691
  %v1693 = vadd.f32 %v1689, %v1692
  %vm1694 = vweird.f32 %v1658
  %vm1695 = vweird.f32 %v1689
  %vm1696 = vmor %vm1694, %vm1695
  %v1697 = vsel %vm1696, %v1689, %v1693
  %v1698 = vand.u32 2147483647, %v1658
  %vm1699 = vcmp.eq.f32.partialorder %v1698, 8.507059e+37
  %v1700 = vand.u32 %v1658, 2147483648
  %v1701 = vor.u32 1.1754944e-38, %v1700
  %v1702 = vsel %vm1699, %v1701, %v1697
  %v1703 = vmul.f32 1.0, %v1702
  %v1704 = vtanh.pop %v1646
  %v1705 = vmul.f32 %v1688, %v1382
  %v1706 = vmul.f32 %v1673, %v1704
  %v1707 = vadd.f32 %v1705, %v1706
  %v1708 = vtanh.pop %v1707
  %v1709 = vmul.f32 %v1703, %v1708
  %v1710 = vpack.c.bf16 %v1709, %v1709
  %s1711 = scalar_lea.vmem [#allocation2], 12
  %1712 = vst [vmem:[%s1711] sm:$0xf] %v1710
  %s1713 = scalar_lea.vmem [#allocation3], 64
  %v1714 = vld [vmem:[%s1713] sm:$0xff]
  %v1715 = vld [vmem:[%s1713 + $0x8] sm:$0xff]
  %v1716 = vunpack.c.l.bf16 %v1714
  %v1717 = vunpack.c.h.bf16 %v1714
  %v1718 = vunpack.c.l.bf16 %v1715
  %v1719 = vunpack.c.h.bf16 %v1715
  %v1720 = vld [vmem:[%s2] sm:$0xff]
  %v1721 = vld [vmem:[%s2 + $0x8] sm:$0xff]
  %v1722 = vld [vmem:[%s2 + $0x10] sm:$0xff]
  %v1723 = vld [vmem:[%s2 + $0x18] sm:$0xff]
  %v1724 = vld [vmem:[%s2 + $0x20] sm:$0xff]
  %v1725 = vld [vmem:[%s2 + $0x28] sm:$0xff]
  %v1726 = vld [vmem:[%s2 + $0x30] sm:$0xff]
  %v1727 = vld [vmem:[%s2 + $0x38] sm:$0xff]
  %v1728 = vld [vmem:[%s2 + $0x40] sm:$0xff]
  %v1729 = vld [vmem:[%s2 + $0x48] sm:$0xff]
  %v1730 = vld [vmem:[%s2 + $0x50] sm:$0xff]
  %v1731 = vld [vmem:[%s2 + $0x58] sm:$0xff]
  %v1732 = vld [vmem:[%s2 + $0x60] sm:$0xff]
  %v1733 = vld [vmem:[%s2 + $0x68] sm:$0xff]
  %v1734 = vld [vmem:[%s2 + $0x70] sm:$0xff]
  %v1735 = vld [vmem:[%s2 + $0x78] sm:$0xff]
  %v1736 = vld [vmem:[%s2 + $0x80] sm:$0xff]
  %v1737 = vld [vmem:[%s2 + $0x88] sm:$0xff]
  %v1738 = vld [vmem:[%s2 + $0x90] sm:$0xff]
  %v1739 = vld [vmem:[%s2 + $0x98] sm:$0xff]
  %v1740 = vld [vmem:[%s2 + $0xa0] sm:$0xff]
  %v1741 = vld [vmem:[%s2 + $0xa8] sm:$0xff]
  %v1742 = vld [vmem:[%s2 + $0xb0] sm:$0xff]
  %v1743 = vld [vmem:[%s2 + $0xb8] sm:$0xff]
  %v1744 = vld [vmem:[%s2 + $0xc0] sm:$0xff]
  %v1745 = vld [vmem:[%s2 + $0xc8] sm:$0xff]
  %v1746 = vld [vmem:[%s2 + $0xd0] sm:$0xff]
  %v1747 = vld [vmem:[%s2 + $0xd8] sm:$0xff]
  %v1748 = vld [vmem:[%s2 + $0xe0] sm:$0xff]
  %v1749 = vld [vmem:[%s2 + $0xe8] sm:$0xff]
  %v1750 = vld [vmem:[%s2 + $0xf0] sm:$0xff]
  %v1751 = vld [vmem:[%s2 + $0xf8] sm:$0xff]
  %v1784 = vunpack.c.l.b16 %v1720
  %v1785 = vunpack.c.h.b16 %v1720
  %v1786 = vunpack.c.l.b16 %v1721
  %v1787 = vunpack.c.h.b16 %v1721
  %v1788 = vunpack.c.l.b16 %v1722
  %v1789 = vunpack.c.h.b16 %v1722
  %v1790 = vunpack.c.l.b16 %v1723
  %v1791 = vunpack.c.h.b16 %v1723
  %v1792 = vunpack.c.l.b16 %v1724
  %v1793 = vunpack.c.h.b16 %v1724
  %v1794 = vunpack.c.l.b16 %v1725
  %v1795 = vunpack.c.h.b16 %v1725
  %v1796 = vunpack.c.l.b16 %v1726
  %v1797 = vunpack.c.h.b16 %v1726
  %v1798 = vunpack.c.l.b16 %v1727
  %v1799 = vunpack.c.h.b16 %v1727
  %v1800 = vunpack.c.l.b16 %v1728
  %v1801 = vunpack.c.h.b16 %v1728
  %v1802 = vunpack.c.l.b16 %v1729
  %v1803 = vunpack.c.h.b16 %v1729
  %v1804 = vunpack.c.l.b16 %v1730
  %v1805 = vunpack.c.h.b16 %v1730
  %v1806 = vunpack.c.l.b16 %v1731
  %v1807 = vunpack.c.h.b16 %v1731
  %v1808 = vunpack.c.l.b16 %v1732
  %v1809 = vunpack.c.h.b16 %v1732
  %v1810 = vunpack.c.l.b16 %v1733
  %v1811 = vunpack.c.h.b16 %v1733
  %v1812 = vunpack.c.l.b16 %v1734
  %v1813 = vunpack.c.h.b16 %v1734
  %v1814 = vunpack.c.l.b16 %v1735
  %v1815 = vunpack.c.h.b16 %v1735
  %v1816 = vunpack.c.l.b16 %v1736
  %v1817 = vunpack.c.h.b16 %v1736
  %v1818 = vunpack.c.l.b16 %v1737
  %v1819 = vunpack.c.h.b16 %v1737
  %v1820 = vunpack.c.l.b16 %v1738
  %v1821 = vunpack.c.h.b16 %v1738
  %v1822 = vunpack.c.l.b16 %v1739
  %v1823 = vunpack.c.h.b16 %v1739
  %v1824 = vunpack.c.l.b16 %v1740
  %v1825 = vunpack.c.h.b16 %v1740
  %v1826 = vunpack.c.l.b16 %v1741
  %v1827 = vunpack.c.h.b16 %v1741
  %v1828 = vunpack.c.l.b16 %v1742
  %v1829 = vunpack.c.h.b16 %v1742
  %v1830 = vunpack.c.l.b16 %v1743
  %v1831 = vunpack.c.h.b16 %v1743
  %v1832 = vunpack.c.l.b16 %v1744
  %v1833 = vunpack.c.h.b16 %v1744
  %v1834 = vunpack.c.l.b16 %v1745
  %v1835 = vunpack.c.h.b16 %v1745
  %v1836 = vunpack.c.l.b16 %v1746
  %v1837 = vunpack.c.h.b16 %v1746
  %v1838 = vunpack.c.l.b16 %v1747
  %v1839 = vunpack.c.h.b16 %v1747
  %v1840 = vunpack.c.l.b16 %v1748
  %v1841 = vunpack.c.h.b16 %v1748
  %v1842 = vunpack.c.l.b16 %v1749
  %v1843 = vunpack.c.h.b16 %v1749
  %v1844 = vunpack.c.l.b16 %v1750
  %v1845 = vunpack.c.h.b16 %v1750
  %v1846 = vunpack.c.l.b16 %v1751
  %v1847 = vunpack.c.h.b16 %v1751
  %v1848 = vpack.c.b16 %v1788, %v1784
  %v1849 = vpack.c.b16 %v1789, %v1785
  %v1850 = vpack.c.b16 %v1790, %v1786
  %v1851 = vpack.c.b16 %v1791, %v1787
  %v1852 = vpack.c.b16 %v1796, %v1792
  %v1853 = vpack.c.b16 %v1797, %v1793
  %v1854 = vpack.c.b16 %v1798, %v1794
  %v1855 = vpack.c.b16 %v1799, %v1795
  %v1856 = vpack.c.b16 %v1804, %v1800
  %v1857 = vpack.c.b16 %v1805, %v1801
  %v1858 = vpack.c.b16 %v1806, %v1802
  %v1859 = vpack.c.b16 %v1807, %v1803
  %v1860 = vpack.c.b16 %v1812, %v1808
  %v1861 = vpack.c.b16 %v1813, %v1809
  %v1862 = vpack.c.b16 %v1814, %v1810
  %v1863 = vpack.c.b16 %v1815, %v1811
  %v1864 = vpack.c.b16 %v1820, %v1816
  %v1865 = vpack.c.b16 %v1821, %v1817
  %v1866 = vpack.c.b16 %v1822, %v1818
  %v1867 = vpack.c.b16 %v1823, %v1819
  %v1868 = vpack.c.b16 %v1828, %v1824
  %v1869 = vpack.c.b16 %v1829, %v1825
  %v1870 = vpack.c.b16 %v1830, %v1826
  %v1871 = vpack.c.b16 %v1831, %v1827
  %v1872 = vpack.c.b16 %v1836, %v1832
  %v1873 = vpack.c.b16 %v1837, %v1833
  %v1874 = vpack.c.b16 %v1838, %v1834
  %v1875 = vpack.c.b16 %v1839, %v1835
  %v1876 = vpack.c.b16 %v1844, %v1840
  %v1877 = vpack.c.b16 %v1845, %v1841
  %v1878 = vpack.c.b16 %v1846, %v1842
  %v1879 = vpack.c.b16 %v1847, %v1843
  %1912 = vmatpush.bf16.msra.mxu0 %v1876
  %1913 = vmatpush.bf16.msra.mxu0 %v1872
  %1914 = vmatpush.bf16.msra.mxu0 %v1868
  %1915 = vmatpush.bf16.msra.mxu0 %v1864
  %1916 = vmatpush.bf16.msra.mxu0 %v1860
  %1917 = vmatpush.bf16.msra.mxu0 %v1856
  %1918 = vmatpush.bf16.msra.mxu0 %v1852
  %1919 = vmatpush.bf16.msra.mxu0 %v1848
  %1920 = vmatmul.bf16.gmra.mxu0 %v1710
  %v1921 = vpop.f32.mrf.mxu0
  %v1922 = vadd.f32 0.0, %v1921
  %v1923 = vpop.f32.mrf.mxu0
  %1924 = vdwg.mxu0
  %1925 = vmatpush.bf16.msra.mxu0 %v1877
  %1926 = vmatpush.bf16.msra.mxu0 %v1873
  %1927 = vmatpush.bf16.msra.mxu0 %v1869
  %1928 = vmatpush.bf16.msra.mxu0 %v1865
  %1929 = vmatpush.bf16.msra.mxu0 %v1861
  %1930 = vmatpush.bf16.msra.mxu0 %v1857
  %1931 = vmatpush.bf16.msra.mxu0 %v1853
  %1932 = vmatpush.bf16.msra.mxu0 %v1849
  %1933 = vmatmul.bf16.gmra.mxu0 %v1710
  %v1934 = vpop.f32.mrf.mxu0
  %v1935 = vadd.f32 0.0, %v1934
  %v1936 = vpop.f32.mrf.mxu0
  %1937 = vdwg.mxu0
  %1938 = vmatpush.bf16.msra.mxu0 %v1878
  %1939 = vmatpush.bf16.msra.mxu0 %v1874
  %1940 = vmatpush.bf16.msra.mxu0 %v1870
  %1941 = vmatpush.bf16.msra.mxu0 %v1866
  %1942 = vmatpush.bf16.msra.mxu0 %v1862
  %1943 = vmatpush.bf16.msra.mxu0 %v1858
  %1944 = vmatpush.bf16.msra.mxu0 %v1854
  %1945 = vmatpush.bf16.msra.mxu0 %v1850
  %1946 = vmatmul.bf16.gmra.mxu0 %v1710
  %v1947 = vpop.f32.mrf.mxu0
  %v1948 = vadd.f32 0.0, %v1947
  %v1949 = vpop.f32.mrf.mxu0
  %1950 = vdwg.mxu0
  %1951 = vmatpush.bf16.msra.mxu0 %v1879
  %1952 = vmatpush.bf16.msra.mxu0 %v1875
  %1953 = vmatpush.bf16.msra.mxu0 %v1871
  %1954 = vmatpush.bf16.msra.mxu0 %v1867
  %1955 = vmatpush.bf16.msra.mxu0 %v1863
  %1956 = vmatpush.bf16.msra.mxu0 %v1859
  %1957 = vmatpush.bf16.msra.mxu0 %v1855
  %1958 = vmatpush.bf16.msra.mxu0 %v1851
  %1959 = vmatmul.bf16.gmra.mxu0 %v1710
  %v1960 = vpop.f32.mrf.mxu0
  %v1961 = vadd.f32 0.0, %v1960
  %v1962 = vpop.f32.mrf.mxu0
  %1963 = vdwg.mxu0
  %v1964 = vadd.f32 %v1716, %v1922
  %v1965 = vadd.f32 %v1717, %v1935
  %v1966 = vadd.f32 %v1718, %v1948
  %v1967 = vadd.f32 %v1719, %v1961
  %v1968 = vadd.f32 %v1964, %v35
  %v1969 = vadd.f32 %v1965, %v36
  %v1970 = vadd.f32 %v1966, %v37
  %v1971 = vadd.f32 %v1967, %v38
  %v1972 = vxor.u32 %v1968, 2147483648
  %v1973 = vxor.u32 %v1969, 2147483648
  %v1974 = vxor.u32 %v1970, 2147483648
  %v1975 = vmul.f32 %v1972, 1.442695
  %v1976 = vpow.pop %v1975
  %v1977 = vmul.f32 %v1973, 1.442695
  %v1978 = vpow.pop %v1977
  %v1979 = vmul.f32 %v1974, 1.442695
  %v1980 = vpow.pop %v1979
  %v1981 = vadd.f32 %v1976, 1.0
  %v1982 = vadd.f32 %v1978, 1.0
  %v1983 = vadd.f32 %v1980, 1.0
  %v1984 = vrcp.pop %v1981
  %v1985 = vmul.f32 %v1981, %v1984
  %v1986 = vsub.f32 1.0, %v1985
  %v1987 = vmul.f32 %v1984, %v1986
  %v1988 = vadd.f32 %v1984, %v1987
  %vm1989 = vweird.f32 %v1981
  %vm1990 = vweird.f32 %v1984
  %vm1991 = vmor %vm1989, %vm1990
  %v1992 = vsel %vm1991, %v1984, %v1988
  %v1993 = vand.u32 2147483647, %v1981
  %vm1994 = vcmp.eq.f32.partialorder %v1993, 8.507059e+37
  %v1995 = vand.u32 %v1981, 2147483648
  %v1996 = vor.u32 1.1754944e-38, %v1995
  %v1997 = vsel %vm1994, %v1996, %v1992
  %v1998 = vmul.f32 1.0, %v1997
  %v1999 = vrcp.pop %v1982
  %v2000 = vmul.f32 %v1982, %v1999
  %v2001 = vsub.f32 1.0, %v2000
  %v2002 = vmul.f32 %v1999, %v2001
  %v2003 = vadd.f32 %v1999, %v2002
  %vm2004 = vweird.f32 %v1982
  %vm2005 = vweird.f32 %v1999
  %vm2006 = vmor %vm2004, %vm2005
  %v2007 = vsel %vm2006, %v1999, %v2003
  %v2008 = vand.u32 2147483647, %v1982
  %vm2009 = vcmp.eq.f32.partialorder %v2008, 8.507059e+37
  %v2010 = vand.u32 %v1982, 2147483648
  %v2011 = vor.u32 1.1754944e-38, %v2010
  %v2012 = vsel %vm2009, %v2011, %v2007
  %v2013 = vmul.f32 1.0, %v2012
  %v2014 = vrcp.pop %v1983
  %v2015 = vmul.f32 %v1983, %v2014
  %v2016 = vsub.f32 1.0, %v2015
  %v2017 = vmul.f32 %v2014, %v2016
  %v2018 = vadd.f32 %v2014, %v2017
  %vm2019 = vweird.f32 %v1983
  %vm2020 = vweird.f32 %v2014
  %vm2021 = vmor %vm2019, %vm2020
  %v2022 = vsel %vm2021, %v2014, %v2018
  %v2023 = vand.u32 2147483647, %v1983
  %vm2024 = vcmp.eq.f32.partialorder %v2023, 8.507059e+37
  %v2025 = vand.u32 %v1983, 2147483648
  %v2026 = vor.u32 1.1754944e-38, %v2025
  %v2027 = vsel %vm2024, %v2026, %v2022
  %v2028 = vmul.f32 1.0, %v2027
  %v2029 = vtanh.pop %v1971
  %v2030 = vmul.f32 %v2013, %v1707
  %v2031 = vmul.f32 %v1998, %v2029
  %v2032 = vadd.f32 %v2030, %v2031
  %v2033 = vtanh.pop %v2032
  %v2034 = vmul.f32 %v2028, %v2033
  %v2035 = vpack.c.bf16 %v2034, %v2034
  %s2036 = scalar_lea.vmem [#allocation2], 16
  %2037 = vst [vmem:[%s2036] sm:$0xf] %v2035
  %s2038 = scalar_lea.vmem [#allocation3], 80
  %v2039 = vld [vmem:[%s2038] sm:$0xff]
  %v2040 = vld [vmem:[%s2038 + $0x8] sm:$0xff]
  %v2041 = vunpack.c.l.bf16 %v2039
  %v2042 = vunpack.c.h.bf16 %v2039
  %v2043 = vunpack.c.l.bf16 %v2040
  %v2044 = vunpack.c.h.bf16 %v2040
  %v2045 = vld [vmem:[%s2] sm:$0xff]
  %v2046 = vld [vmem:[%s2 + $0x8] sm:$0xff]
  %v2047 = vld [vmem:[%s2 + $0x10] sm:$0xff]
  %v2048 = vld [vmem:[%s2 + $0x18] sm:$0xff]
  %v2049 = vld [vmem:[%s2 + $0x20] sm:$0xff]
  %v2050 = vld [vmem:[%s2 + $0x28] sm:$0xff]
  %v2051 = vld [vmem:[%s2 + $0x30] sm:$0xff]
  %v2052 = vld [vmem:[%s2 + $0x38] sm:$0xff]
  %v2053 = vld [vmem:[%s2 + $0x40] sm:$0xff]
  %v2054 = vld [vmem:[%s2 + $0x48] sm:$0xff]
  %v2055 = vld [vmem:[%s2 + $0x50] sm:$0xff]
  %v2056 = vld [vmem:[%s2 + $0x58] sm:$0xff]
  %v2057 = vld [vmem:[%s2 + $0x60] sm:$0xff]
  %v2058 = vld [vmem:[%s2 + $0x68] sm:$0xff]
  %v2059 = vld [vmem:[%s2 + $0x70] sm:$0xff]
  %v2060 = vld [vmem:[%s2 + $0x78] sm:$0xff]
  %v2061 = vld [vmem:[%s2 + $0x80] sm:$0xff]
  %v2062 = vld [vmem:[%s2 + $0x88] sm:$0xff]
  %v2063 = vld [vmem:[%s2 + $0x90] sm:$0xff]
  %v2064 = vld [vmem:[%s2 + $0x98] sm:$0xff]
  %v2065 = vld [vmem:[%s2 + $0xa0] sm:$0xff]
  %v2066 = vld [vmem:[%s2 + $0xa8] sm:$0xff]
  %v2067 = vld [vmem:[%s2 + $0xb0] sm:$0xff]
  %v2068 = vld [vmem:[%s2 + $0xb8] sm:$0xff]
  %v2069 = vld [vmem:[%s2 + $0xc0] sm:$0xff]
  %v2070 = vld [vmem:[%s2 + $0xc8] sm:$0xff]
  %v2071 = vld [vmem:[%s2 + $0xd0] sm:$0xff]
  %v2072 = vld [vmem:[%s2 + $0xd8] sm:$0xff]
  %v2073 = vld [vmem:[%s2 + $0xe0] sm:$0xff]
  %v2074 = vld [vmem:[%s2 + $0xe8] sm:$0xff]
  %v2075 = vld [vmem:[%s2 + $0xf0] sm:$0xff]
  %v2076 = vld [vmem:[%s2 + $0xf8] sm:$0xff]
  %v2109 = vunpack.c.l.b16 %v2045
  %v2110 = vunpack.c.h.b16 %v2045
  %v2111 = vunpack.c.l.b16 %v2046
  %v2112 = vunpack.c.h.b16 %v2046
  %v2113 = vunpack.c.l.b16 %v2047
  %v2114 = vunpack.c.h.b16 %v2047
  %v2115 = vunpack.c.l.b16 %v2048
  %v2116 = vunpack.c.h.b16 %v2048
  %v2117 = vunpack.c.l.b16 %v2049
  %v2118 = vunpack.c.h.b16 %v2049
  %v2119 = vunpack.c.l.b16 %v2050
  %v2120 = vunpack.c.h.b16 %v2050
  %v2121 = vunpack.c.l.b16 %v2051
  %v2122 = vunpack.c.h.b16 %v2051
  %v2123 = vunpack.c.l.b16 %v2052
  %v2124 = vunpack.c.h.b16 %v2052
  %v2125 = vunpack.c.l.b16 %v2053
  %v2126 = vunpack.c.h.b16 %v2053
  %v2127 = vunpack.c.l.b16 %v2054
  %v2128 = vunpack.c.h.b16 %v2054
  %v2129 = vunpack.c.l.b16 %v2055
  %v2130 = vunpack.c.h.b16 %v2055
  %v2131 = vunpack.c.l.b16 %v2056
  %v2132 = vunpack.c.h.b16 %v2056
  %v2133 = vunpack.c.l.b16 %v2057
  %v2134 = vunpack.c.h.b16 %v2057
  %v2135 = vunpack.c.l.b16 %v2058
  %v2136 = vunpack.c.h.b16 %v2058
  %v2137 = vunpack.c.l.b16 %v2059
  %v2138 = vunpack.c.h.b16 %v2059
  %v2139 = vunpack.c.l.b16 %v2060
  %v2140 = vunpack.c.h.b16 %v2060
  %v2141 = vunpack.c.l.b16 %v2061
  %v2142 = vunpack.c.h.b16 %v2061
  %v2143 = vunpack.c.l.b16 %v2062
  %v2144 = vunpack.c.h.b16 %v2062
  %v2145 = vunpack.c.l.b16 %v2063
  %v2146 = vunpack.c.h.b16 %v2063
  %v2147 = vunpack.c.l.b16 %v2064
  %v2148 = vunpack.c.h.b16 %v2064
  %v2149 = vunpack.c.l.b16 %v2065
  %v2150 = vunpack.c.h.b16 %v2065
  %v2151 = vunpack.c.l.b16 %v2066
  %v2152 = vunpack.c.h.b16 %v2066
  %v2153 = vunpack.c.l.b16 %v2067
  %v2154 = vunpack.c.h.b16 %v2067
  %v2155 = vunpack.c.l.b16 %v2068
  %v2156 = vunpack.c.h.b16 %v2068
  %v2157 = vunpack.c.l.b16 %v2069
  %v2158 = vunpack.c.h.b16 %v2069
  %v2159 = vunpack.c.l.b16 %v2070
  %v2160 = vunpack.c.h.b16 %v2070
  %v2161 = vunpack.c.l.b16 %v2071
  %v2162 = vunpack.c.h.b16 %v2071
  %v2163 = vunpack.c.l.b16 %v2072
  %v2164 = vunpack.c.h.b16 %v2072
  %v2165 = vunpack.c.l.b16 %v2073
  %v2166 = vunpack.c.h.b16 %v2073
  %v2167 = vunpack.c.l.b16 %v2074
  %v2168 = vunpack.c.h.b16 %v2074
  %v2169 = vunpack.c.l.b16 %v2075
  %v2170 = vunpack.c.h.b16 %v2075
  %v2171 = vunpack.c.l.b16 %v2076
  %v2172 = vunpack.c.h.b16 %v2076
  %v2173 = vpack.c.b16 %v2113, %v2109
  %v2174 = vpack.c.b16 %v2114, %v2110
  %v2175 = vpack.c.b16 %v2115, %v2111
  %v2176 = vpack.c.b16 %v2116, %v2112
  %v2177 = vpack.c.b16 %v2121, %v2117
  %v2178 = vpack.c.b16 %v2122, %v2118
  %v2179 = vpack.c.b16 %v2123, %v2119
  %v2180 = vpack.c.b16 %v2124, %v2120
  %v2181 = vpack.c.b16 %v2129, %v2125
  %v2182 = vpack.c.b16 %v2130, %v2126
  %v2183 = vpack.c.b16 %v2131, %v2127
  %v2184 = vpack.c.b16 %v2132, %v2128
  %v2185 = vpack.c.b16 %v2137, %v2133
  %v2186 = vpack.c.b16 %v2138, %v2134
  %v2187 = vpack.c.b16 %v2139, %v2135
  %v2188 = vpack.c.b16 %v2140, %v2136
  %v2189 = vpack.c.b16 %v2145, %v2141
  %v2190 = vpack.c.b16 %v2146, %v2142
  %v2191 = vpack.c.b16 %v2147, %v2143
  %v2192 = vpack.c.b16 %v2148, %v2144
  %v2193 = vpack.c.b16 %v2153, %v2149
  %v2194 = vpack.c.b16 %v2154, %v2150
  %v2195 = vpack.c.b16 %v2155, %v2151
  %v2196 = vpack.c.b16 %v2156, %v2152
  %v2197 = vpack.c.b16 %v2161, %v2157
  %v2198 = vpack.c.b16 %v2162, %v2158
  %v2199 = vpack.c.b16 %v2163, %v2159
  %v2200 = vpack.c.b16 %v2164, %v2160
  %v2201 = vpack.c.b16 %v2169, %v2165
  %v2202 = vpack.c.b16 %v2170, %v2166
  %v2203 = vpack.c.b16 %v2171, %v2167
  %v2204 = vpack.c.b16 %v2172, %v2168
  %2237 = vmatpush.bf16.msra.mxu0 %v2201
  %2238 = vmatpush.bf16.msra.mxu0 %v2197
  %2239 = vmatpush.bf16.msra.mxu0 %v2193
  %2240 = vmatpush.bf16.msra.mxu0 %v2189
  %2241 = vmatpush.bf16.msra.mxu0 %v2185
  %2242 = vmatpush.bf16.msra.mxu0 %v2181
  %2243 = vmatpush.bf16.msra.mxu0 %v2177
  %2244 = vmatpush.bf16.msra.mxu0 %v2173
  %2245 = vmatmul.bf16.gmra.mxu0 %v2035
  %v2246 = vpop.f32.mrf.mxu0
  %v2247 = vadd.f32 0.0, %v2246
  %v2248 = vpop.f32.mrf.mxu0
  %2249 = vdwg.mxu0
  %2250 = vmatpush.bf16.msra.mxu0 %v2202
  %2251 = vmatpush.bf16.msra.mxu0 %v2198
  %2252 = vmatpush.bf16.msra.mxu0 %v2194
  %2253 = vmatpush.bf16.msra.mxu0 %v2190
  %2254 = vmatpush.bf16.msra.mxu0 %v2186
  %2255 = vmatpush.bf16.msra.mxu0 %v2182
  %2256 = vmatpush.bf16.msra.mxu0 %v2178
  %2257 = vmatpush.bf16.msra.mxu0 %v2174
  %2258 = vmatmul.bf16.gmra.mxu0 %v2035
  %v2259 = vpop.f32.mrf.mxu0
  %v2260 = vadd.f32 0.0, %v2259
  %v2261 = vpop.f32.mrf.mxu0
  %2262 = vdwg.mxu0
  %2263 = vmatpush.bf16.msra.mxu0 %v2203
  %2264 = vmatpush.bf16.msra.mxu0 %v2199
  %2265 = vmatpush.bf16.msra.mxu0 %v2195
  %2266 = vmatpush.bf16.msra.mxu0 %v2191
  %2267 = vmatpush.bf16.msra.mxu0 %v2187
  %2268 = vmatpush.bf16.msra.mxu0 %v2183
  %2269 = vmatpush.bf16.msra.mxu0 %v2179
  %2270 = vmatpush.bf16.msra.mxu0 %v2175
  %2271 = vmatmul.bf16.gmra.mxu0 %v2035
  %v2272 = vpop.f32.mrf.mxu0
  %v2273 = vadd.f32 0.0, %v2272
  %v2274 = vpop.f32.mrf.mxu0
  %2275 = vdwg.mxu0
  %2276 = vmatpush.bf16.msra.mxu0 %v2204
  %2277 = vmatpush.bf16.msra.mxu0 %v2200
  %2278 = vmatpush.bf16.msra.mxu0 %v2196
  %2279 = vmatpush.bf16.msra.mxu0 %v2192
  %2280 = vmatpush.bf16.msra.mxu0 %v2188
  %2281 = vmatpush.bf16.msra.mxu0 %v2184
  %2282 = vmatpush.bf16.msra.mxu0 %v2180
  %2283 = vmatpush.bf16.msra.mxu0 %v2176
  %2284 = vmatmul.bf16.gmra.mxu0 %v2035
  %v2285 = vpop.f32.mrf.mxu0
  %v2286 = vadd.f32 0.0, %v2285
  %v2287 = vpop.f32.mrf.mxu0
  %2288 = vdwg.mxu0
  %v2289 = vadd.f32 %v2041, %v2247
  %v2290 = vadd.f32 %v2042, %v2260
  %v2291 = vadd.f32 %v2043, %v2273
  %v2292 = vadd.f32 %v2044, %v2286
  %v2293 = vadd.f32 %v2289, %v35
  %v2294 = vadd.f32 %v2290, %v36
  %v2295 = vadd.f32 %v2291, %v37
  %v2296 = vadd.f32 %v2292, %v38
  %v2297 = vxor.u32 %v2293, 2147483648
  %v2298 = vxor.u32 %v2294, 2147483648
  %v2299 = vxor.u32 %v2295, 2147483648
  %v2300 = vmul.f32 %v2297, 1.442695
  %v2301 = vpow.pop %v2300
  %v2302 = vmul.f32 %v2298, 1.442695
  %v2303 = vpow.pop %v2302
  %v2304 = vmul.f32 %v2299, 1.442695
  %v2305 = vpow.pop %v2304
  %v2306 = vadd.f32 %v2301, 1.0
  %v2307 = vadd.f32 %v2303, 1.0
  %v2308 = vadd.f32 %v2305, 1.0
  %v2309 = vrcp.pop %v2306
  %v2310 = vmul.f32 %v2306, %v2309
  %v2311 = vsub.f32 1.0, %v2310
  %v2312 = vmul.f32 %v2309, %v2311
  %v2313 = vadd.f32 %v2309, %v2312
  %vm2314 = vweird.f32 %v2306
  %vm2315 = vweird.f32 %v2309
  %vm2316 = vmor %vm2314, %vm2315
  %v2317 = vsel %vm2316, %v2309, %v2313
  %v2318 = vand.u32 2147483647, %v2306
  %vm2319 = vcmp.eq.f32.partialorder %v2318, 8.507059e+37
  %v2320 = vand.u32 %v2306, 2147483648
  %v2321 = vor.u32 1.1754944e-38, %v2320
  %v2322 = vsel %vm2319, %v2321, %v2317
  %v2323 = vmul.f32 1.0, %v2322
  %v2324 = vrcp.pop %v2307
  %v2325 = vmul.f32 %v2307, %v2324
  %v2326 = vsub.f32 1.0, %v2325
  %v2327 = vmul.f32 %v2324, %v2326
  %v2328 = vadd.f32 %v2324, %v2327
  %vm2329 = vweird.f32 %v2307
  %vm2330 = vweird.f32 %v2324
  %vm2331 = vmor %vm2329, %vm2330
  %v2332 = vsel %vm2331, %v2324, %v2328
  %v2333 = vand.u32 2147483647, %v2307
  %vm2334 = vcmp.eq.f32.partialorder %v2333, 8.507059e+37
  %v2335 = vand.u32 %v2307, 2147483648
  %v2336 = vor.u32 1.1754944e-38, %v2335
  %v2337 = vsel %vm2334, %v2336, %v2332
  %v2338 = vmul.f32 1.0, %v2337
  %v2339 = vrcp.pop %v2308
  %v2340 = vmul.f32 %v2308, %v2339
  %v2341 = vsub.f32 1.0, %v2340
  %v2342 = vmul.f32 %v2339, %v2341
  %v2343 = vadd.f32 %v2339, %v2342
  %vm2344 = vweird.f32 %v2308
  %vm2345 = vweird.f32 %v2339
  %vm2346 = vmor %vm2344, %vm2345
  %v2347 = vsel %vm2346, %v2339, %v2343
  %v2348 = vand.u32 2147483647, %v2308
  %vm2349 = vcmp.eq.f32.partialorder %v2348, 8.507059e+37
  %v2350 = vand.u32 %v2308, 2147483648
  %v2351 = vor.u32 1.1754944e-38, %v2350
  %v2352 = vsel %vm2349, %v2351, %v2347
  %v2353 = vmul.f32 1.0, %v2352
  %v2354 = vtanh.pop %v2296
  %v2355 = vmul.f32 %v2338, %v2032
  %v2356 = vmul.f32 %v2323, %v2354
  %v2357 = vadd.f32 %v2355, %v2356
  %v2358 = vtanh.pop %v2357
  %v2359 = vmul.f32 %v2353, %v2358
  %v2360 = vpack.c.bf16 %v2359, %v2359
  %s2361 = scalar_lea.vmem [#allocation2], 20
  %2362 = vst [vmem:[%s2361] sm:$0xf] %v2360
  %s2363 = scalar_lea.vmem [#allocation3], 96
  %v2364 = vld [vmem:[%s2363] sm:$0xff]
  %v2365 = vld [vmem:[%s2363 + $0x8] sm:$0xff]
  %v2366 = vunpack.c.l.bf16 %v2364
  %v2367 = vunpack.c.h.bf16 %v2364
  %v2368 = vunpack.c.l.bf16 %v2365
  %v2369 = vunpack.c.h.bf16 %v2365
  %v2370 = vld [vmem:[%s2] sm:$0xff]
  %v2371 = vld [vmem:[%s2 + $0x8] sm:$0xff]
  %v2372 = vld [vmem:[%s2 + $0x10] sm:$0xff]
  %v2373 = vld [vmem:[%s2 + $0x18] sm:$0xff]
  %v2374 = vld [vmem:[%s2 + $0x20] sm:$0xff]
  %v2375 = vld [vmem:[%s2 + $0x28] sm:$0xff]
  %v2376 = vld [vmem:[%s2 + $0x30] sm:$0xff]
  %v2377 = vld [vmem:[%s2 + $0x38] sm:$0xff]
  %v2378 = vld [vmem:[%s2 + $0x40] sm:$0xff]
  %v2379 = vld [vmem:[%s2 + $0x48] sm:$0xff]
  %v2380 = vld [vmem:[%s2 + $0x50] sm:$0xff]
  %v2381 = vld [vmem:[%s2 + $0x58] sm:$0xff]
  %v2382 = vld [vmem:[%s2 + $0x60] sm:$0xff]
  %v2383 = vld [vmem:[%s2 + $0x68] sm:$0xff]
  %v2384 = vld [vmem:[%s2 + $0x70] sm:$0xff]
  %v2385 = vld [vmem:[%s2 + $0x78] sm:$0xff]
  %v2386 = vld [vmem:[%s2 + $0x80] sm:$0xff]
  %v2387 = vld [vmem:[%s2 + $0x88] sm:$0xff]
  %v2388 = vld [vmem:[%s2 + $0x90] sm:$0xff]
  %v2389 = vld [vmem:[%s2 + $0x98] sm:$0xff]
  %v2390 = vld [vmem:[%s2 + $0xa0] sm:$0xff]
  %v2391 = vld [vmem:[%s2 + $0xa8] sm:$0xff]
  %v2392 = vld [vmem:[%s2 + $0xb0] sm:$0xff]
  %v2393 = vld [vmem:[%s2 + $0xb8] sm:$0xff]
  %v2394 = vld [vmem:[%s2 + $0xc0] sm:$0xff]
  %v2395 = vld [vmem:[%s2 + $0xc8] sm:$0xff]
  %v2396 = vld [vmem:[%s2 + $0xd0] sm:$0xff]
  %v2397 = vld [vmem:[%s2 + $0xd8] sm:$0xff]
  %v2398 = vld [vmem:[%s2 + $0xe0] sm:$0xff]
  %v2399 = vld [vmem:[%s2 + $0xe8] sm:$0xff]
  %v2400 = vld [vmem:[%s2 + $0xf0] sm:$0xff]
  %v2401 = vld [vmem:[%s2 + $0xf8] sm:$0xff]
  %v2434 = vunpack.c.l.b16 %v2370
  %v2435 = vunpack.c.h.b16 %v2370
  %v2436 = vunpack.c.l.b16 %v2371
  %v2437 = vunpack.c.h.b16 %v2371
  %v2438 = vunpack.c.l.b16 %v2372
  %v2439 = vunpack.c.h.b16 %v2372
  %v2440 = vunpack.c.l.b16 %v2373
  %v2441 = vunpack.c.h.b16 %v2373
  %v2442 = vunpack.c.l.b16 %v2374
  %v2443 = vunpack.c.h.b16 %v2374
  %v2444 = vunpack.c.l.b16 %v2375
  %v2445 = vunpack.c.h.b16 %v2375
  %v2446 = vunpack.c.l.b16 %v2376
  %v2447 = vunpack.c.h.b16 %v2376
  %v2448 = vunpack.c.l.b16 %v2377
  %v2449 = vunpack.c.h.b16 %v2377
  %v2450 = vunpack.c.l.b16 %v2378
  %v2451 = vunpack.c.h.b16 %v2378
  %v2452 = vunpack.c.l.b16 %v2379
  %v2453 = vunpack.c.h.b16 %v2379
  %v2454 = vunpack.c.l.b16 %v2380
  %v2455 = vunpack.c.h.b16 %v2380
  %v2456 = vunpack.c.l.b16 %v2381
  %v2457 = vunpack.c.h.b16 %v2381
  %v2458 = vunpack.c.l.b16 %v2382
  %v2459 = vunpack.c.h.b16 %v2382
  %v2460 = vunpack.c.l.b16 %v2383
  %v2461 = vunpack.c.h.b16 %v2383
  %v2462 = vunpack.c.l.b16 %v2384
  %v2463 = vunpack.c.h.b16 %v2384
  %v2464 = vunpack.c.l.b16 %v2385
  %v2465 = vunpack.c.h.b16 %v2385
  %v2466 = vunpack.c.l.b16 %v2386
  %v2467 = vunpack.c.h.b16 %v2386
  %v2468 = vunpack.c.l.b16 %v2387
  %v2469 = vunpack.c.h.b16 %v2387
  %v2470 = vunpack.c.l.b16 %v2388
  %v2471 = vunpack.c.h.b16 %v2388
  %v2472 = vunpack.c.l.b16 %v2389
  %v2473 = vunpack.c.h.b16 %v2389
  %v2474 = vunpack.c.l.b16 %v2390
  %v2475 = vunpack.c.h.b16 %v2390
  %v2476 = vunpack.c.l.b16 %v2391
  %v2477 = vunpack.c.h.b16 %v2391
  %v2478 = vunpack.c.l.b16 %v2392
  %v2479 = vunpack.c.h.b16 %v2392
  %v2480 = vunpack.c.l.b16 %v2393
  %v2481 = vunpack.c.h.b16 %v2393
  %v2482 = vunpack.c.l.b16 %v2394
  %v2483 = vunpack.c.h.b16 %v2394
  %v2484 = vunpack.c.l.b16 %v2395
  %v2485 = vunpack.c.h.b16 %v2395
  %v2486 = vunpack.c.l.b16 %v2396
  %v2487 = vunpack.c.h.b16 %v2396
  %v2488 = vunpack.c.l.b16 %v2397
  %v2489 = vunpack.c.h.b16 %v2397
  %v2490 = vunpack.c.l.b16 %v2398
  %v2491 = vunpack.c.h.b16 %v2398
  %v2492 = vunpack.c.l.b16 %v2399
  %v2493 = vunpack.c.h.b16 %v2399
  %v2494 = vunpack.c.l.b16 %v2400
  %v2495 = vunpack.c.h.b16 %v2400
  %v2496 = vunpack.c.l.b16 %v2401
  %v2497 = vunpack.c.h.b16 %v2401
  %v2498 = vpack.c.b16 %v2438, %v2434
  %v2499 = vpack.c.b16 %v2439, %v2435
  %v2500 = vpack.c.b16 %v2440, %v2436
  %v2501 = vpack.c.b16 %v2441, %v2437
  %v2502 = vpack.c.b16 %v2446, %v2442
  %v2503 = vpack.c.b16 %v2447, %v2443
  %v2504 = vpack.c.b16 %v2448, %v2444
  %v2505 = vpack.c.b16 %v2449, %v2445
  %v2506 = vpack.c.b16 %v2454, %v2450
  %v2507 = vpack.c.b16 %v2455, %v2451
  %v2508 = vpack.c.b16 %v2456, %v2452
  %v2509 = vpack.c.b16 %v2457, %v2453
  %v2510 = vpack.c.b16 %v2462, %v2458
  %v2511 = vpack.c.b16 %v2463, %v2459
  %v2512 = vpack.c.b16 %v2464, %v2460
  %v2513 = vpack.c.b16 %v2465, %v2461
  %v2514 = vpack.c.b16 %v2470, %v2466
  %v2515 = vpack.c.b16 %v2471, %v2467
  %v2516 = vpack.c.b16 %v2472, %v2468
  %v2517 = vpack.c.b16 %v2473, %v2469
  %v2518 = vpack.c.b16 %v2478, %v2474
  %v2519 = vpack.c.b16 %v2479, %v2475
  %v2520 = vpack.c.b16 %v2480, %v2476
  %v2521 = vpack.c.b16 %v2481, %v2477
  %v2522 = vpack.c.b16 %v2486, %v2482
  %v2523 = vpack.c.b16 %v2487, %v2483
  %v2524 = vpack.c.b16 %v2488, %v2484
  %v2525 = vpack.c.b16 %v2489, %v2485
  %v2526 = vpack.c.b16 %v2494, %v2490
  %v2527 = vpack.c.b16 %v2495, %v2491
  %v2528 = vpack.c.b16 %v2496, %v2492
  %v2529 = vpack.c.b16 %v2497, %v2493
  %2562 = vmatpush.bf16.msra.mxu0 %v2526
  %2563 = vmatpush.bf16.msra.mxu0 %v2522
  %2564 = vmatpush.bf16.msra.mxu0 %v2518
  %2565 = vmatpush.bf16.msra.mxu0 %v2514
  %2566 = vmatpush.bf16.msra.mxu0 %v2510
  %2567 = vmatpush.bf16.msra.mxu0 %v2506
  %2568 = vmatpush.bf16.msra.mxu0 %v2502
  %2569 = vmatpush.bf16.msra.mxu0 %v2498
  %2570 = vmatmul.bf16.gmra.mxu0 %v2360
  %v2571 = vpop.f32.mrf.mxu0
  %v2572 = vadd.f32 0.0, %v2571
  %v2573 = vpop.f32.mrf.mxu0
  %2574 = vdwg.mxu0
  %2575 = vmatpush.bf16.msra.mxu0 %v2527
  %2576 = vmatpush.bf16.msra.mxu0 %v2523
  %2577 = vmatpush.bf16.msra.mxu0 %v2519
  %2578 = vmatpush.bf16.msra.mxu0 %v2515
  %2579 = vmatpush.bf16.msra.mxu0 %v2511
  %2580 = vmatpush.bf16.msra.mxu0 %v2507
  %2581 = vmatpush.bf16.msra.mxu0 %v2503
  %2582 = vmatpush.bf16.msra.mxu0 %v2499
  %2583 = vmatmul.bf16.gmra.mxu0 %v2360
  %v2584 = vpop.f32.mrf.mxu0
  %v2585 = vadd.f32 0.0, %v2584
  %v2586 = vpop.f32.mrf.mxu0
  %2587 = vdwg.mxu0
  %2588 = vmatpush.bf16.msra.mxu0 %v2528
  %2589 = vmatpush.bf16.msra.mxu0 %v2524
  %2590 = vmatpush.bf16.msra.mxu0 %v2520
  %2591 = vmatpush.bf16.msra.mxu0 %v2516
  %2592 = vmatpush.bf16.msra.mxu0 %v2512
  %2593 = vmatpush.bf16.msra.mxu0 %v2508
  %2594 = vmatpush.bf16.msra.mxu0 %v2504
  %2595 = vmatpush.bf16.msra.mxu0 %v2500
  %2596 = vmatmul.bf16.gmra.mxu0 %v2360
  %v2597 = vpop.f32.mrf.mxu0
  %v2598 = vadd.f32 0.0, %v2597
  %v2599 = vpop.f32.mrf.mxu0
  %2600 = vdwg.mxu0
  %2601 = vmatpush.bf16.msra.mxu0 %v2529
  %2602 = vmatpush.bf16.msra.mxu0 %v2525
  %2603 = vmatpush.bf16.msra.mxu0 %v2521
  %2604 = vmatpush.bf16.msra.mxu0 %v2517
  %2605 = vmatpush.bf16.msra.mxu0 %v2513
  %2606 = vmatpush.bf16.msra.mxu0 %v2509
  %2607 = vmatpush.bf16.msra.mxu0 %v2505
  %2608 = vmatpush.bf16.msra.mxu0 %v2501
  %2609 = vmatmul.bf16.gmra.mxu0 %v2360
  %v2610 = vpop.f32.mrf.mxu0
  %v2611 = vadd.f32 0.0, %v2610
  %v2612 = vpop.f32.mrf.mxu0
  %2613 = vdwg.mxu0
  %v2614 = vadd.f32 %v2366, %v2572
  %v2615 = vadd.f32 %v2367, %v2585
  %v2616 = vadd.f32 %v2368, %v2598
  %v2617 = vadd.f32 %v2369, %v2611
  %v2618 = vadd.f32 %v2614, %v35
  %v2619 = vadd.f32 %v2615, %v36
  %v2620 = vadd.f32 %v2616, %v37
  %v2621 = vadd.f32 %v2617, %v38
  %v2622 = vxor.u32 %v2618, 2147483648
  %v2623 = vxor.u32 %v2619, 2147483648
  %v2624 = vxor.u32 %v2620, 2147483648
  %v2625 = vmul.f32 %v2622, 1.442695
  %v2626 = vpow.pop %v2625
  %v2627 = vmul.f32 %v2623, 1.442695
  %v2628 = vpow.pop %v2627
  %v2629 = vmul.f32 %v2624, 1.442695
  %v2630 = vpow.pop %v2629
  %v2631 = vadd.f32 %v2626, 1.0
  %v2632 = vadd.f32 %v2628, 1.0
  %v2633 = vadd.f32 %v2630, 1.0
  %v2634 = vrcp.pop %v2631
  %v2635 = vmul.f32 %v2631, %v2634
  %v2636 = vsub.f32 1.0, %v2635
  %v2637 = vmul.f32 %v2634, %v2636
  %v2638 = vadd.f32 %v2634, %v2637
  %vm2639 = vweird.f32 %v2631
  %vm2640 = vweird.f32 %v2634
  %vm2641 = vmor %vm2639, %vm2640
  %v2642 = vsel %vm2641, %v2634, %v2638
  %v2643 = vand.u32 2147483647, %v2631
  %vm2644 = vcmp.eq.f32.partialorder %v2643, 8.507059e+37
  %v2645 = vand.u32 %v2631, 2147483648
  %v2646 = vor.u32 1.1754944e-38, %v2645
  %v2647 = vsel %vm2644, %v2646, %v2642
  %v2648 = vmul.f32 1.0, %v2647
  %v2649 = vrcp.pop %v2632
  %v2650 = vmul.f32 %v2632, %v2649
  %v2651 = vsub.f32 1.0, %v2650
  %v2652 = vmul.f32 %v2649, %v2651
  %v2653 = vadd.f32 %v2649, %v2652
  %vm2654 = vweird.f32 %v2632
  %vm2655 = vweird.f32 %v2649
  %vm2656 = vmor %vm2654, %vm2655
  %v2657 = vsel %vm2656, %v2649, %v2653
  %v2658 = vand.u32 2147483647, %v2632
  %vm2659 = vcmp.eq.f32.partialorder %v2658, 8.507059e+37
  %v2660 = vand.u32 %v2632, 2147483648
  %v2661 = vor.u32 1.1754944e-38, %v2660
  %v2662 = vsel %vm2659, %v2661, %v2657
  %v2663 = vmul.f32 1.0, %v2662
  %v2664 = vrcp.pop %v2633
  %v2665 = vmul.f32 %v2633, %v2664
  %v2666 = vsub.f32 1.0, %v2665
  %v2667 = vmul.f32 %v2664, %v2666
  %v2668 = vadd.f32 %v2664, %v2667
  %vm2669 = vweird.f32 %v2633
  %vm2670 = vweird.f32 %v2664
  %vm2671 = vmor %vm2669, %vm2670
  %v2672 = vsel %vm2671, %v2664, %v2668
  %v2673 = vand.u32 2147483647, %v2633
  %vm2674 = vcmp.eq.f32.partialorder %v2673, 8.507059e+37
  %v2675 = vand.u32 %v2633, 2147483648
  %v2676 = vor.u32 1.1754944e-38, %v2675
  %v2677 = vsel %vm2674, %v2676, %v2672
  %v2678 = vmul.f32 1.0, %v2677
  %v2679 = vtanh.pop %v2621
  %v2680 = vmul.f32 %v2663, %v2357
  %v2681 = vmul.f32 %v2648, %v2679
  %v2682 = vadd.f32 %v2680, %v2681
  %v2683 = vtanh.pop %v2682
  %v2684 = vmul.f32 %v2678, %v2683
  %v2685 = vpack.c.bf16 %v2684, %v2684
  %s2686 = scalar_lea.vmem [#allocation2], 24
  %2687 = vst [vmem:[%s2686] sm:$0xf] %v2685
  %s2688 = scalar_lea.vmem [#allocation3], 112
  %v2689 = vld [vmem:[%s2688] sm:$0xff]
  %v2690 = vld [vmem:[%s2688 + $0x8] sm:$0xff]
  %v2691 = vunpack.c.l.bf16 %v2689
  %v2692 = vunpack.c.h.bf16 %v2689
  %v2693 = vunpack.c.l.bf16 %v2690
  %v2694 = vunpack.c.h.bf16 %v2690
  %v2695 = vld [vmem:[%s2] sm:$0xff]
  %v2696 = vld [vmem:[%s2 + $0x8] sm:$0xff]
  %v2697 = vld [vmem:[%s2 + $0x10] sm:$0xff]
  %v2698 = vld [vmem:[%s2 + $0x18] sm:$0xff]
  %v2699 = vld [vmem:[%s2 + $0x20] sm:$0xff]
  %v2700 = vld [vmem:[%s2 + $0x28] sm:$0xff]
  %v2701 = vld [vmem:[%s2 + $0x30] sm:$0xff]
  %v2702 = vld [vmem:[%s2 + $0x38] sm:$0xff]
  %v2703 = vld [vmem:[%s2 + $0x40] sm:$0xff]
  %v2704 = vld [vmem:[%s2 + $0x48] sm:$0xff]
  %v2705 = vld [vmem:[%s2 + $0x50] sm:$0xff]
  %v2706 = vld [vmem:[%s2 + $0x58] sm:$0xff]
  %v2707 = vld [vmem:[%s2 + $0x60] sm:$0xff]
  %v2708 = vld [vmem:[%s2 + $0x68] sm:$0xff]
  %v2709 = vld [vmem:[%s2 + $0x70] sm:$0xff]
  %v2710 = vld [vmem:[%s2 + $0x78] sm:$0xff]
  %v2711 = vld [vmem:[%s2 + $0x80] sm:$0xff]
  %v2712 = vld [vmem:[%s2 + $0x88] sm:$0xff]
  %v2713 = vld [vmem:[%s2 + $0x90] sm:$0xff]
  %v2714 = vld [vmem:[%s2 + $0x98] sm:$0xff]
  %v2715 = vld [vmem:[%s2 + $0xa0] sm:$0xff]
  %v2716 = vld [vmem:[%s2 + $0xa8] sm:$0xff]
  %v2717 = vld [vmem:[%s2 + $0xb0] sm:$0xff]
  %v2718 = vld [vmem:[%s2 + $0xb8] sm:$0xff]
  %v2719 = vld [vmem:[%s2 + $0xc0] sm:$0xff]
  %v2720 = vld [vmem:[%s2 + $0xc8] sm:$0xff]
  %v2721 = vld [vmem:[%s2 + $0xd0] sm:$0xff]
  %v2722 = vld [vmem:[%s2 + $0xd8] sm:$0xff]
  %v2723 = vld [vmem:[%s2 + $0xe0] sm:$0xff]
  %v2724 = vld [vmem:[%s2 + $0xe8] sm:$0xff]
  %v2725 = vld [vmem:[%s2 + $0xf0] sm:$0xff]
  %v2726 = vld [vmem:[%s2 + $0xf8] sm:$0xff]
  %v2759 = vunpack.c.l.b16 %v2695
  %v2760 = vunpack.c.h.b16 %v2695
  %v2761 = vunpack.c.l.b16 %v2696
  %v2762 = vunpack.c.h.b16 %v2696
  %v2763 = vunpack.c.l.b16 %v2697
  %v2764 = vunpack.c.h.b16 %v2697
  %v2765 = vunpack.c.l.b16 %v2698
  %v2766 = vunpack.c.h.b16 %v2698
  %v2767 = vunpack.c.l.b16 %v2699
  %v2768 = vunpack.c.h.b16 %v2699
  %v2769 = vunpack.c.l.b16 %v2700
  %v2770 = vunpack.c.h.b16 %v2700
  %v2771 = vunpack.c.l.b16 %v2701
  %v2772 = vunpack.c.h.b16 %v2701
  %v2773 = vunpack.c.l.b16 %v2702
  %v2774 = vunpack.c.h.b16 %v2702
  %v2775 = vunpack.c.l.b16 %v2703
  %v2776 = vunpack.c.h.b16 %v2703
  %v2777 = vunpack.c.l.b16 %v2704
  %v2778 = vunpack.c.h.b16 %v2704
  %v2779 = vunpack.c.l.b16 %v2705
  %v2780 = vunpack.c.h.b16 %v2705
  %v2781 = vunpack.c.l.b16 %v2706
  %v2782 = vunpack.c.h.b16 %v2706
  %v2783 = vunpack.c.l.b16 %v2707
  %v2784 = vunpack.c.h.b16 %v2707
  %v2785 = vunpack.c.l.b16 %v2708
  %v2786 = vunpack.c.h.b16 %v2708
  %v2787 = vunpack.c.l.b16 %v2709
  %v2788 = vunpack.c.h.b16 %v2709
  %v2789 = vunpack.c.l.b16 %v2710
  %v2790 = vunpack.c.h.b16 %v2710
  %v2791 = vunpack.c.l.b16 %v2711
  %v2792 = vunpack.c.h.b16 %v2711
  %v2793 = vunpack.c.l.b16 %v2712
  %v2794 = vunpack.c.h.b16 %v2712
  %v2795 = vunpack.c.l.b16 %v2713
  %v2796 = vunpack.c.h.b16 %v2713
  %v2797 = vunpack.c.l.b16 %v2714
  %v2798 = vunpack.c.h.b16 %v2714
  %v2799 = vunpack.c.l.b16 %v2715
  %v2800 = vunpack.c.h.b16 %v2715
  %v2801 = vunpack.c.l.b16 %v2716
  %v2802 = vunpack.c.h.b16 %v2716
  %v2803 = vunpack.c.l.b16 %v2717
  %v2804 = vunpack.c.h.b16 %v2717
  %v2805 = vunpack.c.l.b16 %v2718
  %v2806 = vunpack.c.h.b16 %v2718
  %v2807 = vunpack.c.l.b16 %v2719
  %v2808 = vunpack.c.h.b16 %v2719
  %v2809 = vunpack.c.l.b16 %v2720
  %v2810 = vunpack.c.h.b16 %v2720
  %v2811 = vunpack.c.l.b16 %v2721
  %v2812 = vunpack.c.h.b16 %v2721
  %v2813 = vunpack.c.l.b16 %v2722
  %v2814 = vunpack.c.h.b16 %v2722
  %v2815 = vunpack.c.l.b16 %v2723
  %v2816 = vunpack.c.h.b16 %v2723
  %v2817 = vunpack.c.l.b16 %v2724
  %v2818 = vunpack.c.h.b16 %v2724
  %v2819 = vunpack.c.l.b16 %v2725
  %v2820 = vunpack.c.h.b16 %v2725
  %v2821 = vunpack.c.l.b16 %v2726
  %v2822 = vunpack.c.h.b16 %v2726
  %v2823 = vpack.c.b16 %v2763, %v2759
  %v2824 = vpack.c.b16 %v2764, %v2760
  %v2825 = vpack.c.b16 %v2765, %v2761
  %v2826 = vpack.c.b16 %v2766, %v2762
  %v2827 = vpack.c.b16 %v2771, %v2767
  %v2828 = vpack.c.b16 %v2772, %v2768
  %v2829 = vpack.c.b16 %v2773, %v2769
  %v2830 = vpack.c.b16 %v2774, %v2770
  %v2831 = vpack.c.b16 %v2779, %v2775
  %v2832 = vpack.c.b16 %v2780, %v2776
  %v2833 = vpack.c.b16 %v2781, %v2777
  %v2834 = vpack.c.b16 %v2782, %v2778
  %v2835 = vpack.c.b16 %v2787, %v2783
  %v2836 = vpack.c.b16 %v2788, %v2784
  %v2837 = vpack.c.b16 %v2789, %v2785
  %v2838 = vpack.c.b16 %v2790, %v2786
  %v2839 = vpack.c.b16 %v2795, %v2791
  %v2840 = vpack.c.b16 %v2796, %v2792
  %v2841 = vpack.c.b16 %v2797, %v2793
  %v2842 = vpack.c.b16 %v2798, %v2794
  %v2843 = vpack.c.b16 %v2803, %v2799
  %v2844 = vpack.c.b16 %v2804, %v2800
  %v2845 = vpack.c.b16 %v2805, %v2801
  %v2846 = vpack.c.b16 %v2806, %v2802
  %v2847 = vpack.c.b16 %v2811, %v2807
  %v2848 = vpack.c.b16 %v2812, %v2808
  %v2849 = vpack.c.b16 %v2813, %v2809
  %v2850 = vpack.c.b16 %v2814, %v2810
  %v2851 = vpack.c.b16 %v2819, %v2815
  %v2852 = vpack.c.b16 %v2820, %v2816
  %v2853 = vpack.c.b16 %v2821, %v2817
  %v2854 = vpack.c.b16 %v2822, %v2818
  %2887 = vmatpush.bf16.msra.mxu0 %v2851
  %2888 = vmatpush.bf16.msra.mxu0 %v2847
  %2889 = vmatpush.bf16.msra.mxu0 %v2843
  %2890 = vmatpush.bf16.msra.mxu0 %v2839
  %2891 = vmatpush.bf16.msra.mxu0 %v2835
  %2892 = vmatpush.bf16.msra.mxu0 %v2831
  %2893 = vmatpush.bf16.msra.mxu0 %v2827
  %2894 = vmatpush.bf16.msra.mxu0 %v2823
  %2895 = vmatmul.bf16.gmra.mxu0 %v2685
  %v2896 = vpop.f32.mrf.mxu0
  %v2897 = vadd.f32 0.0, %v2896
  %v2898 = vpop.f32.mrf.mxu0
  %2899 = vdwg.mxu0
  %2900 = vmatpush.bf16.msra.mxu0 %v2852
  %2901 = vmatpush.bf16.msra.mxu0 %v2848
  %2902 = vmatpush.bf16.msra.mxu0 %v2844
  %2903 = vmatpush.bf16.msra.mxu0 %v2840
  %2904 = vmatpush.bf16.msra.mxu0 %v2836
  %2905 = vmatpush.bf16.msra.mxu0 %v2832
  %2906 = vmatpush.bf16.msra.mxu0 %v2828
  %2907 = vmatpush.bf16.msra.mxu0 %v2824
  %2908 = vmatmul.bf16.gmra.mxu0 %v2685
  %v2909 = vpop.f32.mrf.mxu0
  %v2910 = vadd.f32 0.0, %v2909
  %v2911 = vpop.f32.mrf.mxu0
  %2912 = vdwg.mxu0
  %2913 = vmatpush.bf16.msra.mxu0 %v2853
  %2914 = vmatpush.bf16.msra.mxu0 %v2849
  %2915 = vmatpush.bf16.msra.mxu0 %v2845
  %2916 = vmatpush.bf16.msra.mxu0 %v2841
  %2917 = vmatpush.bf16.msra.mxu0 %v2837
  %2918 = vmatpush.bf16.msra.mxu0 %v2833
  %2919 = vmatpush.bf16.msra.mxu0 %v2829
  %2920 = vmatpush.bf16.msra.mxu0 %v2825
  %2921 = vmatmul.bf16.gmra.mxu0 %v2685
  %v2922 = vpop.f32.mrf.mxu0
  %v2923 = vadd.f32 0.0, %v2922
  %v2924 = vpop.f32.mrf.mxu0
  %2925 = vdwg.mxu0
  %2926 = vmatpush.bf16.msra.mxu0 %v2854
  %2927 = vmatpush.bf16.msra.mxu0 %v2850
  %2928 = vmatpush.bf16.msra.mxu0 %v2846
  %2929 = vmatpush.bf16.msra.mxu0 %v2842
  %2930 = vmatpush.bf16.msra.mxu0 %v2838
  %2931 = vmatpush.bf16.msra.mxu0 %v2834
  %2932 = vmatpush.bf16.msra.mxu0 %v2830
  %2933 = vmatpush.bf16.msra.mxu0 %v2826
  %2934 = vmatmul.bf16.gmra.mxu0 %v2685
  %v2935 = vpop.f32.mrf.mxu0
  %v2936 = vadd.f32 0.0, %v2935
  %v2937 = vpop.f32.mrf.mxu0
  %2938 = vdwg.mxu0
  %v2939 = vadd.f32 %v2691, %v2897
  %v2940 = vadd.f32 %v2692, %v2910
  %v2941 = vadd.f32 %v2693, %v2923
  %v2942 = vadd.f32 %v2694, %v2936
  %v2943 = vadd.f32 %v2939, %v35
  %v2944 = vadd.f32 %v2940, %v36
  %v2945 = vadd.f32 %v2941, %v37
  %v2946 = vadd.f32 %v2942, %v38
  %v2947 = vxor.u32 %v2943, 2147483648
  %v2948 = vxor.u32 %v2944, 2147483648
  %v2949 = vxor.u32 %v2945, 2147483648
  %v2950 = vmul.f32 %v2947, 1.442695
  %v2951 = vpow.pop %v2950
  %v2952 = vmul.f32 %v2948, 1.442695
  %v2953 = vpow.pop %v2952
  %v2954 = vmul.f32 %v2949, 1.442695
  %v2955 = vpow.pop %v2954
  %v2956 = vadd.f32 %v2951, 1.0
  %v2957 = vadd.f32 %v2953, 1.0
  %v2958 = vadd.f32 %v2955, 1.0
  %v2959 = vrcp.pop %v2956
  %v2960 = vmul.f32 %v2956, %v2959
  %v2961 = vsub.f32 1.0, %v2960
  %v2962 = vmul.f32 %v2959, %v2961
  %v2963 = vadd.f32 %v2959, %v2962
  %vm2964 = vweird.f32 %v2956
  %vm2965 = vweird.f32 %v2959
  %vm2966 = vmor %vm2964, %vm2965
  %v2967 = vsel %vm2966, %v2959, %v2963
  %v2968 = vand.u32 2147483647, %v2956
  %vm2969 = vcmp.eq.f32.partialorder %v2968, 8.507059e+37
  %v2970 = vand.u32 %v2956, 2147483648
  %v2971 = vor.u32 1.1754944e-38, %v2970
  %v2972 = vsel %vm2969, %v2971, %v2967
  %v2973 = vmul.f32 1.0, %v2972
  %v2974 = vrcp.pop %v2957
  %v2975 = vmul.f32 %v2957, %v2974
  %v2976 = vsub.f32 1.0, %v2975
  %v2977 = vmul.f32 %v2974, %v2976
  %v2978 = vadd.f32 %v2974, %v2977
  %vm2979 = vweird.f32 %v2957
  %vm2980 = vweird.f32 %v2974
  %vm2981 = vmor %vm2979, %vm2980
  %v2982 = vsel %vm2981, %v2974, %v2978
  %v2983 = vand.u32 2147483647, %v2957
  %vm2984 = vcmp.eq.f32.partialorder %v2983, 8.507059e+37
  %v2985 = vand.u32 %v2957, 2147483648
  %v2986 = vor.u32 1.1754944e-38, %v2985
  %v2987 = vsel %vm2984, %v2986, %v2982
  %v2988 = vmul.f32 1.0, %v2987
  %v2989 = vrcp.pop %v2958
  %v2990 = vmul.f32 %v2958, %v2989
  %v2991 = vsub.f32 1.0, %v2990
  %v2992 = vmul.f32 %v2989, %v2991
  %v2993 = vadd.f32 %v2989, %v2992
  %vm2994 = vweird.f32 %v2958
  %vm2995 = vweird.f32 %v2989
  %vm2996 = vmor %vm2994, %vm2995
  %v2997 = vsel %vm2996, %v2989, %v2993
  %v2998 = vand.u32 2147483647, %v2958
  %vm2999 = vcmp.eq.f32.partialorder %v2998, 8.507059e+37
  %v3000 = vand.u32 %v2958, 2147483648
  %v3001 = vor.u32 1.1754944e-38, %v3000
  %v3002 = vsel %vm2999, %v3001, %v2997
  %v3003 = vmul.f32 1.0, %v3002
  %v3004 = vtanh.pop %v2946
  %v3005 = vmul.f32 %v2988, %v2682
  %v3006 = vmul.f32 %v2973, %v3004
  %v3007 = vadd.f32 %v3005, %v3006
  %v3008 = vtanh.pop %v3007
  %v3009 = vmul.f32 %v3003, %v3008
  %v3010 = vpack.c.bf16 %v3009, %v3009
  %s3011 = scalar_lea.vmem [#allocation2], 28
  %3012 = vst [vmem:[%s3011] sm:$0xf] %v3010
  %v3013 = vld [vmem:[%s6] sm:$0xf]
  %v3015 = vperm.slane %v3013, 0
  %v3016 = vperm.slane %v3013, 1
  %v3017 = vperm.slane %v3013, 2
  %v3018 = vperm.slane %v3013, 3
  %v3023 = vld [vmem:[#allocation2] sm:$0xf]
  %v3024 = vld [vmem:[#allocation2 + $0x4] sm:$0xf]
  %v3025 = vld [vmem:[#allocation2 + $0x8] sm:$0xf]
  %v3026 = vld [vmem:[#allocation2 + $0xc] sm:$0xf]
  %v3027 = vld [vmem:[#allocation2 + $0x10] sm:$0xf]
  %v3028 = vld [vmem:[#allocation2 + $0x14] sm:$0xf]
  %v3029 = vld [vmem:[#allocation2 + $0x18] sm:$0xf]
  %v3030 = vld [vmem:[#allocation2 + $0x1c] sm:$0xf]
  %v3031 = vld [vmem:[%s4] sm:$0xff]
  %v3032 = vld [vmem:[%s4 + $0x8] sm:$0xff]
  %v3033 = vld [vmem:[%s4 + $0x10] sm:$0xff]
  %v3034 = vld [vmem:[%s4 + $0x18] sm:$0xff]
  %v3035 = vld [vmem:[%s4 + $0x20] sm:$0xff]
  %v3036 = vld [vmem:[%s4 + $0x28] sm:$0xff]
  %v3037 = vld [vmem:[%s4 + $0x30] sm:$0xff]
  %v3038 = vld [vmem:[%s4 + $0x38] sm:$0xff]
  %v3039 = vld [vmem:[%s4 + $0x40] sm:$0xff]
  %v3040 = vld [vmem:[%s4 + $0x48] sm:$0xff]
  %v3041 = vld [vmem:[%s4 + $0x50] sm:$0xff]
  %v3042 = vld [vmem:[%s4 + $0x58] sm:$0xff]
  %v3043 = vld [vmem:[%s4 + $0x60] sm:$0xff]
  %v3044 = vld [vmem:[%s4 + $0x68] sm:$0xff]
  %v3045 = vld [vmem:[%s4 + $0x70] sm:$0xff]
  %v3046 = vld [vmem:[%s4 + $0x78] sm:$0xff]
  %v3047 = vld [vmem:[%s4 + $0x80] sm:$0xff]
  %v3048 = vld [vmem:[%s4 + $0x88] sm:$0xff]
  %v3049 = vld [vmem:[%s4 + $0x90] sm:$0xff]
  %v3050 = vld [vmem:[%s4 + $0x98] sm:$0xff]
  %v3051 = vld [vmem:[%s4 + $0xa0] sm:$0xff]
  %v3052 = vld [vmem:[%s4 + $0xa8] sm:$0xff]
  %v3053 = vld [vmem:[%s4 + $0xb0] sm:$0xff]
  %v3054 = vld [vmem:[%s4 + $0xb8] sm:$0xff]
  %v3055 = vld [vmem:[%s4 + $0xc0] sm:$0xff]
  %v3056 = vld [vmem:[%s4 + $0xc8] sm:$0xff]
  %v3057 = vld [vmem:[%s4 + $0xd0] sm:$0xff]
  %v3058 = vld [vmem:[%s4 + $0xd8] sm:$0xff]
  %v3059 = vld [vmem:[%s4 + $0xe0] sm:$0xff]
  %v3060 = vld [vmem:[%s4 + $0xe8] sm:$0xff]
  %v3061 = vld [vmem:[%s4 + $0xf0] sm:$0xff]
  %v3062 = vld [vmem:[%s4 + $0xf8] sm:$0xff]
  %v3071 = vunpack.c.l.b16 %v3023
  %v3072 = vunpack.c.l.b16 %v3024
  %v3073 = vunpack.c.l.b16 %v3025
  %v3074 = vunpack.c.l.b16 %v3026
  %v3075 = vunpack.c.l.b16 %v3027
  %v3076 = vunpack.c.l.b16 %v3028
  %v3077 = vunpack.c.l.b16 %v3029
  %v3078 = vunpack.c.l.b16 %v3030
  %v3079 = vpack.c.b16 %v3072, %v3071
  %v3080 = vpack.c.b16 %v3074, %v3073
  %v3081 = vpack.c.b16 %v3076, %v3075
  %v3082 = vpack.c.b16 %v3078, %v3077
  %v3119 = vunpack.c.l.b16 %v3031
  %v3120 = vunpack.c.h.b16 %v3031
  %v3121 = vunpack.c.l.b16 %v3032
  %v3122 = vunpack.c.h.b16 %v3032
  %v3123 = vunpack.c.l.b16 %v3033
  %v3124 = vunpack.c.h.b16 %v3033
  %v3125 = vunpack.c.l.b16 %v3034
  %v3126 = vunpack.c.h.b16 %v3034
  %v3127 = vunpack.c.l.b16 %v3035
  %v3128 = vunpack.c.h.b16 %v3035
  %v3129 = vunpack.c.l.b16 %v3036
  %v3130 = vunpack.c.h.b16 %v3036
  %v3131 = vunpack.c.l.b16 %v3037
  %v3132 = vunpack.c.h.b16 %v3037
  %v3133 = vunpack.c.l.b16 %v3038
  %v3134 = vunpack.c.h.b16 %v3038
  %v3135 = vunpack.c.l.b16 %v3039
  %v3136 = vunpack.c.h.b16 %v3039
  %v3137 = vunpack.c.l.b16 %v3040
  %v3138 = vunpack.c.h.b16 %v3040
  %v3139 = vunpack.c.l.b16 %v3041
  %v3140 = vunpack.c.h.b16 %v3041
  %v3141 = vunpack.c.l.b16 %v3042
  %v3142 = vunpack.c.h.b16 %v3042
  %v3143 = vunpack.c.l.b16 %v3043
  %v3144 = vunpack.c.h.b16 %v3043
  %v3145 = vunpack.c.l.b16 %v3044
  %v3146 = vunpack.c.h.b16 %v3044
  %v3147 = vunpack.c.l.b16 %v3045
  %v3148 = vunpack.c.h.b16 %v3045
  %v3149 = vunpack.c.l.b16 %v3046
  %v3150 = vunpack.c.h.b16 %v3046
  %v3151 = vunpack.c.l.b16 %v3047
  %v3152 = vunpack.c.h.b16 %v3047
  %v3153 = vunpack.c.l.b16 %v3048
  %v3154 = vunpack.c.h.b16 %v3048
  %v3155 = vunpack.c.l.b16 %v3049
  %v3156 = vunpack.c.h.b16 %v3049
  %v3157 = vunpack.c.l.b16 %v3050
  %v3158 = vunpack.c.h.b16 %v3050
  %v3159 = vunpack.c.l.b16 %v3051
  %v3160 = vunpack.c.h.b16 %v3051
  %v3161 = vunpack.c.l.b16 %v3052
  %v3162 = vunpack.c.h.b16 %v3052
  %v3163 = vunpack.c.l.b16 %v3053
  %v3164 = vunpack.c.h.b16 %v3053
  %v3165 = vunpack.c.l.b16 %v3054
  %v3166 = vunpack.c.h.b16 %v3054
  %v3167 = vunpack.c.l.b16 %v3055
  %v3168 = vunpack.c.h.b16 %v3055
  %v3169 = vunpack.c.l.b16 %v3056
  %v3170 = vunpack.c.h.b16 %v3056
  %v3171 = vunpack.c.l.b16 %v3057
  %v3172 = vunpack.c.h.b16 %v3057
  %v3173 = vunpack.c.l.b16 %v3058
  %v3174 = vunpack.c.h.b16 %v3058
  %v3175 = vunpack.c.l.b16 %v3059
  %v3176 = vunpack.c.h.b16 %v3059
  %v3177 = vunpack.c.l.b16 %v3060
  %v3178 = vunpack.c.h.b16 %v3060
  %v3179 = vunpack.c.l.b16 %v3061
  %v3180 = vunpack.c.h.b16 %v3061
  %v3181 = vunpack.c.l.b16 %v3062
  %v3182 = vunpack.c.h.b16 %v3062
  %v3183 = vpack.c.b16 %v3123, %v3119
  %v3184 = vpack.c.b16 %v3124, %v3120
  %v3185 = vpack.c.b16 %v3125, %v3121
  %v3186 = vpack.c.b16 %v3126, %v3122
  %v3187 = vpack.c.b16 %v3131, %v3127
  %v3188 = vpack.c.b16 %v3132, %v3128
  %v3189 = vpack.c.b16 %v3133, %v3129
  %v3190 = vpack.c.b16 %v3134, %v3130
  %v3191 = vpack.c.b16 %v3139, %v3135
  %v3192 = vpack.c.b16 %v3140, %v3136
  %v3193 = vpack.c.b16 %v3141, %v3137
  %v3194 = vpack.c.b16 %v3142, %v3138
  %v3195 = vpack.c.b16 %v3147, %v3143
  %v3196 = vpack.c.b16 %v3148, %v3144
  %v3197 = vpack.c.b16 %v3149, %v3145
  %v3198 = vpack.c.b16 %v3150, %v3146
  %v3199 = vpack.c.b16 %v3155, %v3151
  %v3200 = vpack.c.b16 %v3156, %v3152
  %v3201 = vpack.c.b16 %v3157, %v3153
  %v3202 = vpack.c.b16 %v3158, %v3154
  %v3203 = vpack.c.b16 %v3163, %v3159
  %v3204 = vpack.c.b16 %v3164, %v3160
  %v3205 = vpack.c.b16 %v3165, %v3161
  %v3206 = vpack.c.b16 %v3166, %v3162
  %v3207 = vpack.c.b16 %v3171, %v3167
  %v3208 = vpack.c.b16 %v3172, %v3168
  %v3209 = vpack.c.b16 %v3173, %v3169
  %v3210 = vpack.c.b16 %v3174, %v3170
  %v3211 = vpack.c.b16 %v3179, %v3175
  %v3212 = vpack.c.b16 %v3180, %v3176
  %v3213 = vpack.c.b16 %v3181, %v3177
  %v3214 = vpack.c.b16 %v3182, %v3178
  %3247 = vmatpush.bf16.msra.mxu0 %v3211
  %3248 = vmatpush.bf16.msra.mxu0 %v3207
  %3249 = vmatpush.bf16.msra.mxu0 %v3203
  %3250 = vmatpush.bf16.msra.mxu0 %v3199
  %3251 = vmatpush.bf16.msra.mxu0 %v3195
  %3252 = vmatpush.bf16.msra.mxu0 %v3191
  %3253 = vmatpush.bf16.msra.mxu0 %v3187
  %3254 = vmatpush.bf16.msra.mxu0 %v3183
  %3255 = vmatmul.bf16.gmra.mxu0 %v3079
  %v3256 = vpop.f32.mrf.mxu0
  %v3257 = vadd.f32 0.0, %v3256
  %v3258 = vpop.f32.mrf.mxu0
  %v3259 = vadd.f32 0.0, %v3258
  %3260 = vmatmul.bf16.gmra.mxu0 %v3080
  %v3261 = vpop.f32.mrf.mxu0
  %v3262 = vadd.f32 0.0, %v3261
  %v3263 = vpop.f32.mrf.mxu0
  %v3264 = vadd.f32 0.0, %v3263
  %3265 = vmatmul.bf16.gmra.mxu0 %v3081
  %v3266 = vpop.f32.mrf.mxu0
  %v3267 = vadd.f32 0.0, %v3266
  %v3268 = vpop.f32.mrf.mxu0
  %v3269 = vadd.f32 0.0, %v3268
  %3270 = vmatmul.bf16.gmra.mxu0 %v3082
  %v3271 = vpop.f32.mrf.mxu0
  %v3272 = vadd.f32 0.0, %v3271
  %v3273 = vpop.f32.mrf.mxu0
  %v3274 = vadd.f32 0.0, %v3273
  %3275 = vdwg.mxu0
  %3276 = vmatpush.bf16.msra.mxu0 %v3212
  %3277 = vmatpush.bf16.msra.mxu0 %v3208
  %3278 = vmatpush.bf16.msra.mxu0 %v3204
  %3279 = vmatpush.bf16.msra.mxu0 %v3200
  %3280 = vmatpush.bf16.msra.mxu0 %v3196
  %3281 = vmatpush.bf16.msra.mxu0 %v3192
  %3282 = vmatpush.bf16.msra.mxu0 %v3188
  %3283 = vmatpush.bf16.msra.mxu0 %v3184
  %3284 = vmatmul.bf16.gmra.mxu0 %v3079
  %v3285 = vpop.f32.mrf.mxu0
  %v3286 = vadd.f32 0.0, %v3285
  %v3287 = vpop.f32.mrf.mxu0
  %v3288 = vadd.f32 0.0, %v3287
  %3289 = vmatmul.bf16.gmra.mxu0 %v3080
  %v3290 = vpop.f32.mrf.mxu0
  %v3291 = vadd.f32 0.0, %v3290
  %v3292 = vpop.f32.mrf.mxu0
  %v3293 = vadd.f32 0.0, %v3292
  %3294 = vmatmul.bf16.gmra.mxu0 %v3081
  %v3295 = vpop.f32.mrf.mxu0
  %v3296 = vadd.f32 0.0, %v3295
  %v3297 = vpop.f32.mrf.mxu0
  %v3298 = vadd.f32 0.0, %v3297
  %3299 = vmatmul.bf16.gmra.mxu0 %v3082
  %v3300 = vpop.f32.mrf.mxu0
  %v3301 = vadd.f32 0.0, %v3300
  %v3302 = vpop.f32.mrf.mxu0
  %v3303 = vadd.f32 0.0, %v3302
  %3304 = vdwg.mxu0
  %3305 = vmatpush.bf16.msra.mxu0 %v3213
  %3306 = vmatpush.bf16.msra.mxu0 %v3209
  %3307 = vmatpush.bf16.msra.mxu0 %v3205
  %3308 = vmatpush.bf16.msra.mxu0 %v3201
  %3309 = vmatpush.bf16.msra.mxu0 %v3197
  %3310 = vmatpush.bf16.msra.mxu0 %v3193
  %3311 = vmatpush.bf16.msra.mxu0 %v3189
  %3312 = vmatpush.bf16.msra.mxu0 %v3185
  %3313 = vmatmul.bf16.gmra.mxu0 %v3079
  %v3314 = vpop.f32.mrf.mxu0
  %v3315 = vadd.f32 0.0, %v3314
  %v3316 = vpop.f32.mrf.mxu0
  %v3317 = vadd.f32 0.0, %v3316
  %3318 = vmatmul.bf16.gmra.mxu0 %v3080
  %v3319 = vpop.f32.mrf.mxu0
  %v3320 = vadd.f32 0.0, %v3319
  %v3321 = vpop.f32.mrf.mxu0
  %v3322 = vadd.f32 0.0, %v3321
  %3323 = vmatmul.bf16.gmra.mxu0 %v3081
  %v3324 = vpop.f32.mrf.mxu0
  %v3325 = vadd.f32 0.0, %v3324
  %v3326 = vpop.f32.mrf.mxu0
  %v3327 = vadd.f32 0.0, %v3326
  %3328 = vmatmul.bf16.gmra.mxu0 %v3082
  %v3329 = vpop.f32.mrf.mxu0
  %v3330 = vadd.f32 0.0, %v3329
  %v3331 = vpop.f32.mrf.mxu0
  %v3332 = vadd.f32 0.0, %v3331
  %3333 = vdwg.mxu0
  %3334 = vmatpush.bf16.msra.mxu0 %v3214
  %3335 = vmatpush.bf16.msra.mxu0 %v3210
  %3336 = vmatpush.bf16.msra.mxu0 %v3206
  %3337 = vmatpush.bf16.msra.mxu0 %v3202
  %3338 = vmatpush.bf16.msra.mxu0 %v3198
  %3339 = vmatpush.bf16.msra.mxu0 %v3194
  %3340 = vmatpush.bf16.msra.mxu0 %v3190
  %3341 = vmatpush.bf16.msra.mxu0 %v3186
  %3342 = vmatmul.bf16.gmra.mxu0 %v3079
  %v3343 = vpop.f32.mrf.mxu0
  %v3344 = vadd.f32 0.0, %v3343
  %v3345 = vpop.f32.mrf.mxu0
  %v3346 = vadd.f32 0.0, %v3345
  %3347 = vmatmul.bf16.gmra.mxu0 %v3080
  %v3348 = vpop.f32.mrf.mxu0
  %v3349 = vadd.f32 0.0, %v3348
  %v3350 = vpop.f32.mrf.mxu0
  %v3351 = vadd.f32 0.0, %v3350
  %3352 = vmatmul.bf16.gmra.mxu0 %v3081
  %v3353 = vpop.f32.mrf.mxu0
  %v3354 = vadd.f32 0.0, %v3353
  %v3355 = vpop.f32.mrf.mxu0
  %v3356 = vadd.f32 0.0, %v3355
  %3357 = vmatmul.bf16.gmra.mxu0 %v3082
  %v3358 = vpop.f32.mrf.mxu0
  %v3359 = vadd.f32 0.0, %v3358
  %v3360 = vpop.f32.mrf.mxu0
  %v3361 = vadd.f32 0.0, %v3360
  %3362 = vdwg.mxu0
  %v3363 = vpack.c.bf16 %v3286, %v3257
  %v3364 = vpack.c.bf16 %v3344, %v3315
  %v3365 = vpack.c.bf16 %v3288, %v3259
  %v3366 = vpack.c.bf16 %v3346, %v3317
  %v3367 = vpack.c.bf16 %v3291, %v3262
  %v3368 = vpack.c.bf16 %v3349, %v3320
  %v3369 = vpack.c.bf16 %v3293, %v3264
  %v3370 = vpack.c.bf16 %v3351, %v3322
  %v3371 = vpack.c.bf16 %v3296, %v3267
  %v3372 = vpack.c.bf16 %v3354, %v3325
  %v3373 = vpack.c.bf16 %v3298, %v3269
  %v3374 = vpack.c.bf16 %v3356, %v3327
  %v3375 = vpack.c.bf16 %v3301, %v3272
  %v3376 = vpack.c.bf16 %v3359, %v3330
  %v3377 = vpack.c.bf16 %v3303, %v3274
  %v3378 = vpack.c.bf16 %v3361, %v3332
  %3379 = vst [vmem:[#allocation3] sm:$0xff] %v3363
  %3380 = vst [vmem:[#allocation3 + $0x8] sm:$0xff] %v3364
  %3381 = vst [vmem:[#allocation3 + $0x10] sm:$0xff] %v3365
  %3382 = vst [vmem:[#allocation3 + $0x18] sm:$0xff] %v3366
  %3383 = vst [vmem:[#allocation3 + $0x20] sm:$0xff] %v3367
  %3384 = vst [vmem:[#allocation3 + $0x28] sm:$0xff] %v3368
  %3385 = vst [vmem:[#allocation3 + $0x30] sm:$0xff] %v3369
  %3386 = vst [vmem:[#allocation3 + $0x38] sm:$0xff] %v3370
  %3387 = vst [vmem:[#allocation3 + $0x40] sm:$0xff] %v3371
  %3388 = vst [vmem:[#allocation3 + $0x48] sm:$0xff] %v3372
  %3389 = vst [vmem:[#allocation3 + $0x50] sm:$0xff] %v3373
  %3390 = vst [vmem:[#allocation3 + $0x58] sm:$0xff] %v3374
  %3391 = vst [vmem:[#allocation3 + $0x60] sm:$0xff] %v3375
  %3392 = vst [vmem:[#allocation3 + $0x68] sm:$0xff] %v3376
  %3393 = vst [vmem:[#allocation3 + $0x70] sm:$0xff] %v3377
  %3394 = vst [vmem:[#allocation3 + $0x78] sm:$0xff] %v3378
  %v3395 = vld [vmem:[#allocation3] sm:$0xff]
  %v3396 = vld [vmem:[#allocation3 + $0x8] sm:$0xff]
  %v3397 = vunpack.c.l.bf16 %v3395
  %v3398 = vunpack.c.h.bf16 %v3395
  %v3399 = vunpack.c.l.bf16 %v3396
  %v3400 = vunpack.c.h.bf16 %v3396
  %v3401 = vld [vmem:[%s5] sm:$0xff]
  %v3402 = vld [vmem:[%s5 + $0x8] sm:$0xff]
  %v3403 = vld [vmem:[%s5 + $0x10] sm:$0xff]
  %v3404 = vld [vmem:[%s5 + $0x18] sm:$0xff]
  %v3405 = vld [vmem:[%s5 + $0x20] sm:$0xff]
  %v3406 = vld [vmem:[%s5 + $0x28] sm:$0xff]
  %v3407 = vld [vmem:[%s5 + $0x30] sm:$0xff]
  %v3408 = vld [vmem:[%s5 + $0x38] sm:$0xff]
  %v3409 = vld [vmem:[%s5 + $0x40] sm:$0xff]
  %v3410 = vld [vmem:[%s5 + $0x48] sm:$0xff]
  %v3411 = vld [vmem:[%s5 + $0x50] sm:$0xff]
  %v3412 = vld [vmem:[%s5 + $0x58] sm:$0xff]
  %v3413 = vld [vmem:[%s5 + $0x60] sm:$0xff]
  %v3414 = vld [vmem:[%s5 + $0x68] sm:$0xff]
  %v3415 = vld [vmem:[%s5 + $0x70] sm:$0xff]
  %v3416 = vld [vmem:[%s5 + $0x78] sm:$0xff]
  %v3417 = vld [vmem:[%s5 + $0x80] sm:$0xff]
  %v3418 = vld [vmem:[%s5 + $0x88] sm:$0xff]
  %v3419 = vld [vmem:[%s5 + $0x90] sm:$0xff]
  %v3420 = vld [vmem:[%s5 + $0x98] sm:$0xff]
  %v3421 = vld [vmem:[%s5 + $0xa0] sm:$0xff]
  %v3422 = vld [vmem:[%s5 + $0xa8] sm:$0xff]
  %v3423 = vld [vmem:[%s5 + $0xb0] sm:$0xff]
  %v3424 = vld [vmem:[%s5 + $0xb8] sm:$0xff]
  %v3425 = vld [vmem:[%s5 + $0xc0] sm:$0xff]
  %v3426 = vld [vmem:[%s5 + $0xc8] sm:$0xff]
  %v3427 = vld [vmem:[%s5 + $0xd0] sm:$0xff]
  %v3428 = vld [vmem:[%s5 + $0xd8] sm:$0xff]
  %v3429 = vld [vmem:[%s5 + $0xe0] sm:$0xff]
  %v3430 = vld [vmem:[%s5 + $0xe8] sm:$0xff]
  %v3431 = vld [vmem:[%s5 + $0xf0] sm:$0xff]
  %v3432 = vld [vmem:[%s5 + $0xf8] sm:$0xff]
  %v3465 = vunpack.c.l.b16 %v3401
  %v3466 = vunpack.c.h.b16 %v3401
  %v3467 = vunpack.c.l.b16 %v3402
  %v3468 = vunpack.c.h.b16 %v3402
  %v3469 = vunpack.c.l.b16 %v3403
  %v3470 = vunpack.c.h.b16 %v3403
  %v3471 = vunpack.c.l.b16 %v3404
  %v3472 = vunpack.c.h.b16 %v3404
  %v3473 = vunpack.c.l.b16 %v3405
  %v3474 = vunpack.c.h.b16 %v3405
  %v3475 = vunpack.c.l.b16 %v3406
  %v3476 = vunpack.c.h.b16 %v3406
  %v3477 = vunpack.c.l.b16 %v3407
  %v3478 = vunpack.c.h.b16 %v3407
  %v3479 = vunpack.c.l.b16 %v3408
  %v3480 = vunpack.c.h.b16 %v3408
  %v3481 = vunpack.c.l.b16 %v3409
  %v3482 = vunpack.c.h.b16 %v3409
  %v3483 = vunpack.c.l.b16 %v3410
  %v3484 = vunpack.c.h.b16 %v3410
  %v3485 = vunpack.c.l.b16 %v3411
  %v3486 = vunpack.c.h.b16 %v3411
  %v3487 = vunpack.c.l.b16 %v3412
  %v3488 = vunpack.c.h.b16 %v3412
  %v3489 = vunpack.c.l.b16 %v3413
  %v3490 = vunpack.c.h.b16 %v3413
  %v3491 = vunpack.c.l.b16 %v3414
  %v3492 = vunpack.c.h.b16 %v3414
  %v3493 = vunpack.c.l.b16 %v3415
  %v3494 = vunpack.c.h.b16 %v3415
  %v3495 = vunpack.c.l.b16 %v3416
  %v3496 = vunpack.c.h.b16 %v3416
  %v3497 = vunpack.c.l.b16 %v3417
  %v3498 = vunpack.c.h.b16 %v3417
  %v3499 = vunpack.c.l.b16 %v3418
  %v3500 = vunpack.c.h.b16 %v3418
  %v3501 = vunpack.c.l.b16 %v3419
  %v3502 = vunpack.c.h.b16 %v3419
  %v3503 = vunpack.c.l.b16 %v3420
  %v3504 = vunpack.c.h.b16 %v3420
  %v3505 = vunpack.c.l.b16 %v3421
  %v3506 = vunpack.c.h.b16 %v3421
  %v3507 = vunpack.c.l.b16 %v3422
  %v3508 = vunpack.c.h.b16 %v3422
  %v3509 = vunpack.c.l.b16 %v3423
  %v3510 = vunpack.c.h.b16 %v3423
  %v3511 = vunpack.c.l.b16 %v3424
  %v3512 = vunpack.c.h.b16 %v3424
  %v3513 = vunpack.c.l.b16 %v3425
  %v3514 = vunpack.c.h.b16 %v3425
  %v3515 = vunpack.c.l.b16 %v3426
  %v3516 = vunpack.c.h.b16 %v3426
  %v3517 = vunpack.c.l.b16 %v3427
  %v3518 = vunpack.c.h.b16 %v3427
  %v3519 = vunpack.c.l.b16 %v3428
  %v3520 = vunpack.c.h.b16 %v3428
  %v3521 = vunpack.c.l.b16 %v3429
  %v3522 = vunpack.c.h.b16 %v3429
  %v3523 = vunpack.c.l.b16 %v3430
  %v3524 = vunpack.c.h.b16 %v3430
  %v3525 = vunpack.c.l.b16 %v3431
  %v3526 = vunpack.c.h.b16 %v3431
  %v3527 = vunpack.c.l.b16 %v3432
  %v3528 = vunpack.c.h.b16 %v3432
  %v3529 = vpack.c.b16 %v3469, %v3465
  %v3530 = vpack.c.b16 %v3470, %v3466
  %v3531 = vpack.c.b16 %v3471, %v3467
  %v3532 = vpack.c.b16 %v3472, %v3468
  %v3533 = vpack.c.b16 %v3477, %v3473
  %v3534 = vpack.c.b16 %v3478, %v3474
  %v3535 = vpack.c.b16 %v3479, %v3475
  %v3536 = vpack.c.b16 %v3480, %v3476
  %v3537 = vpack.c.b16 %v3485, %v3481
  %v3538 = vpack.c.b16 %v3486, %v3482
  %v3539 = vpack.c.b16 %v3487, %v3483
  %v3540 = vpack.c.b16 %v3488, %v3484
  %v3541 = vpack.c.b16 %v3493, %v3489
  %v3542 = vpack.c.b16 %v3494, %v3490
  %v3543 = vpack.c.b16 %v3495, %v3491
  %v3544 = vpack.c.b16 %v3496, %v3492
  %v3545 = vpack.c.b16 %v3501, %v3497
  %v3546 = vpack.c.b16 %v3502, %v3498
  %v3547 = vpack.c.b16 %v3503, %v3499
  %v3548 = vpack.c.b16 %v3504, %v3500
  %v3549 = vpack.c.b16 %v3509, %v3505
  %v3550 = vpack.c.b16 %v3510, %v3506
  %v3551 = vpack.c.b16 %v3511, %v3507
  %v3552 = vpack.c.b16 %v3512, %v3508
  %v3553 = vpack.c.b16 %v3517, %v3513
  %v3554 = vpack.c.b16 %v3518, %v3514
  %v3555 = vpack.c.b16 %v3519, %v3515
  %v3556 = vpack.c.b16 %v3520, %v3516
  %v3557 = vpack.c.b16 %v3525, %v3521
  %v3558 = vpack.c.b16 %v3526, %v3522
  %v3559 = vpack.c.b16 %v3527, %v3523
  %v3560 = vpack.c.b16 %v3528, %v3524
  %3593 = vmatpush.bf16.msra.mxu0 %v3557
  %3594 = vmatpush.bf16.msra.mxu0 %v3553
  %3595 = vmatpush.bf16.msra.mxu0 %v3549
  %3596 = vmatpush.bf16.msra.mxu0 %v3545
  %3597 = vmatpush.bf16.msra.mxu0 %v3541
  %3598 = vmatpush.bf16.msra.mxu0 %v3537
  %3599 = vmatpush.bf16.msra.mxu0 %v3533
  %3600 = vmatpush.bf16.msra.mxu0 %v3529
  %3601 = vmatmul.bf16.gmra.mxu0 0
  %v3602 = vpop.f32.mrf.mxu0
  %v3603 = vadd.f32 0.0, %v3602
  %v3604 = vpop.f32.mrf.mxu0
  %3605 = vdwg.mxu0
  %3606 = vmatpush.bf16.msra.mxu0 %v3558
  %3607 = vmatpush.bf16.msra.mxu0 %v3554
  %3608 = vmatpush.bf16.msra.mxu0 %v3550
  %3609 = vmatpush.bf16.msra.mxu0 %v3546
  %3610 = vmatpush.bf16.msra.mxu0 %v3542
  %3611 = vmatpush.bf16.msra.mxu0 %v3538
  %3612 = vmatpush.bf16.msra.mxu0 %v3534
  %3613 = vmatpush.bf16.msra.mxu0 %v3530
  %3614 = vmatmul.bf16.gmra.mxu0 0
  %v3615 = vpop.f32.mrf.mxu0
  %v3616 = vadd.f32 0.0, %v3615
  %v3617 = vpop.f32.mrf.mxu0
  %3618 = vdwg.mxu0
  %3619 = vmatpush.bf16.msra.mxu0 %v3559
  %3620 = vmatpush.bf16.msra.mxu0 %v3555
  %3621 = vmatpush.bf16.msra.mxu0 %v3551
  %3622 = vmatpush.bf16.msra.mxu0 %v3547
  %3623 = vmatpush.bf16.msra.mxu0 %v3543
  %3624 = vmatpush.bf16.msra.mxu0 %v3539
  %3625 = vmatpush.bf16.msra.mxu0 %v3535
  %3626 = vmatpush.bf16.msra.mxu0 %v3531
  %3627 = vmatmul.bf16.gmra.mxu0 0
  %v3628 = vpop.f32.mrf.mxu0
  %v3629 = vadd.f32 0.0, %v3628
  %v3630 = vpop.f32.mrf.mxu0
  %3631 = vdwg.mxu0
  %3632 = vmatpush.bf16.msra.mxu0 %v3560
  %3633 = vmatpush.bf16.msra.mxu0 %v3556
  %3634 = vmatpush.bf16.msra.mxu0 %v3552
  %3635 = vmatpush.bf16.msra.mxu0 %v3548
  %3636 = vmatpush.bf16.msra.mxu0 %v3544
  %3637 = vmatpush.bf16.msra.mxu0 %v3540
  %3638 = vmatpush.bf16.msra.mxu0 %v3536
  %3639 = vmatpush.bf16.msra.mxu0 %v3532
  %3640 = vmatmul.bf16.gmra.mxu0 0
  %v3641 = vpop.f32.mrf.mxu0
  %v3642 = vadd.f32 0.0, %v3641
  %v3643 = vpop.f32.mrf.mxu0
  %3644 = vdwg.mxu0
  %v3645 = vadd.f32 %v3397, %v3603
  %v3646 = vadd.f32 %v3398, %v3616
  %v3647 = vadd.f32 %v3399, %v3629
  %v3648 = vadd.f32 %v3400, %v3642
  %v3649 = vadd.f32 %v3645, %v3015
  %v3650 = vadd.f32 %v3646, %v3016
  %v3651 = vadd.f32 %v3647, %v3017
  %v3652 = vadd.f32 %v3648, %v3018
  %v3653 = vxor.u32 %v3649, 2147483648
  %v3654 = vxor.u32 %v3650, 2147483648
  %v3655 = vxor.u32 %v3651, 2147483648
  %v3656 = vmul.f32 %v3653, 1.442695
  %v3657 = vpow.pop %v3656
  %v3658 = vmul.f32 %v3654, 1.442695
  %v3659 = vpow.pop %v3658
  %v3660 = vmul.f32 %v3655, 1.442695
  %v3661 = vpow.pop %v3660
  %v3662 = vadd.f32 %v3657, 1.0
  %v3663 = vadd.f32 %v3659, 1.0
  %v3664 = vadd.f32 %v3661, 1.0
  %v3665 = vrcp.pop %v3662
  %v3666 = vmul.f32 %v3662, %v3665
  %v3667 = vsub.f32 1.0, %v3666
  %v3668 = vmul.f32 %v3665, %v3667
  %v3669 = vadd.f32 %v3665, %v3668
  %vm3670 = vweird.f32 %v3662
  %vm3671 = vweird.f32 %v3665
  %vm3672 = vmor %vm3670, %vm3671
  %v3673 = vsel %vm3672, %v3665, %v3669
  %v3674 = vand.u32 2147483647, %v3662
  %vm3675 = vcmp.eq.f32.partialorder %v3674, 8.507059e+37
  %v3676 = vand.u32 %v3662, 2147483648
  %v3677 = vor.u32 1.1754944e-38, %v3676
  %v3678 = vsel %vm3675, %v3677, %v3673
  %v3679 = vmul.f32 1.0, %v3678
  %v3680 = vrcp.pop %v3663
  %v3681 = vmul.f32 %v3663, %v3680
  %v3682 = vsub.f32 1.0, %v3681
  %v3683 = vmul.f32 %v3680, %v3682
  %v3684 = vadd.f32 %v3680, %v3683
  %vm3685 = vweird.f32 %v3663
  %vm3686 = vweird.f32 %v3680
  %vm3687 = vmor %vm3685, %vm3686
  %v3688 = vsel %vm3687, %v3680, %v3684
  %v3689 = vand.u32 2147483647, %v3663
  %vm3690 = vcmp.eq.f32.partialorder %v3689, 8.507059e+37
  %v3691 = vand.u32 %v3663, 2147483648
  %v3692 = vor.u32 1.1754944e-38, %v3691
  %v3693 = vsel %vm3690, %v3692, %v3688
  %v3694 = vmul.f32 1.0, %v3693
  %v3695 = vrcp.pop %v3664
  %v3696 = vmul.f32 %v3664, %v3695
  %v3697 = vsub.f32 1.0, %v3696
  %v3698 = vmul.f32 %v3695, %v3697
  %v3699 = vadd.f32 %v3695, %v3698
  %vm3700 = vweird.f32 %v3664
  %vm3701 = vweird.f32 %v3695
  %vm3702 = vmor %vm3700, %vm3701
  %v3703 = vsel %vm3702, %v3695, %v3699
  %v3704 = vand.u32 2147483647, %v3664
  %vm3705 = vcmp.eq.f32.partialorder %v3704, 8.507059e+37
  %v3706 = vand.u32 %v3664, 2147483648
  %v3707 = vor.u32 1.1754944e-38, %v3706
  %v3708 = vsel %vm3705, %v3707, %v3703
  %v3709 = vmul.f32 1.0, %v3708
  %v3710 = vtanh.pop %v3652
  %v3711 = vmul.f32 %v3694, 0.0
  %v3712 = vmul.f32 %v3679, %v3710
  %v3713 = vadd.f32 %v3711, %v3712
  %v3714 = vtanh.pop %v3713
  %v3715 = vmul.f32 %v3709, %v3714
  %v3716 = vld [vmem:[%s738] sm:$0xff]
  %v3717 = vld [vmem:[%s738 + $0x8] sm:$0xff]
  %v3718 = vunpack.c.l.bf16 %v3716
  %v3719 = vunpack.c.h.bf16 %v3716
  %v3720 = vunpack.c.l.bf16 %v3717
  %v3721 = vunpack.c.h.bf16 %v3717
  %v3722 = vpack.c.bf16 %v3715, %v3715
  %3723 = vmatpush.bf16.msra.mxu0 %v3557
  %3724 = vmatpush.bf16.msra.mxu0 %v3553
  %3725 = vmatpush.bf16.msra.mxu0 %v3549
  %3726 = vmatpush.bf16.msra.mxu0 %v3545
  %3727 = vmatpush.bf16.msra.mxu0 %v3541
  %3728 = vmatpush.bf16.msra.mxu0 %v3537
  %3729 = vmatpush.bf16.msra.mxu0 %v3533
  %3730 = vmatpush.bf16.msra.mxu0 %v3529
  %3731 = vmatmul.bf16.gmra.mxu0 %v3722
  %v3732 = vpop.f32.mrf.mxu0
  %v3733 = vadd.f32 0.0, %v3732
  %v3734 = vpop.f32.mrf.mxu0
  %3735 = vdwg.mxu0
  %3736 = vmatpush.bf16.msra.mxu0 %v3558
  %3737 = vmatpush.bf16.msra.mxu0 %v3554
  %3738 = vmatpush.bf16.msra.mxu0 %v3550
  %3739 = vmatpush.bf16.msra.mxu0 %v3546
  %3740 = vmatpush.bf16.msra.mxu0 %v3542
  %3741 = vmatpush.bf16.msra.mxu0 %v3538
  %3742 = vmatpush.bf16.msra.mxu0 %v3534
  %3743 = vmatpush.bf16.msra.mxu0 %v3530
  %3744 = vmatmul.bf16.gmra.mxu0 %v3722
  %v3745 = vpop.f32.mrf.mxu0
  %v3746 = vadd.f32 0.0, %v3745
  %v3747 = vpop.f32.mrf.mxu0
  %3748 = vdwg.mxu0
  %3749 = vmatpush.bf16.msra.mxu0 %v3559
  %3750 = vmatpush.bf16.msra.mxu0 %v3555
  %3751 = vmatpush.bf16.msra.mxu0 %v3551
  %3752 = vmatpush.bf16.msra.mxu0 %v3547
  %3753 = vmatpush.bf16.msra.mxu0 %v3543
  %3754 = vmatpush.bf16.msra.mxu0 %v3539
  %3755 = vmatpush.bf16.msra.mxu0 %v3535
  %3756 = vmatpush.bf16.msra.mxu0 %v3531
  %3757 = vmatmul.bf16.gmra.mxu0 %v3722
  %v3758 = vpop.f32.mrf.mxu0
  %v3759 = vadd.f32 0.0, %v3758
  %v3760 = vpop.f32.mrf.mxu0
  %3761 = vdwg.mxu0
  %3762 = vmatpush.bf16.msra.mxu0 %v3560
  %3763 = vmatpush.bf16.msra.mxu0 %v3556
  %3764 = vmatpush.bf16.msra.mxu0 %v3552
  %3765 = vmatpush.bf16.msra.mxu0 %v3548
  %3766 = vmatpush.bf16.msra.mxu0 %v3544
  %3767 = vmatpush.bf16.msra.mxu0 %v3540
  %3768 = vmatpush.bf16.msra.mxu0 %v3536
  %3769 = vmatpush.bf16.msra.mxu0 %v3532
  %3770 = vmatmul.bf16.gmra.mxu0 %v3722
  %v3771 = vpop.f32.mrf.mxu0
  %v3772 = vadd.f32 0.0, %v3771
  %v3773 = vpop.f32.mrf.mxu0
  %3774 = vdwg.mxu0
  %v3775 = vadd.f32 %v3718, %v3733
  %v3776 = vadd.f32 %v3719, %v3746
  %v3777 = vadd.f32 %v3720, %v3759
  %v3778 = vadd.f32 %v3721, %v3772
  %v3779 = vadd.f32 %v3775, %v3015
  %v3780 = vadd.f32 %v3776, %v3016
  %v3781 = vadd.f32 %v3777, %v3017
  %v3782 = vadd.f32 %v3778, %v3018
  %v3783 = vxor.u32 %v3779, 2147483648
  %v3784 = vxor.u32 %v3780, 2147483648
  %v3785 = vxor.u32 %v3781, 2147483648
  %v3786 = vmul.f32 %v3783, 1.442695
  %v3787 = vpow.pop %v3786
  %v3788 = vmul.f32 %v3784, 1.442695
  %v3789 = vpow.pop %v3788
  %v3790 = vmul.f32 %v3785, 1.442695
  %v3791 = vpow.pop %v3790
  %v3792 = vadd.f32 %v3787, 1.0
  %v3793 = vadd.f32 %v3789, 1.0
  %v3794 = vadd.f32 %v3791, 1.0
  %v3795 = vrcp.pop %v3792
  %v3796 = vmul.f32 %v3792, %v3795
  %v3797 = vsub.f32 1.0, %v3796
  %v3798 = vmul.f32 %v3795, %v3797
  %v3799 = vadd.f32 %v3795, %v3798
  %vm3800 = vweird.f32 %v3792
  %vm3801 = vweird.f32 %v3795
  %vm3802 = vmor %vm3800, %vm3801
  %v3803 = vsel %vm3802, %v3795, %v3799
  %v3804 = vand.u32 2147483647, %v3792
  %vm3805 = vcmp.eq.f32.partialorder %v3804, 8.507059e+37
  %v3806 = vand.u32 %v3792, 2147483648
  %v3807 = vor.u32 1.1754944e-38, %v3806
  %v3808 = vsel %vm3805, %v3807, %v3803
  %v3809 = vmul.f32 1.0, %v3808
  %v3810 = vrcp.pop %v3793
  %v3811 = vmul.f32 %v3793, %v3810
  %v3812 = vsub.f32 1.0, %v3811
  %v3813 = vmul.f32 %v3810, %v3812
  %v3814 = vadd.f32 %v3810, %v3813
  %vm3815 = vweird.f32 %v3793
  %vm3816 = vweird.f32 %v3810
  %vm3817 = vmor %vm3815, %vm3816
  %v3818 = vsel %vm3817, %v3810, %v3814
  %v3819 = vand.u32 2147483647, %v3793
  %vm3820 = vcmp.eq.f32.partialorder %v3819, 8.507059e+37
  %v3821 = vand.u32 %v3793, 2147483648
  %v3822 = vor.u32 1.1754944e-38, %v3821
  %v3823 = vsel %vm3820, %v3822, %v3818
  %v3824 = vmul.f32 1.0, %v3823
  %v3825 = vrcp.pop %v3794
  %v3826 = vmul.f32 %v3794, %v3825
  %v3827 = vsub.f32 1.0, %v3826
  %v3828 = vmul.f32 %v3825, %v3827
  %v3829 = vadd.f32 %v3825, %v3828
  %vm3830 = vweird.f32 %v3794
  %vm3831 = vweird.f32 %v3825
  %vm3832 = vmor %vm3830, %vm3831
  %v3833 = vsel %vm3832, %v3825, %v3829
  %v3834 = vand.u32 2147483647, %v3794
  %vm3835 = vcmp.eq.f32.partialorder %v3834, 8.507059e+37
  %v3836 = vand.u32 %v3794, 2147483648
  %v3837 = vor.u32 1.1754944e-38, %v3836
  %v3838 = vsel %vm3835, %v3837, %v3833
  %v3839 = vmul.f32 1.0, %v3838
  %v3840 = vtanh.pop %v3782
  %v3841 = vmul.f32 %v3824, %v3713
  %v3842 = vmul.f32 %v3809, %v3840
  %v3843 = vadd.f32 %v3841, %v3842
  %v3844 = vtanh.pop %v3843
  %v3845 = vmul.f32 %v3839, %v3844
  %v3846 = vld [vmem:[%s1063] sm:$0xff]
  %v3847 = vld [vmem:[%s1063 + $0x8] sm:$0xff]
  %v3848 = vunpack.c.l.bf16 %v3846
  %v3849 = vunpack.c.h.bf16 %v3846
  %v3850 = vunpack.c.l.bf16 %v3847
  %v3851 = vunpack.c.h.bf16 %v3847
  %v3852 = vpack.c.bf16 %v3845, %v3845
  %3853 = vmatpush.bf16.msra.mxu0 %v3557
  %3854 = vmatpush.bf16.msra.mxu0 %v3553
  %3855 = vmatpush.bf16.msra.mxu0 %v3549
  %3856 = vmatpush.bf16.msra.mxu0 %v3545
  %3857 = vmatpush.bf16.msra.mxu0 %v3541
  %3858 = vmatpush.bf16.msra.mxu0 %v3537
  %3859 = vmatpush.bf16.msra.mxu0 %v3533
  %3860 = vmatpush.bf16.msra.mxu0 %v3529
  %3861 = vmatmul.bf16.gmra.mxu0 %v3852
  %v3862 = vpop.f32.mrf.mxu0
  %v3863 = vadd.f32 0.0, %v3862
  %v3864 = vpop.f32.mrf.mxu0
  %3865 = vdwg.mxu0
  %3866 = vmatpush.bf16.msra.mxu0 %v3558
  %3867 = vmatpush.bf16.msra.mxu0 %v3554
  %3868 = vmatpush.bf16.msra.mxu0 %v3550
  %3869 = vmatpush.bf16.msra.mxu0 %v3546
  %3870 = vmatpush.bf16.msra.mxu0 %v3542
  %3871 = vmatpush.bf16.msra.mxu0 %v3538
  %3872 = vmatpush.bf16.msra.mxu0 %v3534
  %3873 = vmatpush.bf16.msra.mxu0 %v3530
  %3874 = vmatmul.bf16.gmra.mxu0 %v3852
  %v3875 = vpop.f32.mrf.mxu0
  %v3876 = vadd.f32 0.0, %v3875
  %v3877 = vpop.f32.mrf.mxu0
  %3878 = vdwg.mxu0
  %3879 = vmatpush.bf16.msra.mxu0 %v3559
  %3880 = vmatpush.bf16.msra.mxu0 %v3555
  %3881 = vmatpush.bf16.msra.mxu0 %v3551
  %3882 = vmatpush.bf16.msra.mxu0 %v3547
  %3883 = vmatpush.bf16.msra.mxu0 %v3543
  %3884 = vmatpush.bf16.msra.mxu0 %v3539
  %3885 = vmatpush.bf16.msra.mxu0 %v3535
  %3886 = vmatpush.bf16.msra.mxu0 %v3531
  %3887 = vmatmul.bf16.gmra.mxu0 %v3852
  %v3888 = vpop.f32.mrf.mxu0
  %v3889 = vadd.f32 0.0, %v3888
  %v3890 = vpop.f32.mrf.mxu0
  %3891 = vdwg.mxu0
  %3892 = vmatpush.bf16.msra.mxu0 %v3560
  %3893 = vmatpush.bf16.msra.mxu0 %v3556
  %3894 = vmatpush.bf16.msra.mxu0 %v3552
  %3895 = vmatpush.bf16.msra.mxu0 %v3548
  %3896 = vmatpush.bf16.msra.mxu0 %v3544
  %3897 = vmatpush.bf16.msra.mxu0 %v3540
  %3898 = vmatpush.bf16.msra.mxu0 %v3536
  %3899 = vmatpush.bf16.msra.mxu0 %v3532
  %3900 = vmatmul.bf16.gmra.mxu0 %v3852
  %v3901 = vpop.f32.mrf.mxu0
  %v3902 = vadd.f32 0.0, %v3901
  %v3903 = vpop.f32.mrf.mxu0
  %3904 = vdwg.mxu0
  %v3905 = vadd.f32 %v3848, %v3863
  %v3906 = vadd.f32 %v3849, %v3876
  %v3907 = vadd.f32 %v3850, %v3889
  %v3908 = vadd.f32 %v3851, %v3902
  %v3909 = vadd.f32 %v3905, %v3015
  %v3910 = vadd.f32 %v3906, %v3016
  %v3911 = vadd.f32 %v3907, %v3017
  %v3912 = vadd.f32 %v3908, %v3018
  %v3913 = vxor.u32 %v3909, 2147483648
  %v3914 = vxor.u32 %v3910, 2147483648
  %v3915 = vxor.u32 %v3911, 2147483648
  %v3916 = vmul.f32 %v3913, 1.442695
  %v3917 = vpow.pop %v3916
  %v3918 = vmul.f32 %v3914, 1.442695
  %v3919 = vpow.pop %v3918
  %v3920 = vmul.f32 %v3915, 1.442695
  %v3921 = vpow.pop %v3920
  %v3922 = vadd.f32 %v3917, 1.0
  %v3923 = vadd.f32 %v3919, 1.0
  %v3924 = vadd.f32 %v3921, 1.0
  %v3925 = vrcp.pop %v3922
  %v3926 = vmul.f32 %v3922, %v3925
  %v3927 = vsub.f32 1.0, %v3926
  %v3928 = vmul.f32 %v3925, %v3927
  %v3929 = vadd.f32 %v3925, %v3928
  %vm3930 = vweird.f32 %v3922
  %vm3931 = vweird.f32 %v3925
  %vm3932 = vmor %vm3930, %vm3931
  %v3933 = vsel %vm3932, %v3925, %v3929
  %v3934 = vand.u32 2147483647, %v3922
  %vm3935 = vcmp.eq.f32.partialorder %v3934, 8.507059e+37
  %v3936 = vand.u32 %v3922, 2147483648
  %v3937 = vor.u32 1.1754944e-38, %v3936
  %v3938 = vsel %vm3935, %v3937, %v3933
  %v3939 = vmul.f32 1.0, %v3938
  %v3940 = vrcp.pop %v3923
  %v3941 = vmul.f32 %v3923, %v3940
  %v3942 = vsub.f32 1.0, %v3941
  %v3943 = vmul.f32 %v3940, %v3942
  %v3944 = vadd.f32 %v3940, %v3943
  %vm3945 = vweird.f32 %v3923
  %vm3946 = vweird.f32 %v3940
  %vm3947 = vmor %vm3945, %vm3946
  %v3948 = vsel %vm3947, %v3940, %v3944
  %v3949 = vand.u32 2147483647, %v3923
  %vm3950 = vcmp.eq.f32.partialorder %v3949, 8.507059e+37
  %v3951 = vand.u32 %v3923, 2147483648
  %v3952 = vor.u32 1.1754944e-38, %v3951
  %v3953 = vsel %vm3950, %v3952, %v3948
  %v3954 = vmul.f32 1.0, %v3953
  %v3955 = vrcp.pop %v3924
  %v3956 = vmul.f32 %v3924, %v3955
  %v3957 = vsub.f32 1.0, %v3956
  %v3958 = vmul.f32 %v3955, %v3957
  %v3959 = vadd.f32 %v3955, %v3958
  %vm3960 = vweird.f32 %v3924
  %vm3961 = vweird.f32 %v3955
  %vm3962 = vmor %vm3960, %vm3961
  %v3963 = vsel %vm3962, %v3955, %v3959
  %v3964 = vand.u32 2147483647, %v3924
  %vm3965 = vcmp.eq.f32.partialorder %v3964, 8.507059e+37
  %v3966 = vand.u32 %v3924, 2147483648
  %v3967 = vor.u32 1.1754944e-38, %v3966
  %v3968 = vsel %vm3965, %v3967, %v3963
  %v3969 = vmul.f32 1.0, %v3968
  %v3970 = vtanh.pop %v3912
  %v3971 = vmul.f32 %v3954, %v3843
  %v3972 = vmul.f32 %v3939, %v3970
  %v3973 = vadd.f32 %v3971, %v3972
  %v3974 = vtanh.pop %v3973
  %v3975 = vmul.f32 %v3969, %v3974
  %v3976 = vld [vmem:[%s1388] sm:$0xff]
  %v3977 = vld [vmem:[%s1388 + $0x8] sm:$0xff]
  %v3978 = vunpack.c.l.bf16 %v3976
  %v3979 = vunpack.c.h.bf16 %v3976
  %v3980 = vunpack.c.l.bf16 %v3977
  %v3981 = vunpack.c.h.bf16 %v3977
  %v3982 = vpack.c.bf16 %v3975, %v3975
  %3983 = vmatpush.bf16.msra.mxu0 %v3557
  %3984 = vmatpush.bf16.msra.mxu0 %v3553
  %3985 = vmatpush.bf16.msra.mxu0 %v3549
  %3986 = vmatpush.bf16.msra.mxu0 %v3545
  %3987 = vmatpush.bf16.msra.mxu0 %v3541
  %3988 = vmatpush.bf16.msra.mxu0 %v3537
  %3989 = vmatpush.bf16.msra.mxu0 %v3533
  %3990 = vmatpush.bf16.msra.mxu0 %v3529
  %3991 = vmatmul.bf16.gmra.mxu0 %v3982
  %v3992 = vpop.f32.mrf.mxu0
  %v3993 = vadd.f32 0.0, %v3992
  %v3994 = vpop.f32.mrf.mxu0
  %3995 = vdwg.mxu0
  %3996 = vmatpush.bf16.msra.mxu0 %v3558
  %3997 = vmatpush.bf16.msra.mxu0 %v3554
  %3998 = vmatpush.bf16.msra.mxu0 %v3550
  %3999 = vmatpush.bf16.msra.mxu0 %v3546
  %4000 = vmatpush.bf16.msra.mxu0 %v3542
  %4001 = vmatpush.bf16.msra.mxu0 %v3538
  %4002 = vmatpush.bf16.msra.mxu0 %v3534
  %4003 = vmatpush.bf16.msra.mxu0 %v3530
  %4004 = vmatmul.bf16.gmra.mxu0 %v3982
  %v4005 = vpop.f32.mrf.mxu0
  %v4006 = vadd.f32 0.0, %v4005
  %v4007 = vpop.f32.mrf.mxu0
  %4008 = vdwg.mxu0
  %4009 = vmatpush.bf16.msra.mxu0 %v3559
  %4010 = vmatpush.bf16.msra.mxu0 %v3555
  %4011 = vmatpush.bf16.msra.mxu0 %v3551
  %4012 = vmatpush.bf16.msra.mxu0 %v3547
  %4013 = vmatpush.bf16.msra.mxu0 %v3543
  %4014 = vmatpush.bf16.msra.mxu0 %v3539
  %4015 = vmatpush.bf16.msra.mxu0 %v3535
  %4016 = vmatpush.bf16.msra.mxu0 %v3531
  %4017 = vmatmul.bf16.gmra.mxu0 %v3982
  %v4018 = vpop.f32.mrf.mxu0
  %v4019 = vadd.f32 0.0, %v4018
  %v4020 = vpop.f32.mrf.mxu0
  %4021 = vdwg.mxu0
  %4022 = vmatpush.bf16.msra.mxu0 %v3560
  %4023 = vmatpush.bf16.msra.mxu0 %v3556
  %4024 = vmatpush.bf16.msra.mxu0 %v3552
  %4025 = vmatpush.bf16.msra.mxu0 %v3548
  %4026 = vmatpush.bf16.msra.mxu0 %v3544
  %4027 = vmatpush.bf16.msra.mxu0 %v3540
  %4028 = vmatpush.bf16.msra.mxu0 %v3536
  %4029 = vmatpush.bf16.msra.mxu0 %v3532
  %4030 = vmatmul.bf16.gmra.mxu0 %v3982
  %v4031 = vpop.f32.mrf.mxu0
  %v4032 = vadd.f32 0.0, %v4031
  %v4033 = vpop.f32.mrf.mxu0
  %4034 = vdwg.mxu0
  %v4035 = vadd.f32 %v3978, %v3993
  %v4036 = vadd.f32 %v3979, %v4006
  %v4037 = vadd.f32 %v3980, %v4019
  %v4038 = vadd.f32 %v3981, %v4032
  %v4039 = vadd.f32 %v4035, %v3015
  %v4040 = vadd.f32 %v4036, %v3016
  %v4041 = vadd.f32 %v4037, %v3017
  %v4042 = vadd.f32 %v4038, %v3018
  %v4043 = vxor.u32 %v4039, 2147483648
  %v4044 = vxor.u32 %v4040, 2147483648
  %v4045 = vxor.u32 %v4041, 2147483648
  %v4046 = vmul.f32 %v4043, 1.442695
  %v4047 = vpow.pop %v4046
  %v4048 = vmul.f32 %v4044, 1.442695
  %v4049 = vpow.pop %v4048
  %v4050 = vmul.f32 %v4045, 1.442695
  %v4051 = vpow.pop %v4050
  %v4052 = vadd.f32 %v4047, 1.0
  %v4053 = vadd.f32 %v4049, 1.0
  %v4054 = vadd.f32 %v4051, 1.0
  %v4055 = vrcp.pop %v4052
  %v4056 = vmul.f32 %v4052, %v4055
  %v4057 = vsub.f32 1.0, %v4056
  %v4058 = vmul.f32 %v4055, %v4057
  %v4059 = vadd.f32 %v4055, %v4058
  %vm4060 = vweird.f32 %v4052
  %vm4061 = vweird.f32 %v4055
  %vm4062 = vmor %vm4060, %vm4061
  %v4063 = vsel %vm4062, %v4055, %v4059
  %v4064 = vand.u32 2147483647, %v4052
  %vm4065 = vcmp.eq.f32.partialorder %v4064, 8.507059e+37
  %v4066 = vand.u32 %v4052, 2147483648
  %v4067 = vor.u32 1.1754944e-38, %v4066
  %v4068 = vsel %vm4065, %v4067, %v4063
  %v4069 = vmul.f32 1.0, %v4068
  %v4070 = vrcp.pop %v4053
  %v4071 = vmul.f32 %v4053, %v4070
  %v4072 = vsub.f32 1.0, %v4071
  %v4073 = vmul.f32 %v4070, %v4072
  %v4074 = vadd.f32 %v4070, %v4073
  %vm4075 = vweird.f32 %v4053
  %vm4076 = vweird.f32 %v4070
  %vm4077 = vmor %vm4075, %vm4076
  %v4078 = vsel %vm4077, %v4070, %v4074
  %v4079 = vand.u32 2147483647, %v4053
  %vm4080 = vcmp.eq.f32.partialorder %v4079, 8.507059e+37
  %v4081 = vand.u32 %v4053, 2147483648
  %v4082 = vor.u32 1.1754944e-38, %v4081
  %v4083 = vsel %vm4080, %v4082, %v4078
  %v4084 = vmul.f32 1.0, %v4083
  %v4085 = vrcp.pop %v4054
  %v4086 = vmul.f32 %v4054, %v4085
  %v4087 = vsub.f32 1.0, %v4086
  %v4088 = vmul.f32 %v4085, %v4087
  %v4089 = vadd.f32 %v4085, %v4088
  %vm4090 = vweird.f32 %v4054
  %vm4091 = vweird.f32 %v4085
  %vm4092 = vmor %vm4090, %vm4091
  %v4093 = vsel %vm4092, %v4085, %v4089
  %v4094 = vand.u32 2147483647, %v4054
  %vm4095 = vcmp.eq.f32.partialorder %v4094, 8.507059e+37
  %v4096 = vand.u32 %v4054, 2147483648
  %v4097 = vor.u32 1.1754944e-38, %v4096
  %v4098 = vsel %vm4095, %v4097, %v4093
  %v4099 = vmul.f32 1.0, %v4098
  %v4100 = vtanh.pop %v4042
  %v4101 = vmul.f32 %v4084, %v3973
  %v4102 = vmul.f32 %v4069, %v4100
  %v4103 = vadd.f32 %v4101, %v4102
  %v4104 = vtanh.pop %v4103
  %v4105 = vmul.f32 %v4099, %v4104
  %v4106 = vld [vmem:[%s1713] sm:$0xff]
  %v4107 = vld [vmem:[%s1713 + $0x8] sm:$0xff]
  %v4108 = vunpack.c.l.bf16 %v4106
  %v4109 = vunpack.c.h.bf16 %v4106
  %v4110 = vunpack.c.l.bf16 %v4107
  %v4111 = vunpack.c.h.bf16 %v4107
  %v4112 = vpack.c.bf16 %v4105, %v4105
  %4113 = vmatpush.bf16.msra.mxu0 %v3557
  %4114 = vmatpush.bf16.msra.mxu0 %v3553
  %4115 = vmatpush.bf16.msra.mxu0 %v3549
  %4116 = vmatpush.bf16.msra.mxu0 %v3545
  %4117 = vmatpush.bf16.msra.mxu0 %v3541
  %4118 = vmatpush.bf16.msra.mxu0 %v3537
  %4119 = vmatpush.bf16.msra.mxu0 %v3533
  %4120 = vmatpush.bf16.msra.mxu0 %v3529
  %4121 = vmatmul.bf16.gmra.mxu0 %v4112
  %v4122 = vpop.f32.mrf.mxu0
  %v4123 = vadd.f32 0.0, %v4122
  %v4124 = vpop.f32.mrf.mxu0
  %4125 = vdwg.mxu0
  %4126 = vmatpush.bf16.msra.mxu0 %v3558
  %4127 = vmatpush.bf16.msra.mxu0 %v3554
  %4128 = vmatpush.bf16.msra.mxu0 %v3550
  %4129 = vmatpush.bf16.msra.mxu0 %v3546
  %4130 = vmatpush.bf16.msra.mxu0 %v3542
  %4131 = vmatpush.bf16.msra.mxu0 %v3538
  %4132 = vmatpush.bf16.msra.mxu0 %v3534
  %4133 = vmatpush.bf16.msra.mxu0 %v3530
  %4134 = vmatmul.bf16.gmra.mxu0 %v4112
  %v4135 = vpop.f32.mrf.mxu0
  %v4136 = vadd.f32 0.0, %v4135
  %v4137 = vpop.f32.mrf.mxu0
  %4138 = vdwg.mxu0
  %4139 = vmatpush.bf16.msra.mxu0 %v3559
  %4140 = vmatpush.bf16.msra.mxu0 %v3555
  %4141 = vmatpush.bf16.msra.mxu0 %v3551
  %4142 = vmatpush.bf16.msra.mxu0 %v3547
  %4143 = vmatpush.bf16.msra.mxu0 %v3543
  %4144 = vmatpush.bf16.msra.mxu0 %v3539
  %4145 = vmatpush.bf16.msra.mxu0 %v3535
  %4146 = vmatpush.bf16.msra.mxu0 %v3531
  %4147 = vmatmul.bf16.gmra.mxu0 %v4112
  %v4148 = vpop.f32.mrf.mxu0
  %v4149 = vadd.f32 0.0, %v4148
  %v4150 = vpop.f32.mrf.mxu0
  %4151 = vdwg.mxu0
  %4152 = vmatpush.bf16.msra.mxu0 %v3560
  %4153 = vmatpush.bf16.msra.mxu0 %v3556
  %4154 = vmatpush.bf16.msra.mxu0 %v3552
  %4155 = vmatpush.bf16.msra.mxu0 %v3548
  %4156 = vmatpush.bf16.msra.mxu0 %v3544
  %4157 = vmatpush.bf16.msra.mxu0 %v3540
  %4158 = vmatpush.bf16.msra.mxu0 %v3536
  %4159 = vmatpush.bf16.msra.mxu0 %v3532
  %4160 = vmatmul.bf16.gmra.mxu0 %v4112
  %v4161 = vpop.f32.mrf.mxu0
  %v4162 = vadd.f32 0.0, %v4161
  %v4163 = vpop.f32.mrf.mxu0
  %4164 = vdwg.mxu0
  %v4165 = vadd.f32 %v4108, %v4123
  %v4166 = vadd.f32 %v4109, %v4136
  %v4167 = vadd.f32 %v4110, %v4149
  %v4168 = vadd.f32 %v4111, %v4162
  %v4169 = vadd.f32 %v4165, %v3015
  %v4170 = vadd.f32 %v4166, %v3016
  %v4171 = vadd.f32 %v4167, %v3017
  %v4172 = vadd.f32 %v4168, %v3018
  %v4173 = vxor.u32 %v4169, 2147483648
  %v4174 = vxor.u32 %v4170, 2147483648
  %v4175 = vxor.u32 %v4171, 2147483648
  %v4176 = vmul.f32 %v4173, 1.442695
  %v4177 = vpow.pop %v4176
  %v4178 = vmul.f32 %v4174, 1.442695
  %v4179 = vpow.pop %v4178
  %v4180 = vmul.f32 %v4175, 1.442695
  %v4181 = vpow.pop %v4180
  %v4182 = vadd.f32 %v4177, 1.0
  %v4183 = vadd.f32 %v4179, 1.0
  %v4184 = vadd.f32 %v4181, 1.0
  %v4185 = vrcp.pop %v4182
  %v4186 = vmul.f32 %v4182, %v4185
  %v4187 = vsub.f32 1.0, %v4186
  %v4188 = vmul.f32 %v4185, %v4187
  %v4189 = vadd.f32 %v4185, %v4188
  %vm4190 = vweird.f32 %v4182
  %vm4191 = vweird.f32 %v4185
  %vm4192 = vmor %vm4190, %vm4191
  %v4193 = vsel %vm4192, %v4185, %v4189
  %v4194 = vand.u32 2147483647, %v4182
  %vm4195 = vcmp.eq.f32.partialorder %v4194, 8.507059e+37
  %v4196 = vand.u32 %v4182, 2147483648
  %v4197 = vor.u32 1.1754944e-38, %v4196
  %v4198 = vsel %vm4195, %v4197, %v4193
  %v4199 = vmul.f32 1.0, %v4198
  %v4200 = vrcp.pop %v4183
  %v4201 = vmul.f32 %v4183, %v4200
  %v4202 = vsub.f32 1.0, %v4201
  %v4203 = vmul.f32 %v4200, %v4202
  %v4204 = vadd.f32 %v4200, %v4203
  %vm4205 = vweird.f32 %v4183
  %vm4206 = vweird.f32 %v4200
  %vm4207 = vmor %vm4205, %vm4206
  %v4208 = vsel %vm4207, %v4200, %v4204
  %v4209 = vand.u32 2147483647, %v4183
  %vm4210 = vcmp.eq.f32.partialorder %v4209, 8.507059e+37
  %v4211 = vand.u32 %v4183, 2147483648
  %v4212 = vor.u32 1.1754944e-38, %v4211
  %v4213 = vsel %vm4210, %v4212, %v4208
  %v4214 = vmul.f32 1.0, %v4213
  %v4215 = vrcp.pop %v4184
  %v4216 = vmul.f32 %v4184, %v4215
  %v4217 = vsub.f32 1.0, %v4216
  %v4218 = vmul.f32 %v4215, %v4217
  %v4219 = vadd.f32 %v4215, %v4218
  %vm4220 = vweird.f32 %v4184
  %vm4221 = vweird.f32 %v4215
  %vm4222 = vmor %vm4220, %vm4221
  %v4223 = vsel %vm4222, %v4215, %v4219
  %v4224 = vand.u32 2147483647, %v4184
  %vm4225 = vcmp.eq.f32.partialorder %v4224, 8.507059e+37
  %v4226 = vand.u32 %v4184, 2147483648
  %v4227 = vor.u32 1.1754944e-38, %v4226
  %v4228 = vsel %vm4225, %v4227, %v4223
  %v4229 = vmul.f32 1.0, %v4228
  %v4230 = vtanh.pop %v4172
  %v4231 = vmul.f32 %v4214, %v4103
  %v4232 = vmul.f32 %v4199, %v4230
  %v4233 = vadd.f32 %v4231, %v4232
  %v4234 = vtanh.pop %v4233
  %v4235 = vmul.f32 %v4229, %v4234
  %v4236 = vld [vmem:[%s2038] sm:$0xff]
  %v4237 = vld [vmem:[%s2038 + $0x8] sm:$0xff]
  %v4238 = vunpack.c.l.bf16 %v4236
  %v4239 = vunpack.c.h.bf16 %v4236
  %v4240 = vunpack.c.l.bf16 %v4237
  %v4241 = vunpack.c.h.bf16 %v4237
  %v4242 = vpack.c.bf16 %v4235, %v4235
  %4243 = vmatpush.bf16.msra.mxu0 %v3557
  %4244 = vmatpush.bf16.msra.mxu0 %v3553
  %4245 = vmatpush.bf16.msra.mxu0 %v3549
  %4246 = vmatpush.bf16.msra.mxu0 %v3545
  %4247 = vmatpush.bf16.msra.mxu0 %v3541
  %4248 = vmatpush.bf16.msra.mxu0 %v3537
  %4249 = vmatpush.bf16.msra.mxu0 %v3533
  %4250 = vmatpush.bf16.msra.mxu0 %v3529
  %4251 = vmatmul.bf16.gmra.mxu0 %v4242
  %v4252 = vpop.f32.mrf.mxu0
  %v4253 = vadd.f32 0.0, %v4252
  %v4254 = vpop.f32.mrf.mxu0
  %4255 = vdwg.mxu0
  %4256 = vmatpush.bf16.msra.mxu0 %v3558
  %4257 = vmatpush.bf16.msra.mxu0 %v3554
  %4258 = vmatpush.bf16.msra.mxu0 %v3550
  %4259 = vmatpush.bf16.msra.mxu0 %v3546
  %4260 = vmatpush.bf16.msra.mxu0 %v3542
  %4261 = vmatpush.bf16.msra.mxu0 %v3538
  %4262 = vmatpush.bf16.msra.mxu0 %v3534
  %4263 = vmatpush.bf16.msra.mxu0 %v3530
  %4264 = vmatmul.bf16.gmra.mxu0 %v4242
  %v4265 = vpop.f32.mrf.mxu0
  %v4266 = vadd.f32 0.0, %v4265
  %v4267 = vpop.f32.mrf.mxu0
  %4268 = vdwg.mxu0
  %4269 = vmatpush.bf16.msra.mxu0 %v3559
  %4270 = vmatpush.bf16.msra.mxu0 %v3555
  %4271 = vmatpush.bf16.msra.mxu0 %v3551
  %4272 = vmatpush.bf16.msra.mxu0 %v3547
  %4273 = vmatpush.bf16.msra.mxu0 %v3543
  %4274 = vmatpush.bf16.msra.mxu0 %v3539
  %4275 = vmatpush.bf16.msra.mxu0 %v3535
  %4276 = vmatpush.bf16.msra.mxu0 %v3531
  %4277 = vmatmul.bf16.gmra.mxu0 %v4242
  %v4278 = vpop.f32.mrf.mxu0
  %v4279 = vadd.f32 0.0, %v4278
  %v4280 = vpop.f32.mrf.mxu0
  %4281 = vdwg.mxu0
  %4282 = vmatpush.bf16.msra.mxu0 %v3560
  %4283 = vmatpush.bf16.msra.mxu0 %v3556
  %4284 = vmatpush.bf16.msra.mxu0 %v3552
  %4285 = vmatpush.bf16.msra.mxu0 %v3548
  %4286 = vmatpush.bf16.msra.mxu0 %v3544
  %4287 = vmatpush.bf16.msra.mxu0 %v3540
  %4288 = vmatpush.bf16.msra.mxu0 %v3536
  %4289 = vmatpush.bf16.msra.mxu0 %v3532
  %4290 = vmatmul.bf16.gmra.mxu0 %v4242
  %v4291 = vpop.f32.mrf.mxu0
  %v4292 = vadd.f32 0.0, %v4291
  %v4293 = vpop.f32.mrf.mxu0
  %4294 = vdwg.mxu0
  %v4295 = vadd.f32 %v4238, %v4253
  %v4296 = vadd.f32 %v4239, %v4266
  %v4297 = vadd.f32 %v4240, %v4279
  %v4298 = vadd.f32 %v4241, %v4292
  %v4299 = vadd.f32 %v4295, %v3015
  %v4300 = vadd.f32 %v4296, %v3016
  %v4301 = vadd.f32 %v4297, %v3017
  %v4302 = vadd.f32 %v4298, %v3018
  %v4303 = vxor.u32 %v4299, 2147483648
  %v4304 = vxor.u32 %v4300, 2147483648
  %v4305 = vxor.u32 %v4301, 2147483648
  %v4306 = vmul.f32 %v4303, 1.442695
  %v4307 = vpow.pop %v4306
  %v4308 = vmul.f32 %v4304, 1.442695
  %v4309 = vpow.pop %v4308
  %v4310 = vmul.f32 %v4305, 1.442695
  %v4311 = vpow.pop %v4310
  %v4312 = vadd.f32 %v4307, 1.0
  %v4313 = vadd.f32 %v4309, 1.0
  %v4314 = vadd.f32 %v4311, 1.0
  %v4315 = vrcp.pop %v4312
  %v4316 = vmul.f32 %v4312, %v4315
  %v4317 = vsub.f32 1.0, %v4316
  %v4318 = vmul.f32 %v4315, %v4317
  %v4319 = vadd.f32 %v4315, %v4318
  %vm4320 = vweird.f32 %v4312
  %vm4321 = vweird.f32 %v4315
  %vm4322 = vmor %vm4320, %vm4321
  %v4323 = vsel %vm4322, %v4315, %v4319
  %v4324 = vand.u32 2147483647, %v4312
  %vm4325 = vcmp.eq.f32.partialorder %v4324, 8.507059e+37
  %v4326 = vand.u32 %v4312, 2147483648
  %v4327 = vor.u32 1.1754944e-38, %v4326
  %v4328 = vsel %vm4325, %v4327, %v4323
  %v4329 = vmul.f32 1.0, %v4328
  %v4330 = vrcp.pop %v4313
  %v4331 = vmul.f32 %v4313, %v4330
  %v4332 = vsub.f32 1.0, %v4331
  %v4333 = vmul.f32 %v4330, %v4332
  %v4334 = vadd.f32 %v4330, %v4333
  %vm4335 = vweird.f32 %v4313
  %vm4336 = vweird.f32 %v4330
  %vm4337 = vmor %vm4335, %vm4336
  %v4338 = vsel %vm4337, %v4330, %v4334
  %v4339 = vand.u32 2147483647, %v4313
  %vm4340 = vcmp.eq.f32.partialorder %v4339, 8.507059e+37
  %v4341 = vand.u32 %v4313, 2147483648
  %v4342 = vor.u32 1.1754944e-38, %v4341
  %v4343 = vsel %vm4340, %v4342, %v4338
  %v4344 = vmul.f32 1.0, %v4343
  %v4345 = vrcp.pop %v4314
  %v4346 = vmul.f32 %v4314, %v4345
  %v4347 = vsub.f32 1.0, %v4346
  %v4348 = vmul.f32 %v4345, %v4347
  %v4349 = vadd.f32 %v4345, %v4348
  %vm4350 = vweird.f32 %v4314
  %vm4351 = vweird.f32 %v4345
  %vm4352 = vmor %vm4350, %vm4351
  %v4353 = vsel %vm4352, %v4345, %v4349
  %v4354 = vand.u32 2147483647, %v4314
  %vm4355 = vcmp.eq.f32.partialorder %v4354, 8.507059e+37
  %v4356 = vand.u32 %v4314, 2147483648
  %v4357 = vor.u32 1.1754944e-38, %v4356
  %v4358 = vsel %vm4355, %v4357, %v4353
  %v4359 = vmul.f32 1.0, %v4358
  %v4360 = vtanh.pop %v4302
  %v4361 = vmul.f32 %v4344, %v4233
  %v4362 = vmul.f32 %v4329, %v4360
  %v4363 = vadd.f32 %v4361, %v4362
  %v4364 = vtanh.pop %v4363
  %v4365 = vmul.f32 %v4359, %v4364
  %v4366 = vld [vmem:[%s2363] sm:$0xff]
  %v4367 = vld [vmem:[%s2363 + $0x8] sm:$0xff]
  %v4368 = vunpack.c.l.bf16 %v4366
  %v4369 = vunpack.c.h.bf16 %v4366
  %v4370 = vunpack.c.l.bf16 %v4367
  %v4371 = vunpack.c.h.bf16 %v4367
  %v4372 = vpack.c.bf16 %v4365, %v4365
  %4373 = vmatpush.bf16.msra.mxu0 %v3557
  %4374 = vmatpush.bf16.msra.mxu0 %v3553
  %4375 = vmatpush.bf16.msra.mxu0 %v3549
  %4376 = vmatpush.bf16.msra.mxu0 %v3545
  %4377 = vmatpush.bf16.msra.mxu0 %v3541
  %4378 = vmatpush.bf16.msra.mxu0 %v3537
  %4379 = vmatpush.bf16.msra.mxu0 %v3533
  %4380 = vmatpush.bf16.msra.mxu0 %v3529
  %4381 = vmatmul.bf16.gmra.mxu0 %v4372
  %v4382 = vpop.f32.mrf.mxu0
  %v4383 = vadd.f32 0.0, %v4382
  %v4384 = vpop.f32.mrf.mxu0
  %4385 = vdwg.mxu0
  %4386 = vmatpush.bf16.msra.mxu0 %v3558
  %4387 = vmatpush.bf16.msra.mxu0 %v3554
  %4388 = vmatpush.bf16.msra.mxu0 %v3550
  %4389 = vmatpush.bf16.msra.mxu0 %v3546
  %4390 = vmatpush.bf16.msra.mxu0 %v3542
  %4391 = vmatpush.bf16.msra.mxu0 %v3538
  %4392 = vmatpush.bf16.msra.mxu0 %v3534
  %4393 = vmatpush.bf16.msra.mxu0 %v3530
  %4394 = vmatmul.bf16.gmra.mxu0 %v4372
  %v4395 = vpop.f32.mrf.mxu0
  %v4396 = vadd.f32 0.0, %v4395
  %v4397 = vpop.f32.mrf.mxu0
  %4398 = vdwg.mxu0
  %4399 = vmatpush.bf16.msra.mxu0 %v3559
  %4400 = vmatpush.bf16.msra.mxu0 %v3555
  %4401 = vmatpush.bf16.msra.mxu0 %v3551
  %4402 = vmatpush.bf16.msra.mxu0 %v3547
  %4403 = vmatpush.bf16.msra.mxu0 %v3543
  %4404 = vmatpush.bf16.msra.mxu0 %v3539
  %4405 = vmatpush.bf16.msra.mxu0 %v3535
  %4406 = vmatpush.bf16.msra.mxu0 %v3531
  %4407 = vmatmul.bf16.gmra.mxu0 %v4372
  %v4408 = vpop.f32.mrf.mxu0
  %v4409 = vadd.f32 0.0, %v4408
  %v4410 = vpop.f32.mrf.mxu0
  %4411 = vdwg.mxu0
  %4412 = vmatpush.bf16.msra.mxu0 %v3560
  %4413 = vmatpush.bf16.msra.mxu0 %v3556
  %4414 = vmatpush.bf16.msra.mxu0 %v3552
  %4415 = vmatpush.bf16.msra.mxu0 %v3548
  %4416 = vmatpush.bf16.msra.mxu0 %v3544
  %4417 = vmatpush.bf16.msra.mxu0 %v3540
  %4418 = vmatpush.bf16.msra.mxu0 %v3536
  %4419 = vmatpush.bf16.msra.mxu0 %v3532
  %4420 = vmatmul.bf16.gmra.mxu0 %v4372
  %v4421 = vpop.f32.mrf.mxu0
  %v4422 = vadd.f32 0.0, %v4421
  %v4423 = vpop.f32.mrf.mxu0
  %4424 = vdwg.mxu0
  %v4425 = vadd.f32 %v4368, %v4383
  %v4426 = vadd.f32 %v4369, %v4396
  %v4427 = vadd.f32 %v4370, %v4409
  %v4428 = vadd.f32 %v4371, %v4422
  %v4429 = vadd.f32 %v4425, %v3015
  %v4430 = vadd.f32 %v4426, %v3016
  %v4431 = vadd.f32 %v4427, %v3017
  %v4432 = vadd.f32 %v4428, %v3018
  %v4433 = vxor.u32 %v4429, 2147483648
  %v4434 = vxor.u32 %v4430, 2147483648
  %v4435 = vxor.u32 %v4431, 2147483648
  %v4436 = vmul.f32 %v4433, 1.442695
  %v4437 = vpow.pop %v4436
  %v4438 = vmul.f32 %v4434, 1.442695
  %v4439 = vpow.pop %v4438
  %v4440 = vmul.f32 %v4435, 1.442695
  %v4441 = vpow.pop %v4440
  %v4442 = vadd.f32 %v4437, 1.0
  %v4443 = vadd.f32 %v4439, 1.0
  %v4444 = vadd.f32 %v4441, 1.0
  %v4445 = vrcp.pop %v4442
  %v4446 = vmul.f32 %v4442, %v4445
  %v4447 = vsub.f32 1.0, %v4446
  %v4448 = vmul.f32 %v4445, %v4447
  %v4449 = vadd.f32 %v4445, %v4448
  %vm4450 = vweird.f32 %v4442
  %vm4451 = vweird.f32 %v4445
  %vm4452 = vmor %vm4450, %vm4451
  %v4453 = vsel %vm4452, %v4445, %v4449
  %v4454 = vand.u32 2147483647, %v4442
  %vm4455 = vcmp.eq.f32.partialorder %v4454, 8.507059e+37
  %v4456 = vand.u32 %v4442, 2147483648
  %v4457 = vor.u32 1.1754944e-38, %v4456
  %v4458 = vsel %vm4455, %v4457, %v4453
  %v4459 = vmul.f32 1.0, %v4458
  %v4460 = vrcp.pop %v4443
  %v4461 = vmul.f32 %v4443, %v4460
  %v4462 = vsub.f32 1.0, %v4461
  %v4463 = vmul.f32 %v4460, %v4462
  %v4464 = vadd.f32 %v4460, %v4463
  %vm4465 = vweird.f32 %v4443
  %vm4466 = vweird.f32 %v4460
  %vm4467 = vmor %vm4465, %vm4466
  %v4468 = vsel %vm4467, %v4460, %v4464
  %v4469 = vand.u32 2147483647, %v4443
  %vm4470 = vcmp.eq.f32.partialorder %v4469, 8.507059e+37
  %v4471 = vand.u32 %v4443, 2147483648
  %v4472 = vor.u32 1.1754944e-38, %v4471
  %v4473 = vsel %vm4470, %v4472, %v4468
  %v4474 = vmul.f32 1.0, %v4473
  %v4475 = vrcp.pop %v4444
  %v4476 = vmul.f32 %v4444, %v4475
  %v4477 = vsub.f32 1.0, %v4476
  %v4478 = vmul.f32 %v4475, %v4477
  %v4479 = vadd.f32 %v4475, %v4478
  %vm4480 = vweird.f32 %v4444
  %vm4481 = vweird.f32 %v4475
  %vm4482 = vmor %vm4480, %vm4481
  %v4483 = vsel %vm4482, %v4475, %v4479
  %v4484 = vand.u32 2147483647, %v4444
  %vm4485 = vcmp.eq.f32.partialorder %v4484, 8.507059e+37
  %v4486 = vand.u32 %v4444, 2147483648
  %v4487 = vor.u32 1.1754944e-38, %v4486
  %v4488 = vsel %vm4485, %v4487, %v4483
  %v4489 = vmul.f32 1.0, %v4488
  %v4490 = vtanh.pop %v4432
  %v4491 = vmul.f32 %v4474, %v4363
  %v4492 = vmul.f32 %v4459, %v4490
  %v4493 = vadd.f32 %v4491, %v4492
  %v4494 = vtanh.pop %v4493
  %v4495 = vmul.f32 %v4489, %v4494
  %v4496 = vld [vmem:[%s2688] sm:$0xff]
  %v4497 = vld [vmem:[%s2688 + $0x8] sm:$0xff]
  %v4498 = vunpack.c.l.bf16 %v4496
  %v4499 = vunpack.c.h.bf16 %v4496
  %v4500 = vunpack.c.l.bf16 %v4497
  %v4501 = vunpack.c.h.bf16 %v4497
  %v4502 = vpack.c.bf16 %v4495, %v4495
  %4503 = vmatpush.bf16.msra.mxu0 %v3557
  %4504 = vmatpush.bf16.msra.mxu0 %v3553
  %4505 = vmatpush.bf16.msra.mxu0 %v3549
  %4506 = vmatpush.bf16.msra.mxu0 %v3545
  %4507 = vmatpush.bf16.msra.mxu0 %v3541
  %4508 = vmatpush.bf16.msra.mxu0 %v3537
  %4509 = vmatpush.bf16.msra.mxu0 %v3533
  %4510 = vmatpush.bf16.msra.mxu0 %v3529
  %4511 = vmatmul.bf16.gmra.mxu0 %v4502
  %v4512 = vpop.f32.mrf.mxu0
  %v4513 = vadd.f32 0.0, %v4512
  %v4514 = vpop.f32.mrf.mxu0
  %4515 = vdwg.mxu0
  %4516 = vmatpush.bf16.msra.mxu0 %v3558
  %4517 = vmatpush.bf16.msra.mxu0 %v3554
  %4518 = vmatpush.bf16.msra.mxu0 %v3550
  %4519 = vmatpush.bf16.msra.mxu0 %v3546
  %4520 = vmatpush.bf16.msra.mxu0 %v3542
  %4521 = vmatpush.bf16.msra.mxu0 %v3538
  %4522 = vmatpush.bf16.msra.mxu0 %v3534
  %4523 = vmatpush.bf16.msra.mxu0 %v3530
  %4524 = vmatmul.bf16.gmra.mxu0 %v4502
  %v4525 = vpop.f32.mrf.mxu0
  %v4526 = vadd.f32 0.0, %v4525
  %v4527 = vpop.f32.mrf.mxu0
  %4528 = vdwg.mxu0
  %4529 = vmatpush.bf16.msra.mxu0 %v3559
  %4530 = vmatpush.bf16.msra.mxu0 %v3555
  %4531 = vmatpush.bf16.msra.mxu0 %v3551
  %4532 = vmatpush.bf16.msra.mxu0 %v3547
  %4533 = vmatpush.bf16.msra.mxu0 %v3543
  %4534 = vmatpush.bf16.msra.mxu0 %v3539
  %4535 = vmatpush.bf16.msra.mxu0 %v3535
  %4536 = vmatpush.bf16.msra.mxu0 %v3531
  %4537 = vmatmul.bf16.gmra.mxu0 %v4502
  %v4538 = vpop.f32.mrf.mxu0
  %v4539 = vadd.f32 0.0, %v4538
  %v4540 = vpop.f32.mrf.mxu0
  %4541 = vdwg.mxu0
  %4542 = vmatpush.bf16.msra.mxu0 %v3560
  %4543 = vmatpush.bf16.msra.mxu0 %v3556
  %4544 = vmatpush.bf16.msra.mxu0 %v3552
  %4545 = vmatpush.bf16.msra.mxu0 %v3548
  %4546 = vmatpush.bf16.msra.mxu0 %v3544
  %4547 = vmatpush.bf16.msra.mxu0 %v3540
  %4548 = vmatpush.bf16.msra.mxu0 %v3536
  %4549 = vmatpush.bf16.msra.mxu0 %v3532
  %4550 = vmatmul.bf16.gmra.mxu0 %v4502
  %v4551 = vpop.f32.mrf.mxu0
  %v4552 = vadd.f32 0.0, %v4551
  %v4553 = vpop.f32.mrf.mxu0
  %4554 = vdwg.mxu0
  %v4555 = vadd.f32 %v4498, %v4513
  %v4556 = vadd.f32 %v4499, %v4526
  %v4557 = vadd.f32 %v4500, %v4539
  %v4558 = vadd.f32 %v4501, %v4552
  %v4559 = vadd.f32 %v4555, %v3015
  %v4560 = vadd.f32 %v4556, %v3016
  %v4561 = vadd.f32 %v4557, %v3017
  %v4562 = vadd.f32 %v4558, %v3018
  %v4563 = vxor.u32 %v4559, 2147483648
  %v4564 = vxor.u32 %v4560, 2147483648
  %v4565 = vxor.u32 %v4561, 2147483648
  %v4566 = vmul.f32 %v4563, 1.442695
  %v4567 = vpow.pop %v4566
  %v4568 = vmul.f32 %v4564, 1.442695
  %v4569 = vpow.pop %v4568
  %v4570 = vmul.f32 %v4565, 1.442695
  %v4571 = vpow.pop %v4570
  %v4572 = vadd.f32 %v4567, 1.0
  %v4573 = vadd.f32 %v4569, 1.0
  %v4574 = vadd.f32 %v4571, 1.0
  %v4575 = vrcp.pop %v4572
  %v4576 = vmul.f32 %v4572, %v4575
  %v4577 = vsub.f32 1.0, %v4576
  %v4578 = vmul.f32 %v4575, %v4577
  %v4579 = vadd.f32 %v4575, %v4578
  %vm4580 = vweird.f32 %v4572
  %vm4581 = vweird.f32 %v4575
  %vm4582 = vmor %vm4580, %vm4581
  %v4583 = vsel %vm4582, %v4575, %v4579
  %v4584 = vand.u32 2147483647, %v4572
  %vm4585 = vcmp.eq.f32.partialorder %v4584, 8.507059e+37
  %v4586 = vand.u32 %v4572, 2147483648
  %v4587 = vor.u32 1.1754944e-38, %v4586
  %v4588 = vsel %vm4585, %v4587, %v4583
  %v4589 = vmul.f32 1.0, %v4588
  %v4590 = vrcp.pop %v4573
  %v4591 = vmul.f32 %v4573, %v4590
  %v4592 = vsub.f32 1.0, %v4591
  %v4593 = vmul.f32 %v4590, %v4592
  %v4594 = vadd.f32 %v4590, %v4593
  %vm4595 = vweird.f32 %v4573
  %vm4596 = vweird.f32 %v4590
  %vm4597 = vmor %vm4595, %vm4596
  %v4598 = vsel %vm4597, %v4590, %v4594
  %v4599 = vand.u32 2147483647, %v4573
  %vm4600 = vcmp.eq.f32.partialorder %v4599, 8.507059e+37
  %v4601 = vand.u32 %v4573, 2147483648
  %v4602 = vor.u32 1.1754944e-38, %v4601
  %v4603 = vsel %vm4600, %v4602, %v4598
  %v4604 = vmul.f32 1.0, %v4603
  %v4605 = vrcp.pop %v4574
  %v4606 = vmul.f32 %v4574, %v4605
  %v4607 = vsub.f32 1.0, %v4606
  %v4608 = vmul.f32 %v4605, %v4607
  %v4609 = vadd.f32 %v4605, %v4608
  %vm4610 = vweird.f32 %v4574
  %vm4611 = vweird.f32 %v4605
  %vm4612 = vmor %vm4610, %vm4611
  %v4613 = vsel %vm4612, %v4605, %v4609
  %v4614 = vand.u32 2147483647, %v4574
  %vm4615 = vcmp.eq.f32.partialorder %v4614, 8.507059e+37
  %v4616 = vand.u32 %v4574, 2147483648
  %v4617 = vor.u32 1.1754944e-38, %v4616
  %v4618 = vsel %vm4615, %v4617, %v4613
  %v4619 = vmul.f32 1.0, %v4618
  %v4620 = vtanh.pop %v4562
  %v4621 = vmul.f32 %v4604, %v4493
  %v4622 = vmul.f32 %v4589, %v4620
  %v4623 = vadd.f32 %v4621, %v4622
  %v4624 = vtanh.pop %v4623
  %v4625 = vmul.f32 %v4619, %v4624
  %v4626 = vpack.c.bf16 %v4625, %v4625
  %v4627 = vld [vmem:[%s7] sm:$0xf]
  %v4628 = vld [vmem:[%s7 + $0x4] sm:$0xf]
  %v4629 = vld [vmem:[%s7 + $0x8] sm:$0xf]
  %v4630 = vld [vmem:[%s7 + $0xc] sm:$0xf]
  %v4631 = vld [vmem:[%s7 + $0x10] sm:$0xf]
  %v4632 = vld [vmem:[%s7 + $0x14] sm:$0xf]
  %v4633 = vld [vmem:[%s7 + $0x18] sm:$0xf]
  %v4634 = vld [vmem:[%s7 + $0x1c] sm:$0xf]
  %v4635 = vld [vmem:[%s7 + $0x20] sm:$0xf]
  %v4636 = vld [vmem:[%s7 + $0x24] sm:$0xf]
  %v4637 = vld [vmem:[%s7 + $0x28] sm:$0xf]
  %v4638 = vld [vmem:[%s7 + $0x2c] sm:$0xf]
  %v4639 = vld [vmem:[%s7 + $0x30] sm:$0xf]
  %v4640 = vld [vmem:[%s7 + $0x34] sm:$0xf]
  %v4641 = vld [vmem:[%s7 + $0x38] sm:$0xf]
  %v4642 = vld [vmem:[%s7 + $0x3c] sm:$0xf]
  %v4643 = vld [vmem:[%s8] sm:$0x1]
  %v4645 = vperm.slane %v4643, 0
  %v4663 = vunpack.c.l.b16 %v4627
  %v4664 = vunpack.c.l.b16 %v4628
  %v4665 = vunpack.c.l.b16 %v4629
  %v4666 = vunpack.c.l.b16 %v4630
  %v4667 = vunpack.c.l.b16 %v4631
  %v4668 = vunpack.c.l.b16 %v4632
  %v4669 = vunpack.c.l.b16 %v4633
  %v4670 = vunpack.c.l.b16 %v4634
  %v4671 = vunpack.c.l.b16 %v4635
  %v4672 = vunpack.c.l.b16 %v4636
  %v4673 = vunpack.c.l.b16 %v4637
  %v4674 = vunpack.c.l.b16 %v4638
  %v4675 = vunpack.c.l.b16 %v4639
  %v4676 = vunpack.c.l.b16 %v4640
  %v4677 = vunpack.c.l.b16 %v4641
  %v4678 = vunpack.c.l.b16 %v4642
  %v4679 = vpack.c.b16 %v4664, %v4663
  %v4680 = vpack.c.b16 %v4666, %v4665
  %v4681 = vpack.c.b16 %v4668, %v4667
  %v4682 = vpack.c.b16 %v4670, %v4669
  %v4683 = vpack.c.b16 %v4672, %v4671
  %v4684 = vpack.c.b16 %v4674, %v4673
  %v4685 = vpack.c.b16 %v4676, %v4675
  %v4686 = vpack.c.b16 %v4678, %v4677
  %4695 = vmatpush.bf16.msra.mxu0 %v4686
  %4696 = vmatpush.bf16.msra.mxu0 %v4685
  %4697 = vmatpush.bf16.msra.mxu0 %v4684
  %4698 = vmatpush.bf16.msra.mxu0 %v4683
  %4699 = vmatpush.bf16.msra.mxu0 %v4682
  %4700 = vmatpush.bf16.msra.mxu0 %v4681
  %4701 = vmatpush.bf16.msra.mxu0 %v4680
  %4702 = vmatpush.bf16.msra.mxu0 %v4679
  %4703 = vmatmul.bf16.gmra.mxu0 %v4626
  %v4704 = vpop.f32.mrf.mxu0
  %v4705 = vadd.f32 %v4645, %v4704
  %v4706 = vpop.f32.mrf.mxu0
  %4707 = vdwg.mxu0
  %4708 = vst [vmem:[%s9] sm:$0xff] %v4705
  // Predicated region
  $region38: #{lstm_model_forward.1} parent=0 // pred_check
    _
  $region39: #{lstm_model_forward.1} parent=0 // pred_check_branch
    %4710 = sbr.rel (0) target = $region41
  $region40: #{lstm_model_forward.1} parent=0 // pred_region
    _
  $region41: #{lstm_model_forward.1} parent=0 // pred_fallthru
    _
  // Predicated region
  $region42: #{lstm_model_forward.1} parent=0 // pred_check
    _
  $region43: #{lstm_model_forward.1} parent=0 // pred_check_branch
    %4712 = sbr.rel (0) target = $region45
  $region44: #{lstm_model_forward.1} parent=0 // pred_region
    _
  $region45: #{lstm_model_forward.1} parent=0 // pred_fallthru
    _

</llo_original>
